<compile_context>
chip_gen: v7x
topology: tpu7x:2x2x1
jax: 0.10.0
libtpu: 0.0.40
codegen_flags: <defaults>
</compile_context>

<pallas_src>
import jax
import jax.numpy as jnp
from jax.experimental import pallas as pl
from jax.experimental.pallas import tpu as pltpu


def _simplicial_egnn_kernel(
    idx_send_ref,   # (1, TE)       i32  sender indices for this edge block (-1 = pad)
    idx_rec_ref,    # (1, TE)       i32  receiver indices (-1 = pad)
    ea_ref,         # (I+1, TE)     f32  edge_attr^T with trailing valid-mask row
    xw_ref,         # (Ns+Nr, H)    f32  [x_send @ W1_send ; x_rec @ W1_rec]
    w1e_ref,        # (I+1, H)      f32  [W1_edge ; b1]
    w2_ref,         # (1, H)        f32  edge-gate weight as a lane row
    b2_ref,         # (1, 1)        f32  edge-gate bias (SMEM scalar)
    out_ref,        # (Nr, H)       f32  per-core accumulator (same block over inner axis)
):
    blk = pl.program_id(1)

    @pl.when(blk == 0)
    def _init():
        out_ref[...] = jnp.zeros_like(out_ref)

    idx_send = idx_send_ref[...]                  # (1, TE)
    idx_rec = idx_rec_ref[...]                    # (1, TE)
    te = idx_send.shape[1]
    ksr = xw_ref.shape[0]
    n_rec = out_ref.shape[0]
    n_send = ksr - n_rec

    # Shift receiver indices into the second half of the fused gather table; padded
    # edges (index -1) are mapped so they never match any table row.
    idx_rec_shift = jnp.where(idx_rec >= 0, idx_rec + n_send, -1)

    # Lane-dense selectors: edges on the lane axis, table rows on the sublane axis.
    iota_k = jax.lax.broadcasted_iota(jnp.int32, (ksr, te), 0)
    sel = jnp.logical_or(iota_k == idx_send, iota_k == idx_rec_shift)
    sel = sel.astype(jnp.float32)                                      # (Ns+Nr, TE)

    iota_r = jax.lax.broadcasted_iota(jnp.int32, (n_rec, te), 0)
    onehot_rec = (iota_r == idx_rec).astype(jnp.float32)               # (Nr, TE)

    # Fused gather + Linear(2H+I -> H):
    #   sel^T @ [xw_send ; xw_rec] == x_send[idx_send]@W1_send + x_rec[idx_rec]@W1_rec
    #   ea^T  @ [W1_edge ; b1]     == edge_attr@W1_edge + b1   (zeroed for padded edges)
    pre = jax.lax.dot_general(
        sel, xw_ref[...], (((0,), (0,)), ((), ())),
        preferred_element_type=jnp.float32)
    pre = pre + jax.lax.dot_general(
        ea_ref[...], w1e_ref[...], (((0,), (0,)), ((), ())),
        preferred_element_type=jnp.float32)
    messages = pre * jax.nn.sigmoid(pre)                               # SiLU, (TE, H)

    # Edge-gate Linear(H -> 1) as a lane reduction (avoids an N=1 MXU pass).
    logits = jnp.sum(messages * w2_ref[...], axis=-1, keepdims=True) + b2_ref[0, 0]
    weighted = messages * jax.nn.sigmoid(logits)                       # (TE, H)

    # scatter_add over index_rec: dense-K matmul (Nr, TE) @ (TE, H).
    out_ref[...] += jnp.dot(onehot_rec, weighted, preferred_element_type=jnp.float32)


def simplicial_egnn_layer(x_send, x_rec, index_send, index_rec, edge_attr, params,
                          *, edge_tile=512):
    """Pallas wrapper reproducing SimplicialEGNNLayer.forward (lean, no batch_norm)."""
    E, num_inv = edge_attr.shape
    n_send, H = x_send.shape
    n_rec = x_rec.shape[0]
    ksr = n_send + n_rec
    f32 = jnp.float32

    # Edge tile: multiple of 128, not larger than the (128-rounded) edge count.
    edge_tile = max(128, min(edge_tile, pl.cdiv(E, 128) * 128))
    blocks = pl.cdiv(E, edge_tile)

    # Megacore (v7x): split edge blocks across 2 TensorCores into per-core partials that
    # are summed outside the kernel.  Sequential / harmless on single-TC chips.
    num_cores = 2 if (blocks >= 2 and n_rec % 8 == 0) else 1
    blocks = pl.cdiv(blocks, num_cores) * num_cores
    nbpc = blocks // num_cores
    e_pad = blocks * edge_tile
    pad = e_pad - E

    # ---- host-side (XLA) precompute: projections hoisted out of the kernel and fused
    # into a single gather table; b1 is folded into the edge weights as a bias row.
    xw_all = jnp.concatenate(
        [x_send.astype(f32) @ params["w1_send"].astype(f32),
         x_rec.astype(f32) @ params["w1_rec"].astype(f32)], axis=0)        # (Ns+Nr, H)
    w1e_aug = jnp.concatenate(
        [params["w1_edge"].astype(f32), params["b1"].reshape(1, H).astype(f32)],
        axis=0)                                                            # (I+1, H)

    # Per-edge streams, laid out lane-dense (edges on the last axis).
    idx_send = jnp.pad(index_send.astype(jnp.int32), (0, pad),
                       constant_values=-1).reshape(1, e_pad)
    idx_rec = jnp.pad(index_rec.astype(jnp.int32), (0, pad),
                      constant_values=-1).reshape(1, e_pad)
    ea_aug = jnp.concatenate([edge_attr.astype(f32), jnp.ones((E, 1), f32)], axis=1)
    ea_t = jnp.pad(ea_aug, ((0, pad), (0, 0))).T                           # (I+1, e_pad)

    w2_row = params["w2"].reshape(1, H).astype(f32)
    b2 = params["b2"].reshape(1, 1).astype(f32)

    # ---- footprint-based VMEM limit (double-buffered streams + constants + accumulator
    # + lane-dense selector / (TE, H) intermediates), with headroom.
    vmem_est = 4 * (
        2 * (2 * edge_tile + (num_inv + 1) * edge_tile)     # double-buffered edge streams
        + 2 * (ksr * H + (num_inv + 1) * H + H)             # replicated constants
        + 2 * n_rec * H                                     # output accumulator
        + (ksr + n_rec) * edge_tile                         # selectors
        + 4 * edge_tile * H)                                # pre / messages / weighted
    vmem_limit = int(min(max(2 * vmem_est, 16 * 1024 * 1024), 32 * 1024 * 1024))

    flops = int(blocks * (2 * edge_tile * H * (ksr + num_inv + 1 + n_rec)
                          + 8 * edge_tile * H))
    transcendentals = int(blocks * edge_tile * (H + 1))
    bytes_accessed = int(4 * (e_pad * (2 + num_inv + 1)
                              + ksr * H + (num_inv + 1) * H + H + 1
                              + num_cores * n_rec * H))

    grid_spec = pltpu.PrefetchScalarGridSpec(
        num_scalar_prefetch=0,
        grid=(num_cores, nbpc),
        in_specs=[
            pl.BlockSpec((1, edge_tile), lambda c, i: (0, c * nbpc + i)),        # idx_send
            pl.BlockSpec((1, edge_tile), lambda c, i: (0, c * nbpc + i)),        # idx_rec
            pl.BlockSpec((num_inv + 1, edge_tile),
                         lambda c, i: (0, c * nbpc + i)),                        # edge_attr^T
            pl.BlockSpec((ksr, H), lambda c, i: (0, 0)),                         # gather table
            pl.BlockSpec((num_inv + 1, H), lambda c, i: (0, 0)),                 # [W1_edge; b1]
            pl.BlockSpec((1, H), lambda c, i: (0, 0)),                           # w2 row
            pl.BlockSpec(memory_space=pltpu.MemorySpace.SMEM),                   # b2 scalar
        ],
        out_specs=pl.BlockSpec((n_rec, H), lambda c, i: (c, 0)),
    )

    out = pl.pallas_call(
        _simplicial_egnn_kernel,
        out_shape=jax.ShapeDtypeStruct((num_cores * n_rec, H), jnp.float32),
        grid_spec=grid_spec,
        compiler_params=pltpu.CompilerParams(
            dimension_semantics=("parallel", "arbitrary"),
            vmem_limit_bytes=vmem_limit),
        cost_estimate=pl.CostEstimate(
            flops=flops, transcendentals=transcendentals,
            bytes_accessed=bytes_accessed),
    )(idx_send, idx_rec, ea_t, xw_all, w1e_aug, w2_row, b2)

    # Reduce the per-core partial sums (no-op sum when num_cores == 1).
    return out.reshape(num_cores, n_rec, H).sum(axis=0)


def _reference(x_send, x_rec, index_send, index_rec, edge_attr, params):
    """Pure-JAX reference mirroring the PyTorch forward."""
    sim_send = x_send[index_send]
    sim_rec = x_rec[index_rec]
    state = jnp.concatenate((sim_send, sim_rec, edge_attr), axis=1)
    w1 = jnp.concatenate(
        (params["w1_send"], params["w1_rec"], params["w1_edge"]), axis=0)
    pre = state @ w1 + params["b1"]
    messages = pre * jax.nn.sigmoid(pre)
    edge_weights = jax.nn.sigmoid(messages @ params["w2"] + params["b2"])
    weighted = messages * edge_weights
    out = jnp.zeros((x_rec.shape[0], x_rec.shape[1]), jnp.float32)
    return out.at[index_rec].add(weighted)


if __name__ == "__main__":
    # Small, module-consistent shapes; exercises multi-block edge grid, padding, and the
    # 2-way core split (1200 edges -> e_pad=2048, 4 blocks of 512, 2 per core).
    num_hidden = 32    # H
    num_inv = 8        # I
    n_send = 24
    n_rec = 24
    n_edges = 1200

    key = jax.random.PRNGKey(0)
    k = jax.random.split(key, 10)

    x_send = jax.random.normal(k[0], (n_send, num_hidden), jnp.float32)
    x_rec = jax.random.normal(k[1], (n_rec, num_hidden), jnp.float32)
    edge_attr = jax.random.normal(k[2], (n_edges, num_inv), jnp.float32)
    index_send = jax.random.randint(k[3], (n_edges,), 0, n_send, jnp.int32)
    index_rec = jax.random.randint(k[4], (n_edges,), 0, n_rec, jnp.int32)

    # Deterministic parameter init (PyTorch-style uniform +/- 1/sqrt(fan_in)).
    fan1 = 2 * num_hidden + num_inv
    bound1 = 1.0 / float(fan1) ** 0.5
    w1_full = jax.random.uniform(k[5], (fan1, num_hidden), jnp.float32, -bound1, bound1)
    b1 = jax.random.uniform(k[6], (1, num_hidden), jnp.float32, -bound1, bound1)
    bound2 = 1.0 / float(num_hidden) ** 0.5
    w2 = jax.random.uniform(k[7], (num_hidden, 1), jnp.float32, -bound2, bound2)
    b2 = jax.random.uniform(k[8], (1, 1), jnp.float32, -bound2, bound2)

    params = {
        "w1_send": w1_full[:num_hidden, :],
        "w1_rec": w1_full[num_hidden:2 * num_hidden, :],
        "w1_edge": w1_full[2 * num_hidden:, :],
        "b1": b1,
        "w2": w2,
        "b2": b2,
    }

    out = simplicial_egnn_layer(x_send, x_rec, index_send, index_rec, edge_attr, params)
    out = jax.block_until_ready(out)

    ref = _reference(x_send, x_rec, index_send, index_rec, edge_attr, params)
    assert out.shape == (n_rec, num_hidden)
    assert jnp.allclose(out, ref, rtol=1e-4, atol=1e-4), "mismatch vs reference"

    print("KERNEL_OK")
</pallas_src>

<mosaic_0001>
module attributes {stable_mosaic.version = 11 : i64} {
  func.func @_simplicial_egnn_kernel(%arg0: i32, %arg1: i32, %arg2: memref<1x512xi32, #tpu.memory_space<vmem>>, %arg3: memref<1x512xi32, #tpu.memory_space<vmem>>, %arg4: memref<9x512xf32, #tpu.memory_space<vmem>>, %arg5: memref<48x32xf32, #tpu.memory_space<vmem>>, %arg6: memref<9x32xf32, #tpu.memory_space<vmem>>, %arg7: memref<1x32xf32, #tpu.memory_space<vmem>>, %arg8: memref<1x1xf32, #tpu.memory_space<smem>>, %arg9: memref<24x32xf32, #tpu.memory_space<vmem>>) attributes {dimension_semantics = [#tpu.dimension_semantics<parallel>, #tpu.dimension_semantics<arbitrary>], iteration_bounds = array<i64: 2, 2>, scalar_prefetch = 0 : i64, scratch_operands = 0 : i64, tpu.core_type = #tpu.core_type<tc>, window_params = [{transform_indices = @transform_0, window_bounds = array<i64: 1, 512>}, {transform_indices = @transform_1, window_bounds = array<i64: 1, 512>}, {transform_indices = @transform_2, window_bounds = array<i64: 9, 512>}, {pipeline_mode = #tpu.pipeline_mode<synchronous>, transform_indices = @transform_3, window_bounds = array<i64: 48, 32>}, {pipeline_mode = #tpu.pipeline_mode<synchronous>, transform_indices = @transform_4, window_bounds = array<i64: 9, 32>}, {pipeline_mode = #tpu.pipeline_mode<synchronous>, transform_indices = @transform_5, window_bounds = array<i64: 1, 32>}, {transform_indices = @transform_6, window_bounds = array<i64: 1, 1>}, {transform_indices = @transform_7, window_bounds = array<i64: 24, 32>}]} {
    %c0_i32 = arith.constant 0 : i32
    %0 = arith.cmpi eq, %arg1, %c0_i32 : i32
    %1 = arith.extui %0 : i1 to i32
    %c0_i32_0 = arith.constant 0 : i32
    %2 = arith.cmpi ne, %1, %c0_i32_0 : i32
    scf.if %2 {
      %cst_24 = arith.constant 0.000000e+00 : f32
      %55 = vector.broadcast %cst_24 : f32 to vector<24x32xf32>
      %c0_25 = arith.constant 0 : index
      %c0_26 = arith.constant 0 : index
      %56 = vector.load %arg9[%c0_25, %c0_26] : memref<24x32xf32, #tpu.memory_space<vmem>>, vector<24x32xf32>
      tpu.vector_store %arg9[%c0_25, %c0_26], %55 {strides = array<i32>} : memref<24x32xf32, #tpu.memory_space<vmem>>, vector<24x32xf32>,
    } else {
    }
    %c0 = arith.constant 0 : index
    %c0_1 = arith.constant 0 : index
    %3 = vector.load %arg2[%c0, %c0_1] : memref<1x512xi32, #tpu.memory_space<vmem>>, vector<1x512xi32>
    %c0_2 = arith.constant 0 : index
    %c0_3 = arith.constant 0 : index
    %4 = vector.load %arg3[%c0_2, %c0_3] : memref<1x512xi32, #tpu.memory_space<vmem>>, vector<1x512xi32>
    %c0_i32_4 = arith.constant 0 : i32
    %5 = vector.broadcast %c0_i32_4 : i32 to vector<1x512xi32>
    %6 = arith.cmpi sge, %4, %5 : vector<1x512xi32>
    %c24_i32 = arith.constant 24 : i32
    %7 = vector.broadcast %c24_i32 : i32 to vector<1x512xi32>
    %8 = arith.addi %4, %7 : vector<1x512xi32>
    %c-1_i32 = arith.constant -1 : i32
    %9 = vector.broadcast %c-1_i32 : i32 to vector<1x512xi32>
    %10 = arith.select %6, %8, %9 : vector<1x512xi1>, vector<1x512xi32>
    %11 = tpu.iota {dimensions = array<i32: 0>} : vector<48x512xi32>
    %12 = vector.broadcast %3 : vector<1x512xi32> to vector<48x512xi32>
    %13 = arith.cmpi eq, %11, %12 : vector<48x512xi32>
    %14 = vector.broadcast %10 : vector<1x512xi32> to vector<48x512xi32>
    %15 = arith.cmpi eq, %11, %14 : vector<48x512xi32>
    %16 = arith.ori %13, %15 : vector<48x512xi1>
    %17 = arith.extui %16 : vector<48x512xi1> to vector<48x512xi32>
    %18 = arith.sitofp %17 : vector<48x512xi32> to vector<48x512xf32>
    %19 = tpu.iota {dimensions = array<i32: 0>} : vector<24x512xi32>
    %20 = vector.broadcast %4 : vector<1x512xi32> to vector<24x512xi32>
    %21 = arith.cmpi eq, %19, %20 : vector<24x512xi32>
    %22 = arith.extui %21 : vector<24x512xi1> to vector<24x512xi32>
    %23 = arith.sitofp %22 : vector<24x512xi32> to vector<24x512xf32>
    %c0_5 = arith.constant 0 : index
    %c0_6 = arith.constant 0 : index
    %24 = vector.load %arg5[%c0_5, %c0_6] : memref<48x32xf32, #tpu.memory_space<vmem>>, vector<48x32xf32>
    %cst = arith.constant dense<0.000000e+00> : vector<512x32xf32>
    %25 = tpu.matmul %18, %24, %cst {dimension_numbers = #tpu.dot_dimension_numbers<[0], [0], [1], [1], [0, 1, 1, 1], [], []>} : vector<48x512xf32>, vector<48x32xf32>, vector<512x32xf32> -> vector<512x32xf32>
    %c0_7 = arith.constant 0 : index
    %c0_8 = arith.constant 0 : index
    %26 = vector.load %arg4[%c0_7, %c0_8] : memref<9x512xf32, #tpu.memory_space<vmem>>, vector<9x512xf32>
    %c0_9 = arith.constant 0 : index
    %c0_10 = arith.constant 0 : index
    %27 = vector.load %arg6[%c0_9, %c0_10] : memref<9x32xf32, #tpu.memory_space<vmem>>, vector<9x32xf32>
    %cst_11 = arith.constant dense<0.000000e+00> : vector<512x32xf32>
    %28 = tpu.matmul %26, %27, %cst_11 {dimension_numbers = #tpu.dot_dimension_numbers<[0], [0], [1], [1], [0, 1, 1, 1], [], []>} : vector<9x512xf32>, vector<9x32xf32>, vector<512x32xf32> -> vector<512x32xf32>
    %29 = arith.addf %25, %28 : vector<512x32xf32>
    %30 = arith.negf %29 : vector<512x32xf32>
    %31 = math.exp %30 : vector<512x32xf32>
    %cst_12 = arith.constant 1.000000e+00 : f32
    %32 = vector.broadcast %cst_12 : f32 to vector<512x32xf32>
    %33 = arith.addf %32, %31 : vector<512x32xf32>
    %34 = arith.divf %32, %33 : vector<512x32xf32>
    %35 = arith.mulf %29, %34 : vector<512x32xf32>
    %c0_13 = arith.constant 0 : index
    %c0_14 = arith.constant 0 : index
    %36 = vector.load %arg7[%c0_13, %c0_14] : memref<1x32xf32, #tpu.memory_space<vmem>>, vector<1x32xf32>
    %37 = vector.broadcast %36 : vector<1x32xf32> to vector<512x32xf32>
    %38 = arith.mulf %35, %37 : vector<512x32xf32>
    %cst_15 = arith.constant dense<0.000000e+00> : vector<512xf32>
    %39 = vector.multi_reduction <add>, %38, %cst_15 [1] : vector<512x32xf32> to vector<512xf32>
    %40 = vector.shape_cast %39 : vector<512xf32> to vector<512x1xf32>
    %c0_16 = arith.constant 0 : index
    %c0_17 = arith.constant 0 : index
    %41 = memref.load %arg8[%c0_16, %c0_17] : memref<1x1xf32, #tpu.memory_space<smem>>
    %42 = vector.broadcast %41 : f32 to vector<512x1xf32>
    %43 = arith.addf %40, %42 : vector<512x1xf32>
    %44 = arith.negf %43 : vector<512x1xf32>
    %45 = math.exp %44 : vector<512x1xf32>
    %cst_18 = arith.constant 1.000000e+00 : f32
    %46 = vector.broadcast %cst_18 : f32 to vector<512x1xf32>
    %47 = arith.addf %46, %45 : vector<512x1xf32>
    %48 = arith.divf %46, %47 : vector<512x1xf32>
    %49 = vector.broadcast %48 : vector<512x1xf32> to vector<512x32xf32>
    %50 = arith.mulf %35, %49 : vector<512x32xf32>
    %c0_19 = arith.constant 0 : index
    %c0_20 = arith.constant 0 : index
    %51 = vector.load %arg9[%c0_19, %c0_20] : memref<24x32xf32, #tpu.memory_space<vmem>>, vector<24x32xf32>
    %cst_21 = arith.constant dense<0.000000e+00> : vector<24x32xf32>
    %52 = tpu.matmul %23, %50, %cst_21 {dimension_numbers = #tpu.dot_dimension_numbers<[1], [0], [0], [1], [0, 0, 1, 1], [], []>} : vector<24x512xf32>, vector<512x32xf32>, vector<24x32xf32> -> vector<24x32xf32>
    %53 = arith.addf %51, %52 : vector<24x32xf32>
    %c0_22 = arith.constant 0 : index
    %c0_23 = arith.constant 0 : index
    %54 = vector.load %arg9[%c0_22, %c0_23] : memref<24x32xf32, #tpu.memory_space<vmem>>, vector<24x32xf32>
    tpu.vector_store %arg9[%c0_22, %c0_23], %53 {strides = array<i32>} : memref<24x32xf32, #tpu.memory_space<vmem>>, vector<24x32xf32>,
    return
  }
  func.func @transform_0(%arg0: i32, %arg1: i32) -> (i32, i32) {
    %c2_i32 = arith.constant 2 : i32
    %0 = arith.muli %arg0, %c2_i32 : i32
    %1 = arith.addi %0, %arg1 : i32
    %c0_i32 = arith.constant 0 : i32
    %c0_i32_0 = arith.constant 0 : i32
    return %c0_i32, %1 : i32, i32
  }
  func.func @transform_1(%arg0: i32, %arg1: i32) -> (i32, i32) {
    %c2_i32 = arith.constant 2 : i32
    %0 = arith.muli %arg0, %c2_i32 : i32
    %1 = arith.addi %0, %arg1 : i32
    %c0_i32 = arith.constant 0 : i32
    %c0_i32_0 = arith.constant 0 : i32
    return %c0_i32, %1 : i32, i32
  }
  func.func @transform_2(%arg0: i32, %arg1: i32) -> (i32, i32) {
    %c2_i32 = arith.constant 2 : i32
    %0 = arith.muli %arg0, %c2_i32 : i32
    %1 = arith.addi %0, %arg1 : i32
    %c0_i32 = arith.constant 0 : i32
    %c0_i32_0 = arith.constant 0 : i32
    return %c0_i32, %1 : i32, i32
  }
  func.func @transform_3(%arg0: i32, %arg1: i32) -> (i32, i32) {
    %c0_i32 = arith.constant 0 : i32
    %c0_i32_0 = arith.constant 0 : i32
    %c0_i32_1 = arith.constant 0 : i32
    return %c0_i32, %c0_i32_0 : i32, i32
  }
  func.func @transform_4(%arg0: i32, %arg1: i32) -> (i32, i32) {
    %c0_i32 = arith.constant 0 : i32
    %c0_i32_0 = arith.constant 0 : i32
    %c0_i32_1 = arith.constant 0 : i32
    return %c0_i32, %c0_i32_0 : i32, i32
  }
  func.func @transform_5(%arg0: i32, %arg1: i32) -> (i32, i32) {
    %c0_i32 = arith.constant 0 : i32
    %c0_i32_0 = arith.constant 0 : i32
    %c0_i32_1 = arith.constant 0 : i32
    return %c0_i32, %c0_i32_0 : i32, i32
  }
  func.func @transform_6(%arg0: i32, %arg1: i32) -> (i32, i32) {
    %c0_i32 = arith.constant 0 : i32
    %c0_i32_0 = arith.constant 0 : i32
    %c0_i32_1 = arith.constant 0 : i32
    return %c0_i32, %c0_i32_0 : i32, i32
  }
  func.func @transform_7(%arg0: i32, %arg1: i32) -> (i32, i32) {
    %c0_i32 = arith.constant 0 : i32
    %c0_i32_0 = arith.constant 0 : i32
    return %arg0, %c0_i32 : i32, i32
  }
}

</mosaic_0001>

<llo_original>
// kernel: tpu_custom_call.1
$region0: #{tpu_custom_call.1}
  #allocation0 [shape = 'u32[]', space=smem, size = 0x4, offset = 0x4, fixed_abs, tag = 'smem constant byte address 0x4 - core index']
  #allocation1 [shape = 'u32[144,128]{1,0:T(1,128)}', space=vmem, size = 0x12000, scoped, tag = 'internal scratch']
  #allocation2 [shape = 'f32[1,1]{1,0:T(1,128)S(6)}', space=smem, size = 0x200, scoped, tag = 'scoped memory for tpu_custom_call.1']
  %s0 = inlined_call_operand.vmem [shape: s32[1,2048], index: 0, kind: input, shape index: {}]
  %s1 = inlined_call_operand.vmem [shape: s32[1,2048], index: 1, kind: input, shape index: {}]
  %s2 = inlined_call_operand.hbm [shape: f32[9,2048], index: 2, kind: input, shape index: {}]
  %s3 = inlined_call_operand.vmem [shape: f32[48,32], index: 3, kind: input, shape index: {}]
  %s4 = inlined_call_operand.vmem [shape: f32[9,32], index: 4, kind: input, shape index: {}]
  %s5 = inlined_call_operand.vmem [shape: f32[1,32], index: 5, kind: input, shape index: {}]
  %s6 = inlined_call_operand.<no memory space> [shape: f32[1,1], index: 6, kind: input, shape index: {}]
  %s7 = inlined_call_operand.vmem [shape: f32[48,32], index: 7, kind: output, shape index: {}]
  %s8 = sld [smem:[#allocation0]]
  $region69: #{tpu_custom_call.1} parent=0
    _
  %s10 = ssub.s32 1, %s8
  %s11 = scalar_select 0, %s10, %s8
  %12 = sst [smem:[#allocation2]] %s6
  $region1: #{tpu_custom_call.1} parent=0
    #allocation3 [shape = 'u8[65536]{0}', space=vmem, size = 0x10000, scoped, tag = 'input window, operand 2']
    #allocation4 [shape = 's32[2]{0}', space=sflag, size = 0x8, scoped, tag = 'scoped memory for tpu_custom_call.1']
    %13 = vsyncpa [#allocation4], 0
    %s14 = scalar_lea.sflag [#allocation4], 1
    %15 = vsyncpa %s14, 0
    loop: start=0, step=1, limit=6
    $region2: #{tpu_custom_call.1} parent=1 // loop_pre_header
      _
    $region3: #{tpu_custom_call.1} parent=1 // loop_header
      %s17 = sphi 0, %s21
      %p18 = scmp.ge.s32.totalorder %s17, 6
      %s24 = sphi 0, %s36
      %s25 = sphi 0, %s32
      %s26 = sphi 0, %s24
      %s27 = sphi 0, %s25
      %s28 = sphi 0, %s26
      %s29 = sphi 0, %s27
      %s43 = sphi 0, %s45
      %s46 = sphi 0, %s43
      %s47 = sphi 0, %s46
      %s63 = sphi 0, %s47
      %s73 = sphi 0, %s75
      %s76 = sphi 0, %s73
      %s77 = sphi 0, %s76
      %s93 = sphi 0, %s77
      %s103 = sphi 0, %s105
      %s106 = sphi 0, %s103
      %s107 = sphi 0, %s106
      %s123 = sphi 0, %s107
      %s127 = sphi 0, %s127
      %s129 = sphi 0, %s127
      %s130 = sphi 0, %s129
      %s144 = sphi 0, %s130
      %s148 = sphi 0, %s148
      %s150 = sphi 0, %s148
      %s151 = sphi 0, %s150
      %s165 = sphi 0, %s151
      %s169 = sphi 0, %s169
      %s171 = sphi 0, %s169
      %s172 = sphi 0, %s171
      %s186 = sphi 0, %s172
      %s190 = sphi 0, %s190
      %s192 = sphi 0, %s190
      %s193 = sphi 0, %s192
      %s207 = sphi 0, %s193
      %s213 = sphi 0, %s215
      %s216 = sphi 0, %s213
      %s217 = sphi 0, %s216
      %s233 = sphi 0, %s217
    $region4: #{tpu_custom_call.1} parent=1 // loop_header_branch
      %20 = sbr.rel (%p18) target = $region8
    $region5: #{tpu_custom_call.1} parent=1 // loop_body
      %s22 = ssub.s32 %s17, 1
      %s23 = ssub.s32 %s17, 2
      %s30 = sadd.s32 1, %s25
      %p31 = scmp.ge.s32.totalorder %s30, 2
      %s32 = scalar_select %p31, 0, %s30
      %s33 = sadd.s32 1, %s24
      %s34 = scalar_select %p31, %s33, %s24
      %p35 = scmp.ge.s32.totalorder %s34, 2
      %s36 = scalar_select %p35, 0, %s34
      %s37 = smul.u32 %s24, 2
      %s38 = sadd.s32 %s37, %s25
      %s39 = smul.u32 %s36, 2
      %s40 = sadd.s32 %s39, %s32
      %s41 = ssub.s32 %s38, %s40
      %p42 = scmp.eq.s32.totalorder %s41, 0
      %s44 = sadd.s32 %s43, 1
      %s45 = scalar_select %p42, %s43, %s44
      %p48 = pneg %p42
      %p49 = scmp.eq.s32.totalorder %s17, 3
      %p50 = por %p48, %p49
      %p51 = scmp.ne.s32.totalorder %s43, %s46
      %p52 = scmp.eq.s32.totalorder %s17, 0
      %p53 = por %p51, %p52
      %p54 = scmp.ne.s32.totalorder %s43, %s46
      %p55 = scmp.eq.s32.totalorder %s22, 3
      %p56 = por %p54, %p55
      %p57 = scmp.ne.s32.totalorder %s46, %s47
      %p58 = scmp.eq.s32.totalorder %s22, 0
      %p59 = por %p57, %p58
      %p60 = scmp.ne.s32.totalorder %s46, %s47
      %p61 = scmp.eq.s32.totalorder %s23, 3
      %p62 = por %p60, %p61
      %p64 = scmp.ne.s32.totalorder %s47, %s63
      %p65 = scmp.eq.s32.totalorder %s23, 0
      %p66 = por %p64, %p65
      %s67 = smul.u32 %s24, 2
      %s68 = sadd.s32 %s67, %s25
      %s69 = smul.u32 %s36, 2
      %s70 = sadd.s32 %s69, %s32
      %s71 = ssub.s32 %s68, %s70
      %p72 = scmp.eq.s32.totalorder %s71, 0
      %s74 = sadd.s32 %s73, 1
      %s75 = scalar_select %p72, %s73, %s74
      %p78 = pneg %p72
      %p79 = scmp.eq.s32.totalorder %s17, 3
      %p80 = por %p78, %p79
      %p81 = scmp.ne.s32.totalorder %s73, %s76
      %p82 = scmp.eq.s32.totalorder %s17, 0
      %p83 = por %p81, %p82
      %p84 = scmp.ne.s32.totalorder %s73, %s76
      %p85 = scmp.eq.s32.totalorder %s22, 3
      %p86 = por %p84, %p85
      %p87 = scmp.ne.s32.totalorder %s76, %s77
      %p88 = scmp.eq.s32.totalorder %s22, 0
      %p89 = por %p87, %p88
      %p90 = scmp.ne.s32.totalorder %s76, %s77
      %p91 = scmp.eq.s32.totalorder %s23, 3
      %p92 = por %p90, %p91
      %p94 = scmp.ne.s32.totalorder %s77, %s93
      %p95 = scmp.eq.s32.totalorder %s23, 0
      %p96 = por %p94, %p95
      %s97 = smul.u32 %s24, 2
      %s98 = sadd.s32 %s97, %s25
      %s99 = smul.u32 %s36, 2
      %s100 = sadd.s32 %s99, %s32
      %s101 = ssub.s32 %s98, %s100
      %p102 = scmp.eq.s32.totalorder %s101, 0
      %s104 = sadd.s32 %s103, 1
      %s105 = scalar_select %p102, %s103, %s104
      %p108 = pneg %p102
      %p109 = scmp.eq.s32.totalorder %s17, 3
      %p110 = por %p108, %p109
      %p111 = scmp.ne.s32.totalorder %s103, %s106
      %p112 = scmp.eq.s32.totalorder %s17, 0
      %p113 = por %p111, %p112
      %p114 = scmp.ne.s32.totalorder %s103, %s106
      %p115 = scmp.eq.s32.totalorder %s22, 3
      %p116 = por %p114, %p115
      %p117 = scmp.ne.s32.totalorder %s106, %s107
      %p118 = scmp.eq.s32.totalorder %s22, 0
      %p119 = por %p117, %p118
      %p120 = scmp.ne.s32.totalorder %s106, %s107
      %p121 = scmp.eq.s32.totalorder %s23, 3
      %p122 = por %p120, %p121
      %p124 = scmp.ne.s32.totalorder %s107, %s123
      %p125 = scmp.eq.s32.totalorder %s23, 0
      %p126 = por %p124, %p125
      %s128 = sadd.s32 %s127, 1
      %p131 = scmp.eq.s32.totalorder %s17, 3
      %p132 = scmp.ne.s32.totalorder %s127, %s129
      %p133 = scmp.eq.s32.totalorder %s17, 0
      %p134 = por %p132, %p133
      %p135 = scmp.ne.s32.totalorder %s127, %s129
      %p136 = scmp.eq.s32.totalorder %s22, 3
      %p137 = por %p135, %p136
      %p138 = scmp.ne.s32.totalorder %s129, %s130
      %p139 = scmp.eq.s32.totalorder %s22, 0
      %p140 = por %p138, %p139
      %p141 = scmp.ne.s32.totalorder %s129, %s130
      %p142 = scmp.eq.s32.totalorder %s23, 3
      %p143 = por %p141, %p142
      %p145 = scmp.ne.s32.totalorder %s130, %s144
      %p146 = scmp.eq.s32.totalorder %s23, 0
      %p147 = por %p145, %p146
      %s149 = sadd.s32 %s148, 1
      %p152 = scmp.eq.s32.totalorder %s17, 3
      %p153 = scmp.ne.s32.totalorder %s148, %s150
      %p154 = scmp.eq.s32.totalorder %s17, 0
      %p155 = por %p153, %p154
      %p156 = scmp.ne.s32.totalorder %s148, %s150
      %p157 = scmp.eq.s32.totalorder %s22, 3
      %p158 = por %p156, %p157
      %p159 = scmp.ne.s32.totalorder %s150, %s151
      %p160 = scmp.eq.s32.totalorder %s22, 0
      %p161 = por %p159, %p160
      %p162 = scmp.ne.s32.totalorder %s150, %s151
      %p163 = scmp.eq.s32.totalorder %s23, 3
      %p164 = por %p162, %p163
      %p166 = scmp.ne.s32.totalorder %s151, %s165
      %p167 = scmp.eq.s32.totalorder %s23, 0
      %p168 = por %p166, %p167
      %s170 = sadd.s32 %s169, 1
      %p173 = scmp.eq.s32.totalorder %s17, 3
      %p174 = scmp.ne.s32.totalorder %s169, %s171
      %p175 = scmp.eq.s32.totalorder %s17, 0
      %p176 = por %p174, %p175
      %p177 = scmp.ne.s32.totalorder %s169, %s171
      %p178 = scmp.eq.s32.totalorder %s22, 3
      %p179 = por %p177, %p178
      %p180 = scmp.ne.s32.totalorder %s171, %s172
      %p181 = scmp.eq.s32.totalorder %s22, 0
      %p182 = por %p180, %p181
      %p183 = scmp.ne.s32.totalorder %s171, %s172
      %p184 = scmp.eq.s32.totalorder %s23, 3
      %p185 = por %p183, %p184
      %p187 = scmp.ne.s32.totalorder %s172, %s186
      %p188 = scmp.eq.s32.totalorder %s23, 0
      %p189 = por %p187, %p188
      %s191 = sadd.s32 %s190, 1
      %p194 = scmp.eq.s32.totalorder %s17, 3
      %p195 = scmp.ne.s32.totalorder %s190, %s192
      %p196 = scmp.eq.s32.totalorder %s17, 0
      %p197 = por %p195, %p196
      %p198 = scmp.ne.s32.totalorder %s190, %s192
      %p199 = scmp.eq.s32.totalorder %s22, 3
      %p200 = por %p198, %p199
      %p201 = scmp.ne.s32.totalorder %s192, %s193
      %p202 = scmp.eq.s32.totalorder %s22, 0
      %p203 = por %p201, %p202
      %p204 = scmp.ne.s32.totalorder %s192, %s193
      %p205 = scmp.eq.s32.totalorder %s23, 3
      %p206 = por %p204, %p205
      %p208 = scmp.ne.s32.totalorder %s193, %s207
      %p209 = scmp.eq.s32.totalorder %s23, 0
      %p210 = por %p208, %p209
      %s211 = ssub.s32 %s24, %s36
      %p212 = scmp.eq.s32.totalorder %s211, 0
      %s214 = sadd.s32 %s213, 1
      %s215 = scalar_select %p212, %s213, %s214
      %p218 = pneg %p212
      %p219 = scmp.eq.s32.totalorder %s17, 3
      %p220 = por %p218, %p219
      %p221 = scmp.ne.s32.totalorder %s213, %s216
      %p222 = scmp.eq.s32.totalorder %s17, 0
      %p223 = por %p221, %p222
      %p224 = scmp.ne.s32.totalorder %s213, %s216
      %p225 = scmp.eq.s32.totalorder %s22, 3
      %p226 = por %p224, %p225
      %p227 = scmp.ne.s32.totalorder %s216, %s217
      %p228 = scmp.eq.s32.totalorder %s22, 0
      %p229 = por %p227, %p228
      %p230 = scmp.ne.s32.totalorder %s216, %s217
      %p231 = scmp.eq.s32.totalorder %s23, 3
      %p232 = por %p230, %p231
      %p234 = scmp.ne.s32.totalorder %s217, %s233
      %p235 = scmp.eq.s32.totalorder %s23, 0
      %p236 = por %p234, %p235
      %p237 = scmp.le.s32.totalorder 1, %s17
      %p238 = scmp.lt.s32.totalorder %s17, 5
      %p239 = pnand %p237, %p238
      %p240 = pneg %p239
      // Predicated region
      $region9: #{tpu_custom_call.1} parent=5 // pred_check
        _
      $region10: #{tpu_custom_call.1} parent=5 // pred_check_branch
        %242 = sbr.rel (%p239) target = $region12
      $region11: #{tpu_custom_call.1} parent=5 // pred_region
        %s243 = ssub.s32 %s17, 1
        // Predicated region
        $region13: #{tpu_custom_call.1} parent=11 // pred_check
          %p244 = pneg %p140
        $region14: #{tpu_custom_call.1} parent=11 // pred_check_branch
          %246 = sbr.rel (%p244) target = $region16
        $region15: #{tpu_custom_call.1} parent=11 // pred_region
          _
        $region16: #{tpu_custom_call.1} parent=11 // pred_fallthru
          _
        // Predicated region
        $region17: #{tpu_custom_call.1} parent=11 // pred_check
          %p247 = pneg %p161
        $region18: #{tpu_custom_call.1} parent=11 // pred_check_branch
          %249 = sbr.rel (%p247) target = $region20
        $region19: #{tpu_custom_call.1} parent=11 // pred_region
          _
        $region20: #{tpu_custom_call.1} parent=11 // pred_fallthru
          _
        // Predicated region
        $region21: #{tpu_custom_call.1} parent=11 // pred_check
          %p250 = pneg %p182
        $region22: #{tpu_custom_call.1} parent=11 // pred_check_branch
          %252 = sbr.rel (%p250) target = $region24
        $region23: #{tpu_custom_call.1} parent=11 // pred_region
          _
        $region24: #{tpu_custom_call.1} parent=11 // pred_fallthru
          _
        // Predicated region
        $region25: #{tpu_custom_call.1} parent=11 // pred_check
          %p253 = pneg %p203
        $region26: #{tpu_custom_call.1} parent=11 // pred_check_branch
          %255 = sbr.rel (%p253) target = $region28
        $region27: #{tpu_custom_call.1} parent=11 // pred_region
          _
        $region28: #{tpu_custom_call.1} parent=11 // pred_fallthru
          _
      $region12: #{tpu_custom_call.1} parent=5 // pred_fallthru
        _
      %p256 = scmp.lt.s32.totalorder %s17, 4
      // Predicated region
      $region29: #{tpu_custom_call.1} parent=5 // pred_check
        %p257 = pneg %p256
      $region30: #{tpu_custom_call.1} parent=5 // pred_check_branch
        %259 = sbr.rel (%p257) target = $region32
      $region31: #{tpu_custom_call.1} parent=5 // pred_region
        // Predicated region
        $region33: #{tpu_custom_call.1} parent=31 // pred_check
          %p260 = pneg %p53
        $region34: #{tpu_custom_call.1} parent=31 // pred_check_branch
          %262 = sbr.rel (%p260) target = $region36
        $region35: #{tpu_custom_call.1} parent=31 // pred_region
          %s263 = smul.u32 %s24, 2
          %s264 = sadd.s32 %s263, %s25
          %s265 = smul.u32 4, %s264
          %p266 = scmp.lt.s32.totalorder %s265, 15
          %s267 = scalar_select %p266, %s265, 15
          %s268 = scalar_lea.vmem %s0, %s267
          %s269 = smul.u32 %s24, 2
          %s270 = sadd.s32 %s269, %s25
          %s271 = smul.u32 4, %s270
        $region36: #{tpu_custom_call.1} parent=31 // pred_fallthru
          _
        // Predicated region
        $region37: #{tpu_custom_call.1} parent=31 // pred_check
          %p272 = pneg %p83
        $region38: #{tpu_custom_call.1} parent=31 // pred_check_branch
          %274 = sbr.rel (%p272) target = $region40
        $region39: #{tpu_custom_call.1} parent=31 // pred_region
          %s275 = smul.u32 %s24, 2
          %s276 = sadd.s32 %s275, %s25
          %s277 = smul.u32 4, %s276
          %p278 = scmp.lt.s32.totalorder %s277, 15
          %s279 = scalar_select %p278, %s277, 15
          %s280 = scalar_lea.vmem %s1, %s279
          %s281 = smul.u32 %s24, 2
          %s282 = sadd.s32 %s281, %s25
          %s283 = smul.u32 4, %s282
        $region40: #{tpu_custom_call.1} parent=31 // pred_fallthru
          _
        // Predicated region
        $region41: #{tpu_custom_call.1} parent=31 // pred_check
          %p284 = pneg %p113
        $region42: #{tpu_custom_call.1} parent=31 // pred_check_branch
          %286 = sbr.rel (%p284) target = $region44
        $region43: #{tpu_custom_call.1} parent=31 // pred_region
          %s287 = sand.u32 %s103, 1
          %s288 = scalar_lea.sflag [#allocation4], %s287
          %s289 = sand.u32 %s103, 1
          %s290 = smul.addr %s289, 64
          %s291 = scalar_lea.vmem [#allocation3], %s290
          %s292 = smul.u32 %s24, 2
          %s293 = sadd.s32 %s292, %s25
          %s294 = smul.u32 4, %s293
          %s296 = ssub.s32 1024, 1024
          %297 = vsyncadd %s288, %s296
          %s298 = smul.addr %s294, 128
          %s299 = scalar_lea.hbm %s2, %s298
          %s300 = sshll.u32 %s291, 4
          %s301 = int_to_ptr.vmem [resolvable:$true] %s300
          %306 = dma.hbm_to_vmem [thread:$0]  %s299, 1024, %s301, %s288, 2048, 512, 32
        $region44: #{tpu_custom_call.1} parent=31 // pred_fallthru
          _
      $region32: #{tpu_custom_call.1} parent=5 // pred_fallthru
        _
      %p307 = scmp.le.s32.totalorder 1, %s17
      %p308 = scmp.lt.s32.totalorder %s17, 5
      %p309 = pnand %p307, %p308
      %p310 = pneg %p309
      // Predicated region
      $region45: #{tpu_custom_call.1} parent=5 // pred_check
        _
      $region46: #{tpu_custom_call.1} parent=5 // pred_check_branch
        %312 = sbr.rel (%p309) target = $region48
      $region47: #{tpu_custom_call.1} parent=5 // pred_region
        %s313 = ssub.s32 %s17, 1
        %s314 = sand.u32 %s106, 1
        %s315 = scalar_lea.sflag [#allocation4], %s314
        %s316 = sand.u32 %s106, 1
        %s317 = smul.addr %s316, 64
        %s318 = scalar_lea.vmem [#allocation3], %s317
        // Predicated region
        $region49: #{tpu_custom_call.1} parent=47 // pred_check
          %p319 = pneg %p119
        $region50: #{tpu_custom_call.1} parent=47 // pred_check_branch
          %321 = sbr.rel (%p319) target = $region52
        $region51: #{tpu_custom_call.1} parent=47 // pred_region
          %322 = dma.done %s315, 1024
        $region52: #{tpu_custom_call.1} parent=47 // pred_fallthru
          _
        %s323 = smul.u32 %s26, 2
        %s324 = sadd.s32 %s323, %s27
        %s325 = smul.u32 4, %s324
        %p326 = scmp.lt.s32.totalorder %s325, 15
        %s327 = scalar_select %p326, %s325, 15
        %s328 = scalar_lea.vmem %s0, %s327
        %p329 = pneg %p59
        %p330 = pneg %p56
        %s331 = smul.u32 %s26, 2
        %s332 = sadd.s32 %s331, %s27
        %s333 = smul.u32 4, %s332
        %p334 = scmp.lt.s32.totalorder %s333, 15
        %s335 = scalar_select %p334, %s333, 15
        %s336 = scalar_lea.vmem %s1, %s335
        %p337 = pneg %p89
        %p338 = pneg %p86
        %s339 = sand.u32 %s106, 1
        %s340 = scalar_lea.sflag [#allocation4], %s339
        %s341 = sand.u32 %s106, 1
        %s342 = smul.addr %s341, 64
        %s343 = scalar_lea.vmem [#allocation3], %s342
        %p344 = pneg %p119
        %p345 = pneg %p116
        %p346 = pneg %p140
        %p347 = pneg %p137
        %p348 = pneg %p161
        %p349 = pneg %p158
        %p350 = pneg %p182
        %p351 = pneg %p179
        %p352 = pneg %p203
        %p353 = pneg %p200
        %p354 = pneg %p229
        %p355 = pneg %p226
        %s356 = smul.u32 3, %s26
        %p357 = scmp.lt.s32.totalorder %s356, 5
        %s358 = scalar_select %p357, %s356, 5
        %s359 = smul.addr %s358, 8
        %s360 = scalar_lea.vmem %s7, %s359
        %s361 = smul.u32 %s26, 2
        %s362 = sadd.s32 %s361, %s27
        %s363 = smul.u32 4, %s362
        %p364 = scmp.lt.s32.totalorder %s363, 15
        %s365 = scalar_select %p364, %s363, 15
        %s366 = scalar_lea.vmem %s0, %s365
        %s367 = smul.u32 %s26, 2
        %s368 = sadd.s32 %s367, %s27
        %s369 = smul.u32 4, %s368
        %s370 = smul.u32 %s26, 2
        %s371 = sadd.s32 %s370, %s27
        %s372 = smul.u32 4, %s371
        %p373 = scmp.lt.s32.totalorder %s372, 15
        %s374 = scalar_select %p373, %s372, 15
        %s375 = scalar_lea.vmem %s1, %s374
        %s376 = smul.u32 %s26, 2
        %s377 = sadd.s32 %s376, %s27
        %s378 = smul.u32 4, %s377
        %s379 = smul.u32 %s26, 2
        %s380 = sadd.s32 %s379, %s27
        %s381 = smul.u32 4, %s380
        %s382 = smul.u32 3, %s26
        %p383 = scmp.lt.s32.totalorder %s382, 5
        %s384 = scalar_select %p383, %s382, 5
        %s385 = smul.addr %s384, 8
        %s386 = scalar_lea.vmem %s7, %s385
        %s387 = smul.u32 3, %s26
        %p388 = scmp.eq.s32.totalorder %s27, 0
        // Predicated region
        $region53: #{tpu_custom_call.1} parent=47 // pred_check
          %p389 = pneg %p388
        $region54: #{tpu_custom_call.1} parent=47 // pred_check_branch
          %391 = sbr.rel (%p389) target = $region56
        $region55: #{tpu_custom_call.1} parent=47 // pred_region
          %vm392 = vcmask 261120
          %393 = vst.msk [vmem:[%s386] sm:$0xff] %vm392, 0.0
          %394 = vst.msk [vmem:[%s386 + $0x8] sm:$0xff] %vm392, 0.0
          %395 = vst.msk [vmem:[%s386 + $0x10] sm:$0xff] %vm392, 0.0
        $region56: #{tpu_custom_call.1} parent=47 // pred_fallthru
          _
        %v396 = vld [vmem:[%s366] sm:$0xf]
        %v397 = vld [vmem:[%s375] sm:$0xf]
        %vm398 = vcmp.ge.s32.totalorder %v397, 0
        %v399 = vadd.s32 %v397, 24
        %v400 = vsel %vm398, %v399, 4294967295
        %v401 = vlaneseq
        %v402 = vshrl.u32 %v401, 7
        %v403 = vadd.s32 %v402, 8
        %v404 = vadd.s32 %v402, 16
        %v405 = vadd.s32 %v402, 24
        %v406 = vadd.s32 %v402, 32
        %v407 = vadd.s32 %v402, 40
        %v408 = vlaneseq
        %v409 = vshrl.u32 %v408, 7
        %v410 = vsub.s32 0, %v409
        %v411 = vrot.slane %v396, %v410
        %v412 = vlaneseq
        %v413 = vshrl.u32 %v412, 7
        %v414 = vsub.s32 1, %v413
        %v415 = vrot.slane %v396, %v414
        %v416 = vlaneseq
        %v417 = vshrl.u32 %v416, 7
        %v418 = vsub.s32 2, %v417
        %v419 = vrot.slane %v396, %v418
        %v420 = vlaneseq
        %v421 = vshrl.u32 %v420, 7
        %v422 = vsub.s32 3, %v421
        %v423 = vrot.slane %v396, %v422
        %vm424 = vcmp.eq.s32.totalorder %v402, %v411
        %vm425 = vcmp.eq.s32.totalorder %v402, %v415
        %vm426 = vcmp.eq.s32.totalorder %v402, %v419
        %vm427 = vcmp.eq.s32.totalorder %v402, %v423
        %vm428 = vcmp.eq.s32.totalorder %v403, %v411
        %vm429 = vcmp.eq.s32.totalorder %v403, %v415
        %vm430 = vcmp.eq.s32.totalorder %v403, %v419
        %vm431 = vcmp.eq.s32.totalorder %v403, %v423
        %vm432 = vcmp.eq.s32.totalorder %v404, %v411
        %vm433 = vcmp.eq.s32.totalorder %v404, %v415
        %vm434 = vcmp.eq.s32.totalorder %v404, %v419
        %vm435 = vcmp.eq.s32.totalorder %v404, %v423
        %vm436 = vcmp.eq.s32.totalorder %v405, %v411
        %vm437 = vcmp.eq.s32.totalorder %v405, %v415
        %vm438 = vcmp.eq.s32.totalorder %v405, %v419
        %vm439 = vcmp.eq.s32.totalorder %v405, %v423
        %vm440 = vcmp.eq.s32.totalorder %v406, %v411
        %vm441 = vcmp.eq.s32.totalorder %v406, %v415
        %vm442 = vcmp.eq.s32.totalorder %v406, %v419
        %vm443 = vcmp.eq.s32.totalorder %v406, %v423
        %vm444 = vcmp.eq.s32.totalorder %v407, %v411
        %vm445 = vcmp.eq.s32.totalorder %v407, %v415
        %vm446 = vcmp.eq.s32.totalorder %v407, %v419
        %vm447 = vcmp.eq.s32.totalorder %v407, %v423
        %v448 = vlaneseq
        %v449 = vshrl.u32 %v448, 7
        %v450 = vsub.s32 0, %v449
        %v451 = vrot.slane %v400, %v450
        %v452 = vlaneseq
        %v453 = vshrl.u32 %v452, 7
        %v454 = vsub.s32 1, %v453
        %v455 = vrot.slane %v400, %v454
        %v456 = vlaneseq
        %v457 = vshrl.u32 %v456, 7
        %v458 = vsub.s32 2, %v457
        %v459 = vrot.slane %v400, %v458
        %v460 = vlaneseq
        %v461 = vshrl.u32 %v460, 7
        %v462 = vsub.s32 3, %v461
        %v463 = vrot.slane %v400, %v462
        %vm464 = vcmp.eq.s32.totalorder %v402, %v451
        %vm465 = vcmp.eq.s32.totalorder %v402, %v455
        %vm466 = vcmp.eq.s32.totalorder %v402, %v459
        %vm467 = vcmp.eq.s32.totalorder %v402, %v463
        %vm468 = vcmp.eq.s32.totalorder %v403, %v451
        %vm469 = vcmp.eq.s32.totalorder %v403, %v455
        %vm470 = vcmp.eq.s32.totalorder %v403, %v459
        %vm471 = vcmp.eq.s32.totalorder %v403, %v463
        %vm472 = vcmp.eq.s32.totalorder %v404, %v451
        %vm473 = vcmp.eq.s32.totalorder %v404, %v455
        %vm474 = vcmp.eq.s32.totalorder %v404, %v459
        %vm475 = vcmp.eq.s32.totalorder %v404, %v463
        %vm476 = vcmp.eq.s32.totalorder %v405, %v451
        %vm477 = vcmp.eq.s32.totalorder %v405, %v455
        %vm478 = vcmp.eq.s32.totalorder %v405, %v459
        %vm479 = vcmp.eq.s32.totalorder %v405, %v463
        %vm480 = vcmp.eq.s32.totalorder %v406, %v451
        %vm481 = vcmp.eq.s32.totalorder %v406, %v455
        %vm482 = vcmp.eq.s32.totalorder %v406, %v459
        %vm483 = vcmp.eq.s32.totalorder %v406, %v463
        %vm484 = vcmp.eq.s32.totalorder %v407, %v451
        %vm485 = vcmp.eq.s32.totalorder %v407, %v455
        %vm486 = vcmp.eq.s32.totalorder %v407, %v459
        %vm487 = vcmp.eq.s32.totalorder %v407, %v463
        %vm488 = vmor %vm424, %vm464
        %vm489 = vmor %vm425, %vm465
        %vm490 = vmor %vm426, %vm466
        %vm491 = vmor %vm427, %vm467
        %vm492 = vmor %vm428, %vm468
        %vm493 = vmor %vm429, %vm469
        %vm494 = vmor %vm430, %vm470
        %vm495 = vmor %vm431, %vm471
        %vm496 = vmor %vm432, %vm472
        %vm497 = vmor %vm433, %vm473
        %vm498 = vmor %vm434, %vm474
        %vm499 = vmor %vm435, %vm475
        %vm500 = vmor %vm436, %vm476
        %vm501 = vmor %vm437, %vm477
        %vm502 = vmor %vm438, %vm478
        %vm503 = vmor %vm439, %vm479
        %vm504 = vmor %vm440, %vm480
        %vm505 = vmor %vm441, %vm481
        %vm506 = vmor %vm442, %vm482
        %vm507 = vmor %vm443, %vm483
        %vm508 = vmor %vm444, %vm484
        %vm509 = vmor %vm445, %vm485
        %vm510 = vmor %vm446, %vm486
        %vm511 = vmor %vm447, %vm487
        %v512 = vsel %vm488, 1, 0
        %v513 = vsel %vm489, 1, 0
        %v514 = vsel %vm490, 1, 0
        %v515 = vsel %vm491, 1, 0
        %v516 = vsel %vm492, 1, 0
        %v517 = vsel %vm493, 1, 0
        %v518 = vsel %vm494, 1, 0
        %v519 = vsel %vm495, 1, 0
        %v520 = vsel %vm496, 1, 0
        %v521 = vsel %vm497, 1, 0
        %v522 = vsel %vm498, 1, 0
        %v523 = vsel %vm499, 1, 0
        %v524 = vsel %vm500, 1, 0
        %v525 = vsel %vm501, 1, 0
        %v526 = vsel %vm502, 1, 0
        %v527 = vsel %vm503, 1, 0
        %v528 = vsel %vm504, 1, 0
        %v529 = vsel %vm505, 1, 0
        %v530 = vsel %vm506, 1, 0
        %v531 = vsel %vm507, 1, 0
        %v532 = vsel %vm508, 1, 0
        %v533 = vsel %vm509, 1, 0
        %v534 = vsel %vm510, 1, 0
        %v535 = vsel %vm511, 1, 0
        %v536 = vcvt.s32.f32 %v512
        %v537 = vcvt.s32.f32 %v513
        %v538 = vcvt.s32.f32 %v514
        %v539 = vcvt.s32.f32 %v515
        %v540 = vcvt.s32.f32 %v516
        %v541 = vcvt.s32.f32 %v517
        %v542 = vcvt.s32.f32 %v518
        %v543 = vcvt.s32.f32 %v519
        %v544 = vcvt.s32.f32 %v520
        %v545 = vcvt.s32.f32 %v521
        %v546 = vcvt.s32.f32 %v522
        %v547 = vcvt.s32.f32 %v523
        %v548 = vcvt.s32.f32 %v524
        %v549 = vcvt.s32.f32 %v525
        %v550 = vcvt.s32.f32 %v526
        %v551 = vcvt.s32.f32 %v527
        %v552 = vcvt.s32.f32 %v528
        %v553 = vcvt.s32.f32 %v529
        %v554 = vcvt.s32.f32 %v530
        %v555 = vcvt.s32.f32 %v531
        %v556 = vcvt.s32.f32 %v532
        %v557 = vcvt.s32.f32 %v533
        %v558 = vcvt.s32.f32 %v534
        %v559 = vcvt.s32.f32 %v535
        %v560 = vlaneseq
        %v561 = vshrl.u32 %v560, 7
        %v562 = vsub.s32 0, %v561
        %v563 = vrot.slane %v397, %v562
        %v564 = vlaneseq
        %v565 = vshrl.u32 %v564, 7
        %v566 = vsub.s32 1, %v565
        %v567 = vrot.slane %v397, %v566
        %v568 = vlaneseq
        %v569 = vshrl.u32 %v568, 7
        %v570 = vsub.s32 2, %v569
        %v571 = vrot.slane %v397, %v570
        %v572 = vlaneseq
        %v573 = vshrl.u32 %v572, 7
        %v574 = vsub.s32 3, %v573
        %v575 = vrot.slane %v397, %v574
        %vm576 = vcmp.eq.s32.totalorder %v402, %v563
        %vm577 = vcmp.eq.s32.totalorder %v402, %v567
        %vm578 = vcmp.eq.s32.totalorder %v402, %v571
        %vm579 = vcmp.eq.s32.totalorder %v402, %v575
        %vm580 = vcmp.eq.s32.totalorder %v403, %v563
        %vm581 = vcmp.eq.s32.totalorder %v403, %v567
        %vm582 = vcmp.eq.s32.totalorder %v403, %v571
        %vm583 = vcmp.eq.s32.totalorder %v403, %v575
        %vm584 = vcmp.eq.s32.totalorder %v404, %v563
        %vm585 = vcmp.eq.s32.totalorder %v404, %v567
        %vm586 = vcmp.eq.s32.totalorder %v404, %v571
        %vm587 = vcmp.eq.s32.totalorder %v404, %v575
        %v588 = vsel %vm576, 1, 0
        %v589 = vsel %vm577, 1, 0
        %v590 = vsel %vm578, 1, 0
        %v591 = vsel %vm579, 1, 0
        %v592 = vsel %vm580, 1, 0
        %v593 = vsel %vm581, 1, 0
        %v594 = vsel %vm582, 1, 0
        %v595 = vsel %vm583, 1, 0
        %v596 = vsel %vm584, 1, 0
        %v597 = vsel %vm585, 1, 0
        %v598 = vsel %vm586, 1, 0
        %v599 = vsel %vm587, 1, 0
        %v600 = vcvt.s32.f32 %v588
        %v601 = vcvt.s32.f32 %v589
        %v602 = vcvt.s32.f32 %v590
        %v603 = vcvt.s32.f32 %v591
        %v604 = vcvt.s32.f32 %v592
        %v605 = vcvt.s32.f32 %v593
        %v606 = vcvt.s32.f32 %v594
        %v607 = vcvt.s32.f32 %v595
        %v608 = vcvt.s32.f32 %v596
        %v609 = vcvt.s32.f32 %v597
        %v610 = vcvt.s32.f32 %v598
        %v611 = vcvt.s32.f32 %v599
        %v612 = vld [vmem:[%s3] sm:$0xff]
        %v613 = vld [vmem:[%s3 + $0x8] sm:$0xff]
        %v614 = vld [vmem:[%s3 + $0x10] sm:$0xff]
        %v615 = vld [vmem:[%s3 + $0x18] sm:$0xff]
        %v616 = vld [vmem:[%s3 + $0x20] sm:$0xff]
        %v617 = vld [vmem:[%s3 + $0x28] sm:$0xff]
        %v618 = vld [vmem:[%s318] sm:$0xff]
        %v619 = vld [vmem:[%s318 + $0x8] sm:$0xff]
        %v620 = vld [vmem:[%s318 + $0x10] sm:$0xff]
        %v621 = vld [vmem:[%s318 + $0x18] sm:$0xff]
        %v622 = vld [vmem:[%s318 + $0x20] sm:$0x1]
        %v623 = vld [vmem:[%s318 + $0x28] sm:$0x1]
        %v624 = vld [vmem:[%s318 + $0x30] sm:$0x1]
        %v625 = vld [vmem:[%s318 + $0x38] sm:$0x1]
        %v626 = vld [vmem:[%s4] sm:$0xff]
        %v627 = vld [vmem:[%s4 + $0x8] sm:$0x1]
        %628 = vxpose.xlu0.b32.start [1/16] %v618, 128
        %629 = vxpose.xlu0.b32.cont [2/16] %v622, 128
        %630 = vxpose.xlu0.b32.cont [3/16] 0.0, 128
        %631 = vxpose.xlu0.b32.cont [4/16] 0.0, 128
        %632 = vxpose.xlu0.b32.cont [5/16] 0.0, 128
        %633 = vxpose.xlu0.b32.cont [6/16] 0.0, 128
        %634 = vxpose.xlu0.b32.cont [7/16] 0.0, 128
        %635 = vxpose.xlu0.b32.cont [8/16] 0.0, 128
        %636 = vxpose.xlu0.b32.cont [9/16] 0.0, 128
        %637 = vxpose.xlu0.b32.cont [10/16] 0.0, 128
        %638 = vxpose.xlu0.b32.cont [11/16] 0.0, 128
        %639 = vxpose.xlu0.b32.cont [12/16] 0.0, 128
        %640 = vxpose.xlu0.b32.cont [13/16] 0.0, 128
        %641 = vxpose.xlu0.b32.cont [14/16] 0.0, 128
        %642 = vxpose.xlu0.b32.cont [15/16] 0.0, 128
        %643 = vxpose.xlu0.b32.end [16/16] 0.0, 128
        %v644 = vpop.trf.xlu0
        %v645 = vpop.trf.xlu0
        %v646 = vpop.trf.xlu0
        %v647 = vpop.trf.xlu0
        %v648 = vpop.trf.xlu0
        %v649 = vpop.trf.xlu0
        %v650 = vpop.trf.xlu0
        %v651 = vpop.trf.xlu0
        %v652 = vpop.trf.xlu0
        %v653 = vpop.trf.xlu0
        %v654 = vpop.trf.xlu0
        %v655 = vpop.trf.xlu0
        %v656 = vpop.trf.xlu0
        %v657 = vpop.trf.xlu0
        %v658 = vpop.trf.xlu0
        %v659 = vpop.trf.xlu0
        %660 = vxpose.xlu0.b32.start [1/16] %v619, 128
        %661 = vxpose.xlu0.b32.cont [2/16] %v623, 128
        %662 = vxpose.xlu0.b32.cont [3/16] 0.0, 128
        %663 = vxpose.xlu0.b32.cont [4/16] 0.0, 128
        %664 = vxpose.xlu0.b32.cont [5/16] 0.0, 128
        %665 = vxpose.xlu0.b32.cont [6/16] 0.0, 128
        %666 = vxpose.xlu0.b32.cont [7/16] 0.0, 128
        %667 = vxpose.xlu0.b32.cont [8/16] 0.0, 128
        %668 = vxpose.xlu0.b32.cont [9/16] 0.0, 128
        %669 = vxpose.xlu0.b32.cont [10/16] 0.0, 128
        %670 = vxpose.xlu0.b32.cont [11/16] 0.0, 128
        %671 = vxpose.xlu0.b32.cont [12/16] 0.0, 128
        %672 = vxpose.xlu0.b32.cont [13/16] 0.0, 128
        %673 = vxpose.xlu0.b32.cont [14/16] 0.0, 128
        %674 = vxpose.xlu0.b32.cont [15/16] 0.0, 128
        %675 = vxpose.xlu0.b32.end [16/16] 0.0, 128
        %v676 = vpop.trf.xlu0
        %v677 = vpop.trf.xlu0
        %v678 = vpop.trf.xlu0
        %v679 = vpop.trf.xlu0
        %v680 = vpop.trf.xlu0
        %v681 = vpop.trf.xlu0
        %v682 = vpop.trf.xlu0
        %v683 = vpop.trf.xlu0
        %v684 = vpop.trf.xlu0
        %v685 = vpop.trf.xlu0
        %v686 = vpop.trf.xlu0
        %v687 = vpop.trf.xlu0
        %v688 = vpop.trf.xlu0
        %v689 = vpop.trf.xlu0
        %v690 = vpop.trf.xlu0
        %v691 = vpop.trf.xlu0
        %692 = vxpose.xlu0.b32.start [1/16] %v620, 128
        %693 = vxpose.xlu0.b32.cont [2/16] %v624, 128
        %694 = vxpose.xlu0.b32.cont [3/16] 0.0, 128
        %695 = vxpose.xlu0.b32.cont [4/16] 0.0, 128
        %696 = vxpose.xlu0.b32.cont [5/16] 0.0, 128
        %697 = vxpose.xlu0.b32.cont [6/16] 0.0, 128
        %698 = vxpose.xlu0.b32.cont [7/16] 0.0, 128
        %699 = vxpose.xlu0.b32.cont [8/16] 0.0, 128
        %700 = vxpose.xlu0.b32.cont [9/16] 0.0, 128
        %701 = vxpose.xlu0.b32.cont [10/16] 0.0, 128
        %702 = vxpose.xlu0.b32.cont [11/16] 0.0, 128
        %703 = vxpose.xlu0.b32.cont [12/16] 0.0, 128
        %704 = vxpose.xlu0.b32.cont [13/16] 0.0, 128
        %705 = vxpose.xlu0.b32.cont [14/16] 0.0, 128
        %706 = vxpose.xlu0.b32.cont [15/16] 0.0, 128
        %707 = vxpose.xlu0.b32.end [16/16] 0.0, 128
        %v708 = vpop.trf.xlu0
        %v709 = vpop.trf.xlu0
        %v710 = vpop.trf.xlu0
        %v711 = vpop.trf.xlu0
        %v712 = vpop.trf.xlu0
        %v713 = vpop.trf.xlu0
        %v714 = vpop.trf.xlu0
        %v715 = vpop.trf.xlu0
        %v716 = vpop.trf.xlu0
        %v717 = vpop.trf.xlu0
        %v718 = vpop.trf.xlu0
        %v719 = vpop.trf.xlu0
        %v720 = vpop.trf.xlu0
        %v721 = vpop.trf.xlu0
        %v722 = vpop.trf.xlu0
        %v723 = vpop.trf.xlu0
        %724 = vxpose.xlu0.b32.start [1/16] %v621, 128
        %725 = vxpose.xlu0.b32.cont [2/16] %v625, 128
        %726 = vxpose.xlu0.b32.cont [3/16] 0.0, 128
        %727 = vxpose.xlu0.b32.cont [4/16] 0.0, 128
        %728 = vxpose.xlu0.b32.cont [5/16] 0.0, 128
        %729 = vxpose.xlu0.b32.cont [6/16] 0.0, 128
        %730 = vxpose.xlu0.b32.cont [7/16] 0.0, 128
        %731 = vxpose.xlu0.b32.cont [8/16] 0.0, 128
        %732 = vxpose.xlu0.b32.cont [9/16] 0.0, 128
        %733 = vxpose.xlu0.b32.cont [10/16] 0.0, 128
        %734 = vxpose.xlu0.b32.cont [11/16] 0.0, 128
        %735 = vxpose.xlu0.b32.cont [12/16] 0.0, 128
        %736 = vxpose.xlu0.b32.cont [13/16] 0.0, 128
        %737 = vxpose.xlu0.b32.cont [14/16] 0.0, 128
        %738 = vxpose.xlu0.b32.cont [15/16] 0.0, 128
        %739 = vxpose.xlu0.b32.end [16/16] 0.0, 128
        %v740 = vpop.trf.xlu0
        %v741 = vpop.trf.xlu0
        %v742 = vpop.trf.xlu0
        %v743 = vpop.trf.xlu0
        %v744 = vpop.trf.xlu0
        %v745 = vpop.trf.xlu0
        %v746 = vpop.trf.xlu0
        %v747 = vpop.trf.xlu0
        %v748 = vpop.trf.xlu0
        %v749 = vpop.trf.xlu0
        %v750 = vpop.trf.xlu0
        %v751 = vpop.trf.xlu0
        %v752 = vpop.trf.xlu0
        %v753 = vpop.trf.xlu0
        %v754 = vpop.trf.xlu0
        %v755 = vpop.trf.xlu0
        %vm756 = vcmask 72704
        %v758 = vsel %vm756, %v644, 0
        %v761 = vsel %vm756, %v645, 0
        %v764 = vsel %vm756, %v646, 0
        %v767 = vsel %vm756, %v647, 0
        %v770 = vsel %vm756, %v648, 0
        %v773 = vsel %vm756, %v649, 0
        %v776 = vsel %vm756, %v650, 0
        %v779 = vsel %vm756, %v651, 0
        %v782 = vsel %vm756, %v652, 0
        %v785 = vsel %vm756, %v653, 0
        %v788 = vsel %vm756, %v654, 0
        %v791 = vsel %vm756, %v655, 0
        %v794 = vsel %vm756, %v656, 0
        %v797 = vsel %vm756, %v657, 0
        %v800 = vsel %vm756, %v658, 0
        %v803 = vsel %vm756, %v659, 0
        %v806 = vsel %vm756, %v676, 0
        %v809 = vsel %vm756, %v677, 0
        %v812 = vsel %vm756, %v678, 0
        %v815 = vsel %vm756, %v679, 0
        %v818 = vsel %vm756, %v680, 0
        %v821 = vsel %vm756, %v681, 0
        %v824 = vsel %vm756, %v682, 0
        %v827 = vsel %vm756, %v683, 0
        %v830 = vsel %vm756, %v684, 0
        %v833 = vsel %vm756, %v685, 0
        %v836 = vsel %vm756, %v686, 0
        %v839 = vsel %vm756, %v687, 0
        %v842 = vsel %vm756, %v688, 0
        %v845 = vsel %vm756, %v689, 0
        %v848 = vsel %vm756, %v690, 0
        %v851 = vsel %vm756, %v691, 0
        %v854 = vsel %vm756, %v708, 0
        %v857 = vsel %vm756, %v709, 0
        %v860 = vsel %vm756, %v710, 0
        %v863 = vsel %vm756, %v711, 0
        %v866 = vsel %vm756, %v712, 0
        %v869 = vsel %vm756, %v713, 0
        %v872 = vsel %vm756, %v714, 0
        %v875 = vsel %vm756, %v715, 0
        %v878 = vsel %vm756, %v716, 0
        %v881 = vsel %vm756, %v717, 0
        %v884 = vsel %vm756, %v718, 0
        %v887 = vsel %vm756, %v719, 0
        %v890 = vsel %vm756, %v720, 0
        %v893 = vsel %vm756, %v721, 0
        %v896 = vsel %vm756, %v722, 0
        %v899 = vsel %vm756, %v723, 0
        %v902 = vsel %vm756, %v740, 0
        %v905 = vsel %vm756, %v741, 0
        %v908 = vsel %vm756, %v742, 0
        %v911 = vsel %vm756, %v743, 0
        %v914 = vsel %vm756, %v744, 0
        %v917 = vsel %vm756, %v745, 0
        %v920 = vsel %vm756, %v746, 0
        %v923 = vsel %vm756, %v747, 0
        %v926 = vsel %vm756, %v748, 0
        %v929 = vsel %vm756, %v749, 0
        %v932 = vsel %vm756, %v750, 0
        %v935 = vsel %vm756, %v751, 0
        %v938 = vsel %vm756, %v752, 0
        %v941 = vsel %vm756, %v753, 0
        %v944 = vsel %vm756, %v754, 0
        %v947 = vsel %vm756, %v755, 0
        %vm949 = vcmask 1040384
        %v951 = vsel %vm949, %v627, 0
        %953 = vmatprep.subr.mxu0 0.0
        %954 = vmatpush1.msra.mxu0 %v626
        %955 = vmatprep.subr.mxu0 0.0
        %956 = vmatpush1.msra.mxu0 %v951
        %957 = vmatprep.subr.mxu0 0.0
        %958 = vmatpush1.msra.mxu0 0.0
        %959 = vmatprep.subr.mxu0 0.0
        %960 = vmatpush1.msra.mxu0 0.0
        %961 = vmatprep.subr.mxu0 0.0
        %962 = vmatpush1.msra.mxu0 0.0
        %963 = vmatprep.subr.mxu0 0.0
        %964 = vmatpush1.msra.mxu0 0.0
        %965 = vmatprep.subr.mxu0 0.0
        %966 = vmatpush1.msra.mxu0 0.0
        %967 = vmatprep.subr.mxu0 0.0
        %968 = vmatpush1.msra.mxu0 0.0
        %969 = vmatprep.subr.mxu0 0.0
        %970 = vmatpush1.msra.mxu0 0.0
        %971 = vmatprep.subr.mxu0 0.0
        %972 = vmatpush1.msra.mxu0 0.0
        %973 = vmatprep.subr.mxu0 0.0
        %974 = vmatpush1.msra.mxu0 0.0
        %975 = vmatprep.subr.mxu0 0.0
        %976 = vmatpush1.msra.mxu0 0.0
        %977 = vmatprep.subr.mxu0 0.0
        %978 = vmatpush1.msra.mxu0 0.0
        %979 = vmatprep.subr.mxu0 0.0
        %980 = vmatpush1.msra.mxu0 0.0
        %981 = vmatprep.subr.mxu0 0.0
        %982 = vmatpush1.msra.mxu0 0.0
        %983 = vmatprep.subr.mxu0 0.0
        %984 = vmatpush1.msra.mxu0 0.0
        %985 = vmatprep.subr.mxu0 0.0
        %986 = vmatpush1.msra.mxu0 0.0
        %987 = vmatprep.subr.mxu0 0.0
        %988 = vmatpush1.msra.mxu0 0.0
        %989 = vmatprep.subr.mxu0 0.0
        %990 = vmatpush1.msra.mxu0 0.0
        %991 = vmatprep.subr.mxu0 0.0
        %992 = vmatpush1.msra.mxu0 0.0
        %993 = vmatprep.subr.mxu0 0.0
        %994 = vmatpush1.msra.mxu0 0.0
        %995 = vmatprep.subr.mxu0 0.0
        %996 = vmatpush1.msra.mxu0 0.0
        %997 = vmatprep.subr.mxu0 0.0
        %998 = vmatpush1.msra.mxu0 0.0
        %999 = vmatprep.subr.mxu0 0.0
        %1000 = vmatpush1.msra.mxu0 0.0
        %1001 = vmatprep.subr.mxu0 0.0
        %1002 = vmatpush1.msra.mxu0 0.0
        %1003 = vmatprep.subr.mxu0 0.0
        %1004 = vmatpush1.msra.mxu0 0.0
        %1005 = vmatprep.subr.mxu0 0.0
        %1006 = vmatpush1.msra.mxu0 0.0
        %1007 = vmatprep.subr.mxu0 0.0
        %1008 = vmatpush1.msra.mxu0 0.0
        %1009 = vmatprep.subr.mxu0 0.0
        %1010 = vmatpush1.msra.mxu0 0.0
        %1011 = vmatprep.subr.mxu0 0.0
        %1012 = vmatpush1.msra.mxu0 0.0
        %1013 = vmatprep.subr.mxu0 0.0
        %1014 = vmatpush1.msra.mxu0 0.0
        %1015 = vmatprep.subr.mxu0 0.0
        %1016 = vmatpush1.msra.mxu0 0.0
        %1017 = vmatprep.mubr.f32.mxu0 0.0
        %1018 = vmatmul.mubr.f32.gmra.mrb[0].mxu0 %v758
        %v1019 = vpop.f32.mrb[0].mxu0
        %v1020 = vadd.f32 0.0, %v1019
        %v1021 = vpop.f32.mrb[0].mxu0
        %1022 = vmatprep.mubr.f32.mxu0 0.0
        %1023 = vmatmul.mubr.f32.gmra.mrb[0].mxu0 %v761
        %v1024 = vpop.f32.mrb[0].mxu0
        %v1025 = vadd.f32 0.0, %v1024
        %v1026 = vpop.f32.mrb[0].mxu0
        %1027 = vmatprep.mubr.f32.mxu0 0.0
        %1028 = vmatmul.mubr.f32.gmra.mrb[0].mxu0 %v764
        %v1029 = vpop.f32.mrb[0].mxu0
        %v1030 = vadd.f32 0.0, %v1029
        %v1031 = vpop.f32.mrb[0].mxu0
        %1032 = vmatprep.mubr.f32.mxu0 0.0
        %1033 = vmatmul.mubr.f32.gmra.mrb[0].mxu0 %v767
        %v1034 = vpop.f32.mrb[0].mxu0
        %v1035 = vadd.f32 0.0, %v1034
        %v1036 = vpop.f32.mrb[0].mxu0
        %1037 = vmatprep.mubr.f32.mxu0 0.0
        %1038 = vmatmul.mubr.f32.gmra.mrb[0].mxu0 %v770
        %v1039 = vpop.f32.mrb[0].mxu0
        %v1040 = vadd.f32 0.0, %v1039
        %v1041 = vpop.f32.mrb[0].mxu0
        %1042 = vmatprep.mubr.f32.mxu0 0.0
        %1043 = vmatmul.mubr.f32.gmra.mrb[0].mxu0 %v773
        %v1044 = vpop.f32.mrb[0].mxu0
        %v1045 = vadd.f32 0.0, %v1044
        %v1046 = vpop.f32.mrb[0].mxu0
        %1047 = vmatprep.mubr.f32.mxu0 0.0
        %1048 = vmatmul.mubr.f32.gmra.mrb[0].mxu0 %v776
        %v1049 = vpop.f32.mrb[0].mxu0
        %v1050 = vadd.f32 0.0, %v1049
        %v1051 = vpop.f32.mrb[0].mxu0
        %1052 = vmatprep.mubr.f32.mxu0 0.0
        %1053 = vmatmul.mubr.f32.gmra.mrb[0].mxu0 %v779
        %v1054 = vpop.f32.mrb[0].mxu0
        %v1055 = vadd.f32 0.0, %v1054
        %v1056 = vpop.f32.mrb[0].mxu0
        %1057 = vmatprep.mubr.f32.mxu0 0.0
        %1058 = vmatmul.mubr.f32.gmra.mrb[0].mxu0 %v782
        %v1059 = vpop.f32.mrb[0].mxu0
        %v1060 = vadd.f32 0.0, %v1059
        %v1061 = vpop.f32.mrb[0].mxu0
        %1062 = vmatprep.mubr.f32.mxu0 0.0
        %1063 = vmatmul.mubr.f32.gmra.mrb[0].mxu0 %v785
        %v1064 = vpop.f32.mrb[0].mxu0
        %v1065 = vadd.f32 0.0, %v1064
        %v1066 = vpop.f32.mrb[0].mxu0
        %1067 = vmatprep.mubr.f32.mxu0 0.0
        %1068 = vmatmul.mubr.f32.gmra.mrb[0].mxu0 %v788
        %v1069 = vpop.f32.mrb[0].mxu0
        %v1070 = vadd.f32 0.0, %v1069
        %v1071 = vpop.f32.mrb[0].mxu0
        %1072 = vmatprep.mubr.f32.mxu0 0.0
        %1073 = vmatmul.mubr.f32.gmra.mrb[0].mxu0 %v791
        %v1074 = vpop.f32.mrb[0].mxu0
        %v1075 = vadd.f32 0.0, %v1074
        %v1076 = vpop.f32.mrb[0].mxu0
        %1077 = vmatprep.mubr.f32.mxu0 0.0
        %1078 = vmatmul.mubr.f32.gmra.mrb[0].mxu0 %v794
        %v1079 = vpop.f32.mrb[0].mxu0
        %v1080 = vadd.f32 0.0, %v1079
        %v1081 = vpop.f32.mrb[0].mxu0
        %1082 = vmatprep.mubr.f32.mxu0 0.0
        %1083 = vmatmul.mubr.f32.gmra.mrb[0].mxu0 %v797
        %v1084 = vpop.f32.mrb[0].mxu0
        %v1085 = vadd.f32 0.0, %v1084
        %v1086 = vpop.f32.mrb[0].mxu0
        %1087 = vmatprep.mubr.f32.mxu0 0.0
        %1088 = vmatmul.mubr.f32.gmra.mrb[0].mxu0 %v800
        %v1089 = vpop.f32.mrb[0].mxu0
        %v1090 = vadd.f32 0.0, %v1089
        %v1091 = vpop.f32.mrb[0].mxu0
        %1092 = vmatprep.mubr.f32.mxu0 0.0
        %1093 = vmatmul.mubr.f32.gmra.mrb[0].mxu0 %v803
        %v1094 = vpop.f32.mrb[0].mxu0
        %v1095 = vadd.f32 0.0, %v1094
        %v1096 = vpop.f32.mrb[0].mxu0
        %1097 = vmatprep.mubr.f32.mxu0 0.0
        %1098 = vmatmul.mubr.f32.gmra.mrb[0].mxu0 %v806
        %v1099 = vpop.f32.mrb[0].mxu0
        %v1100 = vadd.f32 0.0, %v1099
        %v1101 = vpop.f32.mrb[0].mxu0
        %1102 = vmatprep.mubr.f32.mxu0 0.0
        %1103 = vmatmul.mubr.f32.gmra.mrb[0].mxu0 %v809
        %v1104 = vpop.f32.mrb[0].mxu0
        %v1105 = vadd.f32 0.0, %v1104
        %v1106 = vpop.f32.mrb[0].mxu0
        %1107 = vmatprep.mubr.f32.mxu0 0.0
        %1108 = vmatmul.mubr.f32.gmra.mrb[0].mxu0 %v812
        %v1109 = vpop.f32.mrb[0].mxu0
        %v1110 = vadd.f32 0.0, %v1109
        %v1111 = vpop.f32.mrb[0].mxu0
        %1112 = vmatprep.mubr.f32.mxu0 0.0
        %1113 = vmatmul.mubr.f32.gmra.mrb[0].mxu0 %v815
        %v1114 = vpop.f32.mrb[0].mxu0
        %v1115 = vadd.f32 0.0, %v1114
        %v1116 = vpop.f32.mrb[0].mxu0
        %1117 = vmatprep.mubr.f32.mxu0 0.0
        %1118 = vmatmul.mubr.f32.gmra.mrb[0].mxu0 %v818
        %v1119 = vpop.f32.mrb[0].mxu0
        %v1120 = vadd.f32 0.0, %v1119
        %v1121 = vpop.f32.mrb[0].mxu0
        %1122 = vmatprep.mubr.f32.mxu0 0.0
        %1123 = vmatmul.mubr.f32.gmra.mrb[0].mxu0 %v821
        %v1124 = vpop.f32.mrb[0].mxu0
        %v1125 = vadd.f32 0.0, %v1124
        %v1126 = vpop.f32.mrb[0].mxu0
        %1127 = vmatprep.mubr.f32.mxu0 0.0
        %1128 = vmatmul.mubr.f32.gmra.mrb[0].mxu0 %v824
        %v1129 = vpop.f32.mrb[0].mxu0
        %v1130 = vadd.f32 0.0, %v1129
        %v1131 = vpop.f32.mrb[0].mxu0
        %1132 = vmatprep.mubr.f32.mxu0 0.0
        %1133 = vmatmul.mubr.f32.gmra.mrb[0].mxu0 %v827
        %v1134 = vpop.f32.mrb[0].mxu0
        %v1135 = vadd.f32 0.0, %v1134
        %v1136 = vpop.f32.mrb[0].mxu0
        %1137 = vmatprep.mubr.f32.mxu0 0.0
        %1138 = vmatmul.mubr.f32.gmra.mrb[0].mxu0 %v830
        %v1139 = vpop.f32.mrb[0].mxu0
        %v1140 = vadd.f32 0.0, %v1139
        %v1141 = vpop.f32.mrb[0].mxu0
        %1142 = vmatprep.mubr.f32.mxu0 0.0
        %1143 = vmatmul.mubr.f32.gmra.mrb[0].mxu0 %v833
        %v1144 = vpop.f32.mrb[0].mxu0
        %v1145 = vadd.f32 0.0, %v1144
        %v1146 = vpop.f32.mrb[0].mxu0
        %1147 = vmatprep.mubr.f32.mxu0 0.0
        %1148 = vmatmul.mubr.f32.gmra.mrb[0].mxu0 %v836
        %v1149 = vpop.f32.mrb[0].mxu0
        %v1150 = vadd.f32 0.0, %v1149
        %v1151 = vpop.f32.mrb[0].mxu0
        %1152 = vmatprep.mubr.f32.mxu0 0.0
        %1153 = vmatmul.mubr.f32.gmra.mrb[0].mxu0 %v839
        %v1154 = vpop.f32.mrb[0].mxu0
        %v1155 = vadd.f32 0.0, %v1154
        %v1156 = vpop.f32.mrb[0].mxu0
        %1157 = vmatprep.mubr.f32.mxu0 0.0
        %1158 = vmatmul.mubr.f32.gmra.mrb[0].mxu0 %v842
        %v1159 = vpop.f32.mrb[0].mxu0
        %v1160 = vadd.f32 0.0, %v1159
        %v1161 = vpop.f32.mrb[0].mxu0
        %1162 = vmatprep.mubr.f32.mxu0 0.0
        %1163 = vmatmul.mubr.f32.gmra.mrb[0].mxu0 %v845
        %v1164 = vpop.f32.mrb[0].mxu0
        %v1165 = vadd.f32 0.0, %v1164
        %v1166 = vpop.f32.mrb[0].mxu0
        %1167 = vmatprep.mubr.f32.mxu0 0.0
        %1168 = vmatmul.mubr.f32.gmra.mrb[0].mxu0 %v848
        %v1169 = vpop.f32.mrb[0].mxu0
        %v1170 = vadd.f32 0.0, %v1169
        %v1171 = vpop.f32.mrb[0].mxu0
        %1172 = vmatprep.mubr.f32.mxu0 0.0
        %1173 = vmatmul.mubr.f32.gmra.mrb[0].mxu0 %v851
        %v1174 = vpop.f32.mrb[0].mxu0
        %v1175 = vadd.f32 0.0, %v1174
        %v1176 = vpop.f32.mrb[0].mxu0
        %1177 = vmatprep.mubr.f32.mxu0 0.0
        %1178 = vmatmul.mubr.f32.gmra.mrb[0].mxu0 %v854
        %v1179 = vpop.f32.mrb[0].mxu0
        %v1180 = vadd.f32 0.0, %v1179
        %v1181 = vpop.f32.mrb[0].mxu0
        %1182 = vmatprep.mubr.f32.mxu0 0.0
        %1183 = vmatmul.mubr.f32.gmra.mrb[0].mxu0 %v857
        %v1184 = vpop.f32.mrb[0].mxu0
        %v1185 = vadd.f32 0.0, %v1184
        %v1186 = vpop.f32.mrb[0].mxu0
        %1187 = vmatprep.mubr.f32.mxu0 0.0
        %1188 = vmatmul.mubr.f32.gmra.mrb[0].mxu0 %v860
        %v1189 = vpop.f32.mrb[0].mxu0
        %v1190 = vadd.f32 0.0, %v1189
        %v1191 = vpop.f32.mrb[0].mxu0
        %1192 = vmatprep.mubr.f32.mxu0 0.0
        %1193 = vmatmul.mubr.f32.gmra.mrb[0].mxu0 %v863
        %v1194 = vpop.f32.mrb[0].mxu0
        %v1195 = vadd.f32 0.0, %v1194
        %v1196 = vpop.f32.mrb[0].mxu0
        %1197 = vmatprep.mubr.f32.mxu0 0.0
        %1198 = vmatmul.mubr.f32.gmra.mrb[0].mxu0 %v866
        %v1199 = vpop.f32.mrb[0].mxu0
        %v1200 = vadd.f32 0.0, %v1199
        %v1201 = vpop.f32.mrb[0].mxu0
        %1202 = vmatprep.mubr.f32.mxu0 0.0
        %1203 = vmatmul.mubr.f32.gmra.mrb[0].mxu0 %v869
        %v1204 = vpop.f32.mrb[0].mxu0
        %v1205 = vadd.f32 0.0, %v1204
        %v1206 = vpop.f32.mrb[0].mxu0
        %1207 = vmatprep.mubr.f32.mxu0 0.0
        %1208 = vmatmul.mubr.f32.gmra.mrb[0].mxu0 %v872
        %v1209 = vpop.f32.mrb[0].mxu0
        %v1210 = vadd.f32 0.0, %v1209
        %v1211 = vpop.f32.mrb[0].mxu0
        %1212 = vmatprep.mubr.f32.mxu0 0.0
        %1213 = vmatmul.mubr.f32.gmra.mrb[0].mxu0 %v875
        %v1214 = vpop.f32.mrb[0].mxu0
        %v1215 = vadd.f32 0.0, %v1214
        %v1216 = vpop.f32.mrb[0].mxu0
        %1217 = vmatprep.mubr.f32.mxu0 0.0
        %1218 = vmatmul.mubr.f32.gmra.mrb[0].mxu0 %v878
        %v1219 = vpop.f32.mrb[0].mxu0
        %v1220 = vadd.f32 0.0, %v1219
        %v1221 = vpop.f32.mrb[0].mxu0
        %1222 = vmatprep.mubr.f32.mxu0 0.0
        %1223 = vmatmul.mubr.f32.gmra.mrb[0].mxu0 %v881
        %v1224 = vpop.f32.mrb[0].mxu0
        %v1225 = vadd.f32 0.0, %v1224
        %v1226 = vpop.f32.mrb[0].mxu0
        %1227 = vmatprep.mubr.f32.mxu0 0.0
        %1228 = vmatmul.mubr.f32.gmra.mrb[0].mxu0 %v884
        %v1229 = vpop.f32.mrb[0].mxu0
        %v1230 = vadd.f32 0.0, %v1229
        %v1231 = vpop.f32.mrb[0].mxu0
        %1232 = vmatprep.mubr.f32.mxu0 0.0
        %1233 = vmatmul.mubr.f32.gmra.mrb[0].mxu0 %v887
        %v1234 = vpop.f32.mrb[0].mxu0
        %v1235 = vadd.f32 0.0, %v1234
        %v1236 = vpop.f32.mrb[0].mxu0
        %1237 = vmatprep.mubr.f32.mxu0 0.0
        %1238 = vmatmul.mubr.f32.gmra.mrb[0].mxu0 %v890
        %v1239 = vpop.f32.mrb[0].mxu0
        %v1240 = vadd.f32 0.0, %v1239
        %v1241 = vpop.f32.mrb[0].mxu0
        %1242 = vmatprep.mubr.f32.mxu0 0.0
        %1243 = vmatmul.mubr.f32.gmra.mrb[0].mxu0 %v893
        %v1244 = vpop.f32.mrb[0].mxu0
        %v1245 = vadd.f32 0.0, %v1244
        %v1246 = vpop.f32.mrb[0].mxu0
        %1247 = vmatprep.mubr.f32.mxu0 0.0
        %1248 = vmatmul.mubr.f32.gmra.mrb[0].mxu0 %v896
        %v1249 = vpop.f32.mrb[0].mxu0
        %v1250 = vadd.f32 0.0, %v1249
        %v1251 = vpop.f32.mrb[0].mxu0
        %1252 = vmatprep.mubr.f32.mxu0 0.0
        %1253 = vmatmul.mubr.f32.gmra.mrb[0].mxu0 %v899
        %v1254 = vpop.f32.mrb[0].mxu0
        %v1255 = vadd.f32 0.0, %v1254
        %v1256 = vpop.f32.mrb[0].mxu0
        %1257 = vmatprep.mubr.f32.mxu0 0.0
        %1258 = vmatmul.mubr.f32.gmra.mrb[0].mxu0 %v902
        %v1259 = vpop.f32.mrb[0].mxu0
        %v1260 = vadd.f32 0.0, %v1259
        %v1261 = vpop.f32.mrb[0].mxu0
        %1262 = vmatprep.mubr.f32.mxu0 0.0
        %1263 = vmatmul.mubr.f32.gmra.mrb[0].mxu0 %v905
        %v1264 = vpop.f32.mrb[0].mxu0
        %v1265 = vadd.f32 0.0, %v1264
        %v1266 = vpop.f32.mrb[0].mxu0
        %1267 = vmatprep.mubr.f32.mxu0 0.0
        %1268 = vmatmul.mubr.f32.gmra.mrb[0].mxu0 %v908
        %v1269 = vpop.f32.mrb[0].mxu0
        %v1270 = vadd.f32 0.0, %v1269
        %v1271 = vpop.f32.mrb[0].mxu0
        %1272 = vmatprep.mubr.f32.mxu0 0.0
        %1273 = vmatmul.mubr.f32.gmra.mrb[0].mxu0 %v911
        %v1274 = vpop.f32.mrb[0].mxu0
        %v1275 = vadd.f32 0.0, %v1274
        %v1276 = vpop.f32.mrb[0].mxu0
        %1277 = vmatprep.mubr.f32.mxu0 0.0
        %1278 = vmatmul.mubr.f32.gmra.mrb[0].mxu0 %v914
        %v1279 = vpop.f32.mrb[0].mxu0
        %v1280 = vadd.f32 0.0, %v1279
        %v1281 = vpop.f32.mrb[0].mxu0
        %1282 = vmatprep.mubr.f32.mxu0 0.0
        %1283 = vmatmul.mubr.f32.gmra.mrb[0].mxu0 %v917
        %v1284 = vpop.f32.mrb[0].mxu0
        %v1285 = vadd.f32 0.0, %v1284
        %v1286 = vpop.f32.mrb[0].mxu0
        %1287 = vmatprep.mubr.f32.mxu0 0.0
        %1288 = vmatmul.mubr.f32.gmra.mrb[0].mxu0 %v920
        %v1289 = vpop.f32.mrb[0].mxu0
        %v1290 = vadd.f32 0.0, %v1289
        %v1291 = vpop.f32.mrb[0].mxu0
        %1292 = vmatprep.mubr.f32.mxu0 0.0
        %1293 = vmatmul.mubr.f32.gmra.mrb[0].mxu0 %v923
        %v1294 = vpop.f32.mrb[0].mxu0
        %v1295 = vadd.f32 0.0, %v1294
        %v1296 = vpop.f32.mrb[0].mxu0
        %1297 = vmatprep.mubr.f32.mxu0 0.0
        %1298 = vmatmul.mubr.f32.gmra.mrb[0].mxu0 %v926
        %v1299 = vpop.f32.mrb[0].mxu0
        %v1300 = vadd.f32 0.0, %v1299
        %v1301 = vpop.f32.mrb[0].mxu0
        %1302 = vmatprep.mubr.f32.mxu0 0.0
        %1303 = vmatmul.mubr.f32.gmra.mrb[0].mxu0 %v929
        %v1304 = vpop.f32.mrb[0].mxu0
        %v1305 = vadd.f32 0.0, %v1304
        %v1306 = vpop.f32.mrb[0].mxu0
        %1307 = vmatprep.mubr.f32.mxu0 0.0
        %1308 = vmatmul.mubr.f32.gmra.mrb[0].mxu0 %v932
        %v1309 = vpop.f32.mrb[0].mxu0
        %v1310 = vadd.f32 0.0, %v1309
        %v1311 = vpop.f32.mrb[0].mxu0
        %1312 = vmatprep.mubr.f32.mxu0 0.0
        %1313 = vmatmul.mubr.f32.gmra.mrb[0].mxu0 %v935
        %v1314 = vpop.f32.mrb[0].mxu0
        %v1315 = vadd.f32 0.0, %v1314
        %v1316 = vpop.f32.mrb[0].mxu0
        %1317 = vmatprep.mubr.f32.mxu0 0.0
        %1318 = vmatmul.mubr.f32.gmra.mrb[0].mxu0 %v938
        %v1319 = vpop.f32.mrb[0].mxu0
        %v1320 = vadd.f32 0.0, %v1319
        %v1321 = vpop.f32.mrb[0].mxu0
        %1322 = vmatprep.mubr.f32.mxu0 0.0
        %1323 = vmatmul.mubr.f32.gmra.mrb[0].mxu0 %v941
        %v1324 = vpop.f32.mrb[0].mxu0
        %v1325 = vadd.f32 0.0, %v1324
        %v1326 = vpop.f32.mrb[0].mxu0
        %1327 = vmatprep.mubr.f32.mxu0 0.0
        %1328 = vmatmul.mubr.f32.gmra.mrb[0].mxu0 %v944
        %v1329 = vpop.f32.mrb[0].mxu0
        %v1330 = vadd.f32 0.0, %v1329
        %v1331 = vpop.f32.mrb[0].mxu0
        %1332 = vmatprep.mubr.f32.mxu0 0.0
        %1333 = vmatmul.mubr.f32.gmra.mrb[0].mxu0 %v947
        %v1334 = vpop.f32.mrb[0].mxu0
        %v1335 = vadd.f32 0.0, %v1334
        %v1336 = vpop.f32.mrb[0].mxu0
        %1337 = vdwg.mxu0
        %1338 = vxpose.xlu0.b32.start [1/16] %v536, 128
        %1339 = vxpose.xlu0.b32.cont [2/16] %v540, 128
        %1340 = vxpose.xlu0.b32.cont [3/16] %v544, 128
        %1341 = vxpose.xlu0.b32.cont [4/16] %v548, 128
        %1342 = vxpose.xlu0.b32.cont [5/16] %v552, 128
        %1343 = vxpose.xlu0.b32.cont [6/16] %v556, 128
        %1344 = vxpose.xlu0.b32.cont [7/16] 0.0, 128
        %1345 = vxpose.xlu0.b32.cont [8/16] 0.0, 128
        %1346 = vxpose.xlu0.b32.cont [9/16] 0.0, 128
        %1347 = vxpose.xlu0.b32.cont [10/16] 0.0, 128
        %1348 = vxpose.xlu0.b32.cont [11/16] 0.0, 128
        %1349 = vxpose.xlu0.b32.cont [12/16] 0.0, 128
        %1350 = vxpose.xlu0.b32.cont [13/16] 0.0, 128
        %1351 = vxpose.xlu0.b32.cont [14/16] 0.0, 128
        %1352 = vxpose.xlu0.b32.cont [15/16] 0.0, 128
        %1353 = vxpose.xlu0.b32.end [16/16] 0.0, 128
        %v1354 = vpop.trf.xlu0
        %v1355 = vpop.trf.xlu0
        %v1356 = vpop.trf.xlu0
        %v1357 = vpop.trf.xlu0
        %v1358 = vpop.trf.xlu0
        %v1359 = vpop.trf.xlu0
        %v1360 = vpop.trf.xlu0
        %v1361 = vpop.trf.xlu0
        %v1362 = vpop.trf.xlu0
        %v1363 = vpop.trf.xlu0
        %v1364 = vpop.trf.xlu0
        %v1365 = vpop.trf.xlu0
        %v1366 = vpop.trf.xlu0
        %v1367 = vpop.trf.xlu0
        %v1368 = vpop.trf.xlu0
        %v1369 = vpop.trf.xlu0
        %1370 = vxpose.xlu0.b32.start [1/16] %v537, 128
        %1371 = vxpose.xlu0.b32.cont [2/16] %v541, 128
        %1372 = vxpose.xlu0.b32.cont [3/16] %v545, 128
        %1373 = vxpose.xlu0.b32.cont [4/16] %v549, 128
        %1374 = vxpose.xlu0.b32.cont [5/16] %v553, 128
        %1375 = vxpose.xlu0.b32.cont [6/16] %v557, 128
        %1376 = vxpose.xlu0.b32.cont [7/16] 0.0, 128
        %1377 = vxpose.xlu0.b32.cont [8/16] 0.0, 128
        %1378 = vxpose.xlu0.b32.cont [9/16] 0.0, 128
        %1379 = vxpose.xlu0.b32.cont [10/16] 0.0, 128
        %1380 = vxpose.xlu0.b32.cont [11/16] 0.0, 128
        %1381 = vxpose.xlu0.b32.cont [12/16] 0.0, 128
        %1382 = vxpose.xlu0.b32.cont [13/16] 0.0, 128
        %1383 = vxpose.xlu0.b32.cont [14/16] 0.0, 128
        %1384 = vxpose.xlu0.b32.cont [15/16] 0.0, 128
        %1385 = vxpose.xlu0.b32.end [16/16] 0.0, 128
        %v1386 = vpop.trf.xlu0
        %v1387 = vpop.trf.xlu0
        %v1388 = vpop.trf.xlu0
        %v1389 = vpop.trf.xlu0
        %v1390 = vpop.trf.xlu0
        %v1391 = vpop.trf.xlu0
        %v1392 = vpop.trf.xlu0
        %v1393 = vpop.trf.xlu0
        %v1394 = vpop.trf.xlu0
        %v1395 = vpop.trf.xlu0
        %v1396 = vpop.trf.xlu0
        %v1397 = vpop.trf.xlu0
        %v1398 = vpop.trf.xlu0
        %v1399 = vpop.trf.xlu0
        %v1400 = vpop.trf.xlu0
        %v1401 = vpop.trf.xlu0
        %1402 = vxpose.xlu0.b32.start [1/16] %v538, 128
        %1403 = vxpose.xlu0.b32.cont [2/16] %v542, 128
        %1404 = vxpose.xlu0.b32.cont [3/16] %v546, 128
        %1405 = vxpose.xlu0.b32.cont [4/16] %v550, 128
        %1406 = vxpose.xlu0.b32.cont [5/16] %v554, 128
        %1407 = vxpose.xlu0.b32.cont [6/16] %v558, 128
        %1408 = vxpose.xlu0.b32.cont [7/16] 0.0, 128
        %1409 = vxpose.xlu0.b32.cont [8/16] 0.0, 128
        %1410 = vxpose.xlu0.b32.cont [9/16] 0.0, 128
        %1411 = vxpose.xlu0.b32.cont [10/16] 0.0, 128
        %1412 = vxpose.xlu0.b32.cont [11/16] 0.0, 128
        %1413 = vxpose.xlu0.b32.cont [12/16] 0.0, 128
        %1414 = vxpose.xlu0.b32.cont [13/16] 0.0, 128
        %1415 = vxpose.xlu0.b32.cont [14/16] 0.0, 128
        %1416 = vxpose.xlu0.b32.cont [15/16] 0.0, 128
        %1417 = vxpose.xlu0.b32.end [16/16] 0.0, 128
        %v1418 = vpop.trf.xlu0
        %v1419 = vpop.trf.xlu0
        %v1420 = vpop.trf.xlu0
        %v1421 = vpop.trf.xlu0
        %v1422 = vpop.trf.xlu0
        %v1423 = vpop.trf.xlu0
        %v1424 = vpop.trf.xlu0
        %v1425 = vpop.trf.xlu0
        %v1426 = vpop.trf.xlu0
        %v1427 = vpop.trf.xlu0
        %v1428 = vpop.trf.xlu0
        %v1429 = vpop.trf.xlu0
        %v1430 = vpop.trf.xlu0
        %v1431 = vpop.trf.xlu0
        %v1432 = vpop.trf.xlu0
        %v1433 = vpop.trf.xlu0
        %1434 = vxpose.xlu0.b32.start [1/16] %v539, 128
        %1435 = vxpose.xlu0.b32.cont [2/16] %v543, 128
        %1436 = vxpose.xlu0.b32.cont [3/16] %v547, 128
        %1437 = vxpose.xlu0.b32.cont [4/16] %v551, 128
        %1438 = vxpose.xlu0.b32.cont [5/16] %v555, 128
        %1439 = vxpose.xlu0.b32.cont [6/16] %v559, 128
        %1440 = vxpose.xlu0.b32.cont [7/16] 0.0, 128
        %1441 = vxpose.xlu0.b32.cont [8/16] 0.0, 128
        %1442 = vxpose.xlu0.b32.cont [9/16] 0.0, 128
        %1443 = vxpose.xlu0.b32.cont [10/16] 0.0, 128
        %1444 = vxpose.xlu0.b32.cont [11/16] 0.0, 128
        %1445 = vxpose.xlu0.b32.cont [12/16] 0.0, 128
        %1446 = vxpose.xlu0.b32.cont [13/16] 0.0, 128
        %1447 = vxpose.xlu0.b32.cont [14/16] 0.0, 128
        %1448 = vxpose.xlu0.b32.cont [15/16] 0.0, 128
        %1449 = vxpose.xlu0.b32.end [16/16] 0.0, 128
        %v1450 = vpop.trf.xlu0
        %v1451 = vpop.trf.xlu0
        %v1452 = vpop.trf.xlu0
        %v1453 = vpop.trf.xlu0
        %v1454 = vpop.trf.xlu0
        %v1455 = vpop.trf.xlu0
        %v1456 = vpop.trf.xlu0
        %v1457 = vpop.trf.xlu0
        %v1458 = vpop.trf.xlu0
        %v1459 = vpop.trf.xlu0
        %v1460 = vpop.trf.xlu0
        %v1461 = vpop.trf.xlu0
        %v1462 = vpop.trf.xlu0
        %v1463 = vpop.trf.xlu0
        %v1464 = vpop.trf.xlu0
        %v1465 = vpop.trf.xlu0
        %vm1466 = vcmask 392192
        %v1468 = vsel %vm1466, %v1354, 0
        %v1471 = vsel %vm1466, %v1355, 0
        %v1474 = vsel %vm1466, %v1356, 0
        %v1477 = vsel %vm1466, %v1357, 0
        %v1480 = vsel %vm1466, %v1358, 0
        %v1483 = vsel %vm1466, %v1359, 0
        %v1486 = vsel %vm1466, %v1360, 0
        %v1489 = vsel %vm1466, %v1361, 0
        %v1492 = vsel %vm1466, %v1362, 0
        %v1495 = vsel %vm1466, %v1363, 0
        %v1498 = vsel %vm1466, %v1364, 0
        %v1501 = vsel %vm1466, %v1365, 0
        %v1504 = vsel %vm1466, %v1366, 0
        %v1507 = vsel %vm1466, %v1367, 0
        %v1510 = vsel %vm1466, %v1368, 0
        %v1513 = vsel %vm1466, %v1369, 0
        %v1516 = vsel %vm1466, %v1386, 0
        %v1519 = vsel %vm1466, %v1387, 0
        %v1522 = vsel %vm1466, %v1388, 0
        %v1525 = vsel %vm1466, %v1389, 0
        %v1528 = vsel %vm1466, %v1390, 0
        %v1531 = vsel %vm1466, %v1391, 0
        %v1534 = vsel %vm1466, %v1392, 0
        %v1537 = vsel %vm1466, %v1393, 0
        %v1540 = vsel %vm1466, %v1394, 0
        %v1543 = vsel %vm1466, %v1395, 0
        %v1546 = vsel %vm1466, %v1396, 0
        %v1549 = vsel %vm1466, %v1397, 0
        %v1552 = vsel %vm1466, %v1398, 0
        %v1555 = vsel %vm1466, %v1399, 0
        %v1558 = vsel %vm1466, %v1400, 0
        %v1561 = vsel %vm1466, %v1401, 0
        %v1564 = vsel %vm1466, %v1418, 0
        %v1567 = vsel %vm1466, %v1419, 0
        %v1570 = vsel %vm1466, %v1420, 0
        %v1573 = vsel %vm1466, %v1421, 0
        %v1576 = vsel %vm1466, %v1422, 0
        %v1579 = vsel %vm1466, %v1423, 0
        %v1582 = vsel %vm1466, %v1424, 0
        %v1585 = vsel %vm1466, %v1425, 0
        %v1588 = vsel %vm1466, %v1426, 0
        %v1591 = vsel %vm1466, %v1427, 0
        %v1594 = vsel %vm1466, %v1428, 0
        %v1597 = vsel %vm1466, %v1429, 0
        %v1600 = vsel %vm1466, %v1430, 0
        %v1603 = vsel %vm1466, %v1431, 0
        %v1606 = vsel %vm1466, %v1432, 0
        %v1609 = vsel %vm1466, %v1433, 0
        %v1612 = vsel %vm1466, %v1450, 0
        %v1615 = vsel %vm1466, %v1451, 0
        %v1618 = vsel %vm1466, %v1452, 0
        %v1621 = vsel %vm1466, %v1453, 0
        %v1624 = vsel %vm1466, %v1454, 0
        %v1627 = vsel %vm1466, %v1455, 0
        %v1630 = vsel %vm1466, %v1456, 0
        %v1633 = vsel %vm1466, %v1457, 0
        %v1636 = vsel %vm1466, %v1458, 0
        %v1639 = vsel %vm1466, %v1459, 0
        %v1642 = vsel %vm1466, %v1460, 0
        %v1645 = vsel %vm1466, %v1461, 0
        %v1648 = vsel %vm1466, %v1462, 0
        %v1651 = vsel %vm1466, %v1463, 0
        %v1654 = vsel %vm1466, %v1464, 0
        %v1657 = vsel %vm1466, %v1465, 0
        %1659 = vmatprep.subr.mxu0 0.0
        %1660 = vmatpush1.msra.mxu0 %v612
        %1661 = vmatprep.subr.mxu0 0.0
        %1662 = vmatpush1.msra.mxu0 %v613
        %1663 = vmatprep.subr.mxu0 0.0
        %1664 = vmatpush1.msra.mxu0 %v614
        %1665 = vmatprep.subr.mxu0 0.0
        %1666 = vmatpush1.msra.mxu0 %v615
        %1667 = vmatprep.subr.mxu0 0.0
        %1668 = vmatpush1.msra.mxu0 %v616
        %1669 = vmatprep.subr.mxu0 0.0
        %1670 = vmatpush1.msra.mxu0 %v617
        %1671 = vmatprep.subr.mxu0 0.0
        %1672 = vmatpush1.msra.mxu0 0.0
        %1673 = vmatprep.subr.mxu0 0.0
        %1674 = vmatpush1.msra.mxu0 0.0
        %1675 = vmatprep.subr.mxu0 0.0
        %1676 = vmatpush1.msra.mxu0 0.0
        %1677 = vmatprep.subr.mxu0 0.0
        %1678 = vmatpush1.msra.mxu0 0.0
        %1679 = vmatprep.subr.mxu0 0.0
        %1680 = vmatpush1.msra.mxu0 0.0
        %1681 = vmatprep.subr.mxu0 0.0
        %1682 = vmatpush1.msra.mxu0 0.0
        %1683 = vmatprep.subr.mxu0 0.0
        %1684 = vmatpush1.msra.mxu0 0.0
        %1685 = vmatprep.subr.mxu0 0.0
        %1686 = vmatpush1.msra.mxu0 0.0
        %1687 = vmatprep.subr.mxu0 0.0
        %1688 = vmatpush1.msra.mxu0 0.0
        %1689 = vmatprep.subr.mxu0 0.0
        %1690 = vmatpush1.msra.mxu0 0.0
        %1691 = vmatprep.subr.mxu0 0.0
        %1692 = vmatpush1.msra.mxu0 0.0
        %1693 = vmatprep.subr.mxu0 0.0
        %1694 = vmatpush1.msra.mxu0 0.0
        %1695 = vmatprep.subr.mxu0 0.0
        %1696 = vmatpush1.msra.mxu0 0.0
        %1697 = vmatprep.subr.mxu0 0.0
        %1698 = vmatpush1.msra.mxu0 0.0
        %1699 = vmatprep.subr.mxu0 0.0
        %1700 = vmatpush1.msra.mxu0 0.0
        %1701 = vmatprep.subr.mxu0 0.0
        %1702 = vmatpush1.msra.mxu0 0.0
        %1703 = vmatprep.subr.mxu0 0.0
        %1704 = vmatpush1.msra.mxu0 0.0
        %1705 = vmatprep.subr.mxu0 0.0
        %1706 = vmatpush1.msra.mxu0 0.0
        %1707 = vmatprep.subr.mxu0 0.0
        %1708 = vmatpush1.msra.mxu0 0.0
        %1709 = vmatprep.subr.mxu0 0.0
        %1710 = vmatpush1.msra.mxu0 0.0
        %1711 = vmatprep.subr.mxu0 0.0
        %1712 = vmatpush1.msra.mxu0 0.0
        %1713 = vmatprep.subr.mxu0 0.0
        %1714 = vmatpush1.msra.mxu0 0.0
        %1715 = vmatprep.subr.mxu0 0.0
        %1716 = vmatpush1.msra.mxu0 0.0
        %1717 = vmatprep.subr.mxu0 0.0
        %1718 = vmatpush1.msra.mxu0 0.0
        %1719 = vmatprep.subr.mxu0 0.0
        %1720 = vmatpush1.msra.mxu0 0.0
        %1721 = vmatprep.subr.mxu0 0.0
        %1722 = vmatpush1.msra.mxu0 0.0
        %1723 = vmatprep.mubr.f32.mxu0 0.0
        %1724 = vmatmul.mubr.f32.gmra.mrb[0].mxu0 %v1468
        %v1725 = vpop.f32.mrb[0].mxu0
        %v1726 = vadd.f32 %v1020, %v1725
        %v1727 = vpop.f32.mrb[0].mxu0
        %1728 = vmatprep.mubr.f32.mxu0 0.0
        %1729 = vmatmul.mubr.f32.gmra.mrb[0].mxu0 %v1471
        %v1730 = vpop.f32.mrb[0].mxu0
        %v1731 = vadd.f32 %v1025, %v1730
        %v1732 = vpop.f32.mrb[0].mxu0
        %1733 = vmatprep.mubr.f32.mxu0 0.0
        %1734 = vmatmul.mubr.f32.gmra.mrb[0].mxu0 %v1474
        %v1735 = vpop.f32.mrb[0].mxu0
        %v1736 = vadd.f32 %v1030, %v1735
        %v1737 = vpop.f32.mrb[0].mxu0
        %1738 = vmatprep.mubr.f32.mxu0 0.0
        %1739 = vmatmul.mubr.f32.gmra.mrb[0].mxu0 %v1477
        %v1740 = vpop.f32.mrb[0].mxu0
        %v1741 = vadd.f32 %v1035, %v1740
        %v1742 = vpop.f32.mrb[0].mxu0
        %1743 = vmatprep.mubr.f32.mxu0 0.0
        %1744 = vmatmul.mubr.f32.gmra.mrb[0].mxu0 %v1480
        %v1745 = vpop.f32.mrb[0].mxu0
        %v1746 = vadd.f32 %v1040, %v1745
        %v1747 = vpop.f32.mrb[0].mxu0
        %1748 = vmatprep.mubr.f32.mxu0 0.0
        %1749 = vmatmul.mubr.f32.gmra.mrb[0].mxu0 %v1483
        %v1750 = vpop.f32.mrb[0].mxu0
        %v1751 = vadd.f32 %v1045, %v1750
        %v1752 = vpop.f32.mrb[0].mxu0
        %1753 = vmatprep.mubr.f32.mxu0 0.0
        %1754 = vmatmul.mubr.f32.gmra.mrb[0].mxu0 %v1486
        %v1755 = vpop.f32.mrb[0].mxu0
        %v1756 = vadd.f32 %v1050, %v1755
        %v1757 = vpop.f32.mrb[0].mxu0
        %1758 = vmatprep.mubr.f32.mxu0 0.0
        %1759 = vmatmul.mubr.f32.gmra.mrb[0].mxu0 %v1489
        %v1760 = vpop.f32.mrb[0].mxu0
        %v1761 = vadd.f32 %v1055, %v1760
        %v1762 = vpop.f32.mrb[0].mxu0
        %1763 = vmatprep.mubr.f32.mxu0 0.0
        %1764 = vmatmul.mubr.f32.gmra.mrb[0].mxu0 %v1492
        %v1765 = vpop.f32.mrb[0].mxu0
        %v1766 = vadd.f32 %v1060, %v1765
        %v1767 = vpop.f32.mrb[0].mxu0
        %1768 = vmatprep.mubr.f32.mxu0 0.0
        %1769 = vmatmul.mubr.f32.gmra.mrb[0].mxu0 %v1495
        %v1770 = vpop.f32.mrb[0].mxu0
        %v1771 = vadd.f32 %v1065, %v1770
        %v1772 = vpop.f32.mrb[0].mxu0
        %1773 = vmatprep.mubr.f32.mxu0 0.0
        %1774 = vmatmul.mubr.f32.gmra.mrb[0].mxu0 %v1498
        %v1775 = vpop.f32.mrb[0].mxu0
        %v1776 = vadd.f32 %v1070, %v1775
        %v1777 = vpop.f32.mrb[0].mxu0
        %1778 = vmatprep.mubr.f32.mxu0 0.0
        %1779 = vmatmul.mubr.f32.gmra.mrb[0].mxu0 %v1501
        %v1780 = vpop.f32.mrb[0].mxu0
        %v1781 = vadd.f32 %v1075, %v1780
        %v1782 = vpop.f32.mrb[0].mxu0
        %1783 = vmatprep.mubr.f32.mxu0 0.0
        %1784 = vmatmul.mubr.f32.gmra.mrb[0].mxu0 %v1504
        %v1785 = vpop.f32.mrb[0].mxu0
        %v1786 = vadd.f32 %v1080, %v1785
        %v1787 = vpop.f32.mrb[0].mxu0
        %1788 = vmatprep.mubr.f32.mxu0 0.0
        %1789 = vmatmul.mubr.f32.gmra.mrb[0].mxu0 %v1507
        %v1790 = vpop.f32.mrb[0].mxu0
        %v1791 = vadd.f32 %v1085, %v1790
        %v1792 = vpop.f32.mrb[0].mxu0
        %1793 = vmatprep.mubr.f32.mxu0 0.0
        %1794 = vmatmul.mubr.f32.gmra.mrb[0].mxu0 %v1510
        %v1795 = vpop.f32.mrb[0].mxu0
        %v1796 = vadd.f32 %v1090, %v1795
        %v1797 = vpop.f32.mrb[0].mxu0
        %1798 = vmatprep.mubr.f32.mxu0 0.0
        %1799 = vmatmul.mubr.f32.gmra.mrb[0].mxu0 %v1513
        %v1800 = vpop.f32.mrb[0].mxu0
        %v1801 = vadd.f32 %v1095, %v1800
        %v1802 = vpop.f32.mrb[0].mxu0
        %1803 = vmatprep.mubr.f32.mxu0 0.0
        %1804 = vmatmul.mubr.f32.gmra.mrb[0].mxu0 %v1516
        %v1805 = vpop.f32.mrb[0].mxu0
        %v1806 = vadd.f32 %v1100, %v1805
        %v1807 = vpop.f32.mrb[0].mxu0
        %1808 = vmatprep.mubr.f32.mxu0 0.0
        %1809 = vmatmul.mubr.f32.gmra.mrb[0].mxu0 %v1519
        %v1810 = vpop.f32.mrb[0].mxu0
        %v1811 = vadd.f32 %v1105, %v1810
        %v1812 = vpop.f32.mrb[0].mxu0
        %1813 = vmatprep.mubr.f32.mxu0 0.0
        %1814 = vmatmul.mubr.f32.gmra.mrb[0].mxu0 %v1522
        %v1815 = vpop.f32.mrb[0].mxu0
        %v1816 = vadd.f32 %v1110, %v1815
        %v1817 = vpop.f32.mrb[0].mxu0
        %1818 = vmatprep.mubr.f32.mxu0 0.0
        %1819 = vmatmul.mubr.f32.gmra.mrb[0].mxu0 %v1525
        %v1820 = vpop.f32.mrb[0].mxu0
        %v1821 = vadd.f32 %v1115, %v1820
        %v1822 = vpop.f32.mrb[0].mxu0
        %1823 = vmatprep.mubr.f32.mxu0 0.0
        %1824 = vmatmul.mubr.f32.gmra.mrb[0].mxu0 %v1528
        %v1825 = vpop.f32.mrb[0].mxu0
        %v1826 = vadd.f32 %v1120, %v1825
        %v1827 = vpop.f32.mrb[0].mxu0
        %1828 = vmatprep.mubr.f32.mxu0 0.0
        %1829 = vmatmul.mubr.f32.gmra.mrb[0].mxu0 %v1531
        %v1830 = vpop.f32.mrb[0].mxu0
        %v1831 = vadd.f32 %v1125, %v1830
        %v1832 = vpop.f32.mrb[0].mxu0
        %1833 = vmatprep.mubr.f32.mxu0 0.0
        %1834 = vmatmul.mubr.f32.gmra.mrb[0].mxu0 %v1534
        %v1835 = vpop.f32.mrb[0].mxu0
        %v1836 = vadd.f32 %v1130, %v1835
        %v1837 = vpop.f32.mrb[0].mxu0
        %1838 = vmatprep.mubr.f32.mxu0 0.0
        %1839 = vmatmul.mubr.f32.gmra.mrb[0].mxu0 %v1537
        %v1840 = vpop.f32.mrb[0].mxu0
        %v1841 = vadd.f32 %v1135, %v1840
        %v1842 = vpop.f32.mrb[0].mxu0
        %1843 = vmatprep.mubr.f32.mxu0 0.0
        %1844 = vmatmul.mubr.f32.gmra.mrb[0].mxu0 %v1540
        %v1845 = vpop.f32.mrb[0].mxu0
        %v1846 = vadd.f32 %v1140, %v1845
        %v1847 = vpop.f32.mrb[0].mxu0
        %1848 = vmatprep.mubr.f32.mxu0 0.0
        %1849 = vmatmul.mubr.f32.gmra.mrb[0].mxu0 %v1543
        %v1850 = vpop.f32.mrb[0].mxu0
        %v1851 = vadd.f32 %v1145, %v1850
        %v1852 = vpop.f32.mrb[0].mxu0
        %1853 = vmatprep.mubr.f32.mxu0 0.0
        %1854 = vmatmul.mubr.f32.gmra.mrb[0].mxu0 %v1546
        %v1855 = vpop.f32.mrb[0].mxu0
        %v1856 = vadd.f32 %v1150, %v1855
        %v1857 = vpop.f32.mrb[0].mxu0
        %1858 = vmatprep.mubr.f32.mxu0 0.0
        %1859 = vmatmul.mubr.f32.gmra.mrb[0].mxu0 %v1549
        %v1860 = vpop.f32.mrb[0].mxu0
        %v1861 = vadd.f32 %v1155, %v1860
        %v1862 = vpop.f32.mrb[0].mxu0
        %1863 = vmatprep.mubr.f32.mxu0 0.0
        %1864 = vmatmul.mubr.f32.gmra.mrb[0].mxu0 %v1552
        %v1865 = vpop.f32.mrb[0].mxu0
        %v1866 = vadd.f32 %v1160, %v1865
        %v1867 = vpop.f32.mrb[0].mxu0
        %1868 = vmatprep.mubr.f32.mxu0 0.0
        %1869 = vmatmul.mubr.f32.gmra.mrb[0].mxu0 %v1555
        %v1870 = vpop.f32.mrb[0].mxu0
        %v1871 = vadd.f32 %v1165, %v1870
        %v1872 = vpop.f32.mrb[0].mxu0
        %1873 = vmatprep.mubr.f32.mxu0 0.0
        %1874 = vmatmul.mubr.f32.gmra.mrb[0].mxu0 %v1558
        %v1875 = vpop.f32.mrb[0].mxu0
        %v1876 = vadd.f32 %v1170, %v1875
        %v1877 = vpop.f32.mrb[0].mxu0
        %1878 = vmatprep.mubr.f32.mxu0 0.0
        %1879 = vmatmul.mubr.f32.gmra.mrb[0].mxu0 %v1561
        %v1880 = vpop.f32.mrb[0].mxu0
        %v1881 = vadd.f32 %v1175, %v1880
        %v1882 = vpop.f32.mrb[0].mxu0
        %1883 = vmatprep.mubr.f32.mxu0 0.0
        %1884 = vmatmul.mubr.f32.gmra.mrb[0].mxu0 %v1564
        %v1885 = vpop.f32.mrb[0].mxu0
        %v1886 = vadd.f32 %v1180, %v1885
        %v1887 = vpop.f32.mrb[0].mxu0
        %1888 = vmatprep.mubr.f32.mxu0 0.0
        %1889 = vmatmul.mubr.f32.gmra.mrb[0].mxu0 %v1567
        %v1890 = vpop.f32.mrb[0].mxu0
        %v1891 = vadd.f32 %v1185, %v1890
        %v1892 = vpop.f32.mrb[0].mxu0
        %1893 = vmatprep.mubr.f32.mxu0 0.0
        %1894 = vmatmul.mubr.f32.gmra.mrb[0].mxu0 %v1570
        %v1895 = vpop.f32.mrb[0].mxu0
        %v1896 = vadd.f32 %v1190, %v1895
        %v1897 = vpop.f32.mrb[0].mxu0
        %1898 = vmatprep.mubr.f32.mxu0 0.0
        %1899 = vmatmul.mubr.f32.gmra.mrb[0].mxu0 %v1573
        %v1900 = vpop.f32.mrb[0].mxu0
        %v1901 = vadd.f32 %v1195, %v1900
        %v1902 = vpop.f32.mrb[0].mxu0
        %1903 = vmatprep.mubr.f32.mxu0 0.0
        %1904 = vmatmul.mubr.f32.gmra.mrb[0].mxu0 %v1576
        %v1905 = vpop.f32.mrb[0].mxu0
        %v1906 = vadd.f32 %v1200, %v1905
        %v1907 = vpop.f32.mrb[0].mxu0
        %1908 = vmatprep.mubr.f32.mxu0 0.0
        %1909 = vmatmul.mubr.f32.gmra.mrb[0].mxu0 %v1579
        %v1910 = vpop.f32.mrb[0].mxu0
        %v1911 = vadd.f32 %v1205, %v1910
        %v1912 = vpop.f32.mrb[0].mxu0
        %1913 = vmatprep.mubr.f32.mxu0 0.0
        %1914 = vmatmul.mubr.f32.gmra.mrb[0].mxu0 %v1582
        %v1915 = vpop.f32.mrb[0].mxu0
        %v1916 = vadd.f32 %v1210, %v1915
        %v1917 = vpop.f32.mrb[0].mxu0
        %1918 = vmatprep.mubr.f32.mxu0 0.0
        %1919 = vmatmul.mubr.f32.gmra.mrb[0].mxu0 %v1585
        %v1920 = vpop.f32.mrb[0].mxu0
        %v1921 = vadd.f32 %v1215, %v1920
        %v1922 = vpop.f32.mrb[0].mxu0
        %1923 = vmatprep.mubr.f32.mxu0 0.0
        %1924 = vmatmul.mubr.f32.gmra.mrb[0].mxu0 %v1588
        %v1925 = vpop.f32.mrb[0].mxu0
        %v1926 = vadd.f32 %v1220, %v1925
        %v1927 = vpop.f32.mrb[0].mxu0
        %1928 = vmatprep.mubr.f32.mxu0 0.0
        %1929 = vmatmul.mubr.f32.gmra.mrb[0].mxu0 %v1591
        %v1930 = vpop.f32.mrb[0].mxu0
        %v1931 = vadd.f32 %v1225, %v1930
        %v1932 = vpop.f32.mrb[0].mxu0
        %1933 = vmatprep.mubr.f32.mxu0 0.0
        %1934 = vmatmul.mubr.f32.gmra.mrb[0].mxu0 %v1594
        %v1935 = vpop.f32.mrb[0].mxu0
        %v1936 = vadd.f32 %v1230, %v1935
        %v1937 = vpop.f32.mrb[0].mxu0
        %1938 = vmatprep.mubr.f32.mxu0 0.0
        %1939 = vmatmul.mubr.f32.gmra.mrb[0].mxu0 %v1597
        %v1940 = vpop.f32.mrb[0].mxu0
        %v1941 = vadd.f32 %v1235, %v1940
        %v1942 = vpop.f32.mrb[0].mxu0
        %1943 = vmatprep.mubr.f32.mxu0 0.0
        %1944 = vmatmul.mubr.f32.gmra.mrb[0].mxu0 %v1600
        %v1945 = vpop.f32.mrb[0].mxu0
        %v1946 = vadd.f32 %v1240, %v1945
        %v1947 = vpop.f32.mrb[0].mxu0
        %1948 = vmatprep.mubr.f32.mxu0 0.0
        %1949 = vmatmul.mubr.f32.gmra.mrb[0].mxu0 %v1603
        %v1950 = vpop.f32.mrb[0].mxu0
        %v1951 = vadd.f32 %v1245, %v1950
        %v1952 = vpop.f32.mrb[0].mxu0
        %1953 = vmatprep.mubr.f32.mxu0 0.0
        %1954 = vmatmul.mubr.f32.gmra.mrb[0].mxu0 %v1606
        %v1955 = vpop.f32.mrb[0].mxu0
        %v1956 = vadd.f32 %v1250, %v1955
        %v1957 = vpop.f32.mrb[0].mxu0
        %1958 = vmatprep.mubr.f32.mxu0 0.0
        %1959 = vmatmul.mubr.f32.gmra.mrb[0].mxu0 %v1609
        %v1960 = vpop.f32.mrb[0].mxu0
        %v1961 = vadd.f32 %v1255, %v1960
        %v1962 = vpop.f32.mrb[0].mxu0
        %1963 = vmatprep.mubr.f32.mxu0 0.0
        %1964 = vmatmul.mubr.f32.gmra.mrb[0].mxu0 %v1612
        %v1965 = vpop.f32.mrb[0].mxu0
        %v1966 = vadd.f32 %v1260, %v1965
        %v1967 = vpop.f32.mrb[0].mxu0
        %1968 = vmatprep.mubr.f32.mxu0 0.0
        %1969 = vmatmul.mubr.f32.gmra.mrb[0].mxu0 %v1615
        %v1970 = vpop.f32.mrb[0].mxu0
        %v1971 = vadd.f32 %v1265, %v1970
        %v1972 = vpop.f32.mrb[0].mxu0
        %1973 = vmatprep.mubr.f32.mxu0 0.0
        %1974 = vmatmul.mubr.f32.gmra.mrb[0].mxu0 %v1618
        %v1975 = vpop.f32.mrb[0].mxu0
        %v1976 = vadd.f32 %v1270, %v1975
        %v1977 = vpop.f32.mrb[0].mxu0
        %1978 = vmatprep.mubr.f32.mxu0 0.0
        %1979 = vmatmul.mubr.f32.gmra.mrb[0].mxu0 %v1621
        %v1980 = vpop.f32.mrb[0].mxu0
        %v1981 = vadd.f32 %v1275, %v1980
        %v1982 = vpop.f32.mrb[0].mxu0
        %1983 = vmatprep.mubr.f32.mxu0 0.0
        %1984 = vmatmul.mubr.f32.gmra.mrb[0].mxu0 %v1624
        %v1985 = vpop.f32.mrb[0].mxu0
        %v1986 = vadd.f32 %v1280, %v1985
        %v1987 = vpop.f32.mrb[0].mxu0
        %1988 = vmatprep.mubr.f32.mxu0 0.0
        %1989 = vmatmul.mubr.f32.gmra.mrb[0].mxu0 %v1627
        %v1990 = vpop.f32.mrb[0].mxu0
        %v1991 = vadd.f32 %v1285, %v1990
        %v1992 = vpop.f32.mrb[0].mxu0
        %1993 = vmatprep.mubr.f32.mxu0 0.0
        %1994 = vmatmul.mubr.f32.gmra.mrb[0].mxu0 %v1630
        %v1995 = vpop.f32.mrb[0].mxu0
        %v1996 = vadd.f32 %v1290, %v1995
        %v1997 = vpop.f32.mrb[0].mxu0
        %1998 = vmatprep.mubr.f32.mxu0 0.0
        %1999 = vmatmul.mubr.f32.gmra.mrb[0].mxu0 %v1633
        %v2000 = vpop.f32.mrb[0].mxu0
        %v2001 = vadd.f32 %v1295, %v2000
        %v2002 = vpop.f32.mrb[0].mxu0
        %2003 = vmatprep.mubr.f32.mxu0 0.0
        %2004 = vmatmul.mubr.f32.gmra.mrb[0].mxu0 %v1636
        %v2005 = vpop.f32.mrb[0].mxu0
        %v2006 = vadd.f32 %v1300, %v2005
        %v2007 = vpop.f32.mrb[0].mxu0
        %2008 = vmatprep.mubr.f32.mxu0 0.0
        %2009 = vmatmul.mubr.f32.gmra.mrb[0].mxu0 %v1639
        %v2010 = vpop.f32.mrb[0].mxu0
        %v2011 = vadd.f32 %v1305, %v2010
        %v2012 = vpop.f32.mrb[0].mxu0
        %2013 = vmatprep.mubr.f32.mxu0 0.0
        %2014 = vmatmul.mubr.f32.gmra.mrb[0].mxu0 %v1642
        %v2015 = vpop.f32.mrb[0].mxu0
        %v2016 = vadd.f32 %v1310, %v2015
        %v2017 = vpop.f32.mrb[0].mxu0
        %2018 = vmatprep.mubr.f32.mxu0 0.0
        %2019 = vmatmul.mubr.f32.gmra.mrb[0].mxu0 %v1645
        %v2020 = vpop.f32.mrb[0].mxu0
        %v2021 = vadd.f32 %v1315, %v2020
        %v2022 = vpop.f32.mrb[0].mxu0
        %2023 = vmatprep.mubr.f32.mxu0 0.0
        %2024 = vmatmul.mubr.f32.gmra.mrb[0].mxu0 %v1648
        %v2025 = vpop.f32.mrb[0].mxu0
        %v2026 = vadd.f32 %v1320, %v2025
        %v2027 = vpop.f32.mrb[0].mxu0
        %2028 = vmatprep.mubr.f32.mxu0 0.0
        %2029 = vmatmul.mubr.f32.gmra.mrb[0].mxu0 %v1651
        %v2030 = vpop.f32.mrb[0].mxu0
        %v2031 = vadd.f32 %v1325, %v2030
        %v2032 = vpop.f32.mrb[0].mxu0
        %2033 = vmatprep.mubr.f32.mxu0 0.0
        %2034 = vmatmul.mubr.f32.gmra.mrb[0].mxu0 %v1654
        %v2035 = vpop.f32.mrb[0].mxu0
        %v2036 = vadd.f32 %v1330, %v2035
        %v2037 = vpop.f32.mrb[0].mxu0
        %2038 = vmatprep.mubr.f32.mxu0 0.0
        %2039 = vmatmul.mubr.f32.gmra.mrb[0].mxu0 %v1657
        %v2040 = vpop.f32.mrb[0].mxu0
        %v2041 = vadd.f32 %v1335, %v2040
        %v2042 = vpop.f32.mrb[0].mxu0
        %2043 = vdwg.mxu0
        %v2044 = vxor.u32 %v1726, 2147483648
        %v2045 = vxor.u32 %v1731, 2147483648
        %v2046 = vxor.u32 %v1736, 2147483648
        %v2047 = vxor.u32 %v1741, 2147483648
        %v2048 = vxor.u32 %v1746, 2147483648
        %v2049 = vxor.u32 %v1751, 2147483648
        %v2050 = vxor.u32 %v1756, 2147483648
        %v2051 = vxor.u32 %v1761, 2147483648
        %v2052 = vxor.u32 %v1766, 2147483648
        %v2053 = vxor.u32 %v1771, 2147483648
        %v2054 = vxor.u32 %v1776, 2147483648
        %v2055 = vxor.u32 %v1781, 2147483648
        %v2056 = vxor.u32 %v1786, 2147483648
        %v2057 = vxor.u32 %v1791, 2147483648
        %v2058 = vxor.u32 %v1796, 2147483648
        %v2059 = vxor.u32 %v1801, 2147483648
        %v2060 = vxor.u32 %v1806, 2147483648
        %v2061 = vxor.u32 %v1811, 2147483648
        %v2062 = vxor.u32 %v1816, 2147483648
        %v2063 = vxor.u32 %v1821, 2147483648
        %v2064 = vxor.u32 %v1826, 2147483648
        %v2065 = vxor.u32 %v1831, 2147483648
        %v2066 = vxor.u32 %v1836, 2147483648
        %v2067 = vxor.u32 %v1841, 2147483648
        %v2068 = vxor.u32 %v1846, 2147483648
        %v2069 = vxor.u32 %v1851, 2147483648
        %v2070 = vxor.u32 %v1856, 2147483648
        %v2071 = vxor.u32 %v1861, 2147483648
        %v2072 = vxor.u32 %v1866, 2147483648
        %v2073 = vxor.u32 %v1871, 2147483648
        %v2074 = vxor.u32 %v1876, 2147483648
        %v2075 = vxor.u32 %v1881, 2147483648
        %v2076 = vxor.u32 %v1886, 2147483648
        %v2077 = vxor.u32 %v1891, 2147483648
        %v2078 = vxor.u32 %v1896, 2147483648
        %v2079 = vxor.u32 %v1901, 2147483648
        %v2080 = vxor.u32 %v1906, 2147483648
        %v2081 = vxor.u32 %v1911, 2147483648
        %v2082 = vxor.u32 %v1916, 2147483648
        %v2083 = vxor.u32 %v1921, 2147483648
        %v2084 = vxor.u32 %v1926, 2147483648
        %v2085 = vxor.u32 %v1931, 2147483648
        %v2086 = vxor.u32 %v1936, 2147483648
        %v2087 = vxor.u32 %v1941, 2147483648
        %v2088 = vxor.u32 %v1946, 2147483648
        %v2089 = vxor.u32 %v1951, 2147483648
        %v2090 = vxor.u32 %v1956, 2147483648
        %v2091 = vxor.u32 %v1961, 2147483648
        %v2092 = vxor.u32 %v1966, 2147483648
        %v2093 = vxor.u32 %v1971, 2147483648
        %v2094 = vxor.u32 %v1976, 2147483648
        %v2095 = vxor.u32 %v1981, 2147483648
        %v2096 = vxor.u32 %v1986, 2147483648
        %v2097 = vxor.u32 %v1991, 2147483648
        %v2098 = vxor.u32 %v1996, 2147483648
        %v2099 = vxor.u32 %v2001, 2147483648
        %v2100 = vxor.u32 %v2006, 2147483648
        %v2101 = vxor.u32 %v2011, 2147483648
        %v2102 = vxor.u32 %v2016, 2147483648
        %v2103 = vxor.u32 %v2021, 2147483648
        %v2104 = vxor.u32 %v2026, 2147483648
        %v2105 = vxor.u32 %v2031, 2147483648
        %v2106 = vxor.u32 %v2036, 2147483648
        %v2107 = vxor.u32 %v2041, 2147483648
        %v2108 = vmul.f32 %v2044, 1.442695
        %v2109 = vpow.pop %v2108
        %v2110 = vmul.f32 %v2045, 1.442695
        %v2111 = vpow.pop %v2110
        %v2112 = vmul.f32 %v2046, 1.442695
        %v2113 = vpow.pop %v2112
        %v2114 = vmul.f32 %v2047, 1.442695
        %v2115 = vpow.pop %v2114
        %v2116 = vmul.f32 %v2048, 1.442695
        %v2117 = vpow.pop %v2116
        %v2118 = vmul.f32 %v2049, 1.442695
        %v2119 = vpow.pop %v2118
        %v2120 = vmul.f32 %v2050, 1.442695
        %v2121 = vpow.pop %v2120
        %v2122 = vmul.f32 %v2051, 1.442695
        %v2123 = vpow.pop %v2122
        %v2124 = vmul.f32 %v2052, 1.442695
        %v2125 = vpow.pop %v2124
        %v2126 = vmul.f32 %v2053, 1.442695
        %v2127 = vpow.pop %v2126
        %v2128 = vmul.f32 %v2054, 1.442695
        %v2129 = vpow.pop %v2128
        %v2130 = vmul.f32 %v2055, 1.442695
        %v2131 = vpow.pop %v2130
        %v2132 = vmul.f32 %v2056, 1.442695
        %v2133 = vpow.pop %v2132
        %v2134 = vmul.f32 %v2057, 1.442695
        %v2135 = vpow.pop %v2134
        %v2136 = vmul.f32 %v2058, 1.442695
        %v2137 = vpow.pop %v2136
        %v2138 = vmul.f32 %v2059, 1.442695
        %v2139 = vpow.pop %v2138
        %v2140 = vmul.f32 %v2060, 1.442695
        %v2141 = vpow.pop %v2140
        %v2142 = vmul.f32 %v2061, 1.442695
        %v2143 = vpow.pop %v2142
        %v2144 = vmul.f32 %v2062, 1.442695
        %v2145 = vpow.pop %v2144
        %v2146 = vmul.f32 %v2063, 1.442695
        %v2147 = vpow.pop %v2146
        %v2148 = vmul.f32 %v2064, 1.442695
        %v2149 = vpow.pop %v2148
        %v2150 = vmul.f32 %v2065, 1.442695
        %v2151 = vpow.pop %v2150
        %v2152 = vmul.f32 %v2066, 1.442695
        %v2153 = vpow.pop %v2152
        %v2154 = vmul.f32 %v2067, 1.442695
        %v2155 = vpow.pop %v2154
        %v2156 = vmul.f32 %v2068, 1.442695
        %v2157 = vpow.pop %v2156
        %v2158 = vmul.f32 %v2069, 1.442695
        %v2159 = vpow.pop %v2158
        %v2160 = vmul.f32 %v2070, 1.442695
        %v2161 = vpow.pop %v2160
        %v2162 = vmul.f32 %v2071, 1.442695
        %v2163 = vpow.pop %v2162
        %v2164 = vmul.f32 %v2072, 1.442695
        %v2165 = vpow.pop %v2164
        %v2166 = vmul.f32 %v2073, 1.442695
        %v2167 = vpow.pop %v2166
        %v2168 = vmul.f32 %v2074, 1.442695
        %v2169 = vpow.pop %v2168
        %v2170 = vmul.f32 %v2075, 1.442695
        %v2171 = vpow.pop %v2170
        %v2172 = vmul.f32 %v2076, 1.442695
        %v2173 = vpow.pop %v2172
        %v2174 = vmul.f32 %v2077, 1.442695
        %v2175 = vpow.pop %v2174
        %v2176 = vmul.f32 %v2078, 1.442695
        %v2177 = vpow.pop %v2176
        %v2178 = vmul.f32 %v2079, 1.442695
        %v2179 = vpow.pop %v2178
        %v2180 = vmul.f32 %v2080, 1.442695
        %v2181 = vpow.pop %v2180
        %v2182 = vmul.f32 %v2081, 1.442695
        %v2183 = vpow.pop %v2182
        %v2184 = vmul.f32 %v2082, 1.442695
        %v2185 = vpow.pop %v2184
        %v2186 = vmul.f32 %v2083, 1.442695
        %v2187 = vpow.pop %v2186
        %v2188 = vmul.f32 %v2084, 1.442695
        %v2189 = vpow.pop %v2188
        %v2190 = vmul.f32 %v2085, 1.442695
        %v2191 = vpow.pop %v2190
        %v2192 = vmul.f32 %v2086, 1.442695
        %v2193 = vpow.pop %v2192
        %v2194 = vmul.f32 %v2087, 1.442695
        %v2195 = vpow.pop %v2194
        %v2196 = vmul.f32 %v2088, 1.442695
        %v2197 = vpow.pop %v2196
        %v2198 = vmul.f32 %v2089, 1.442695
        %v2199 = vpow.pop %v2198
        %v2200 = vmul.f32 %v2090, 1.442695
        %v2201 = vpow.pop %v2200
        %v2202 = vmul.f32 %v2091, 1.442695
        %v2203 = vpow.pop %v2202
        %v2204 = vmul.f32 %v2092, 1.442695
        %v2205 = vpow.pop %v2204
        %v2206 = vmul.f32 %v2093, 1.442695
        %v2207 = vpow.pop %v2206
        %v2208 = vmul.f32 %v2094, 1.442695
        %v2209 = vpow.pop %v2208
        %v2210 = vmul.f32 %v2095, 1.442695
        %v2211 = vpow.pop %v2210
        %v2212 = vmul.f32 %v2096, 1.442695
        %v2213 = vpow.pop %v2212
        %v2214 = vmul.f32 %v2097, 1.442695
        %v2215 = vpow.pop %v2214
        %v2216 = vmul.f32 %v2098, 1.442695
        %v2217 = vpow.pop %v2216
        %v2218 = vmul.f32 %v2099, 1.442695
        %v2219 = vpow.pop %v2218
        %v2220 = vmul.f32 %v2100, 1.442695
        %v2221 = vpow.pop %v2220
        %v2222 = vmul.f32 %v2101, 1.442695
        %v2223 = vpow.pop %v2222
        %v2224 = vmul.f32 %v2102, 1.442695
        %v2225 = vpow.pop %v2224
        %v2226 = vmul.f32 %v2103, 1.442695
        %v2227 = vpow.pop %v2226
        %v2228 = vmul.f32 %v2104, 1.442695
        %v2229 = vpow.pop %v2228
        %v2230 = vmul.f32 %v2105, 1.442695
        %v2231 = vpow.pop %v2230
        %v2232 = vmul.f32 %v2106, 1.442695
        %v2233 = vpow.pop %v2232
        %v2234 = vmul.f32 %v2107, 1.442695
        %v2235 = vpow.pop %v2234
        %v2236 = vadd.f32 %v2109, 1.0
        %v2237 = vadd.f32 %v2111, 1.0
        %v2238 = vadd.f32 %v2113, 1.0
        %v2239 = vadd.f32 %v2115, 1.0
        %v2240 = vadd.f32 %v2117, 1.0
        %v2241 = vadd.f32 %v2119, 1.0
        %v2242 = vadd.f32 %v2121, 1.0
        %v2243 = vadd.f32 %v2123, 1.0
        %v2244 = vadd.f32 %v2125, 1.0
        %v2245 = vadd.f32 %v2127, 1.0
        %v2246 = vadd.f32 %v2129, 1.0
        %v2247 = vadd.f32 %v2131, 1.0
        %v2248 = vadd.f32 %v2133, 1.0
        %v2249 = vadd.f32 %v2135, 1.0
        %v2250 = vadd.f32 %v2137, 1.0
        %v2251 = vadd.f32 %v2139, 1.0
        %v2252 = vadd.f32 %v2141, 1.0
        %v2253 = vadd.f32 %v2143, 1.0
        %v2254 = vadd.f32 %v2145, 1.0
        %v2255 = vadd.f32 %v2147, 1.0
        %v2256 = vadd.f32 %v2149, 1.0
        %v2257 = vadd.f32 %v2151, 1.0
        %v2258 = vadd.f32 %v2153, 1.0
        %v2259 = vadd.f32 %v2155, 1.0
        %v2260 = vadd.f32 %v2157, 1.0
        %v2261 = vadd.f32 %v2159, 1.0
        %v2262 = vadd.f32 %v2161, 1.0
        %v2263 = vadd.f32 %v2163, 1.0
        %v2264 = vadd.f32 %v2165, 1.0
        %v2265 = vadd.f32 %v2167, 1.0
        %v2266 = vadd.f32 %v2169, 1.0
        %v2267 = vadd.f32 %v2171, 1.0
        %v2268 = vadd.f32 %v2173, 1.0
        %v2269 = vadd.f32 %v2175, 1.0
        %v2270 = vadd.f32 %v2177, 1.0
        %v2271 = vadd.f32 %v2179, 1.0
        %v2272 = vadd.f32 %v2181, 1.0
        %v2273 = vadd.f32 %v2183, 1.0
        %v2274 = vadd.f32 %v2185, 1.0
        %v2275 = vadd.f32 %v2187, 1.0
        %v2276 = vadd.f32 %v2189, 1.0
        %v2277 = vadd.f32 %v2191, 1.0
        %v2278 = vadd.f32 %v2193, 1.0
        %v2279 = vadd.f32 %v2195, 1.0
        %v2280 = vadd.f32 %v2197, 1.0
        %v2281 = vadd.f32 %v2199, 1.0
        %v2282 = vadd.f32 %v2201, 1.0
        %v2283 = vadd.f32 %v2203, 1.0
        %v2284 = vadd.f32 %v2205, 1.0
        %v2285 = vadd.f32 %v2207, 1.0
        %v2286 = vadd.f32 %v2209, 1.0
        %v2287 = vadd.f32 %v2211, 1.0
        %v2288 = vadd.f32 %v2213, 1.0
        %v2289 = vadd.f32 %v2215, 1.0
        %v2290 = vadd.f32 %v2217, 1.0
        %v2291 = vadd.f32 %v2219, 1.0
        %v2292 = vadd.f32 %v2221, 1.0
        %v2293 = vadd.f32 %v2223, 1.0
        %v2294 = vadd.f32 %v2225, 1.0
        %v2295 = vadd.f32 %v2227, 1.0
        %v2296 = vadd.f32 %v2229, 1.0
        %v2297 = vadd.f32 %v2231, 1.0
        %v2298 = vadd.f32 %v2233, 1.0
        %v2299 = vadd.f32 %v2235, 1.0
        %v2300 = vrcp.pop %v2236
        %v2301 = vmul.f32 1.0, %v2300
        %v2302 = vrcp.pop %v2237
        %v2303 = vmul.f32 1.0, %v2302
        %v2304 = vrcp.pop %v2238
        %v2305 = vmul.f32 1.0, %v2304
        %v2306 = vrcp.pop %v2239
        %v2307 = vmul.f32 1.0, %v2306
        %v2308 = vrcp.pop %v2240
        %v2309 = vmul.f32 1.0, %v2308
        %v2310 = vrcp.pop %v2241
        %v2311 = vmul.f32 1.0, %v2310
        %v2312 = vrcp.pop %v2242
        %v2313 = vmul.f32 1.0, %v2312
        %v2314 = vrcp.pop %v2243
        %v2315 = vmul.f32 1.0, %v2314
        %v2316 = vrcp.pop %v2244
        %v2317 = vmul.f32 1.0, %v2316
        %v2318 = vrcp.pop %v2245
        %v2319 = vmul.f32 1.0, %v2318
        %v2320 = vrcp.pop %v2246
        %v2321 = vmul.f32 1.0, %v2320
        %v2322 = vrcp.pop %v2247
        %v2323 = vmul.f32 1.0, %v2322
        %v2324 = vrcp.pop %v2248
        %v2325 = vmul.f32 1.0, %v2324
        %v2326 = vrcp.pop %v2249
        %v2327 = vmul.f32 1.0, %v2326
        %v2328 = vrcp.pop %v2250
        %v2329 = vmul.f32 1.0, %v2328
        %v2330 = vrcp.pop %v2251
        %v2331 = vmul.f32 1.0, %v2330
        %v2332 = vrcp.pop %v2252
        %v2333 = vmul.f32 1.0, %v2332
        %v2334 = vrcp.pop %v2253
        %v2335 = vmul.f32 1.0, %v2334
        %v2336 = vrcp.pop %v2254
        %v2337 = vmul.f32 1.0, %v2336
        %v2338 = vrcp.pop %v2255
        %v2339 = vmul.f32 1.0, %v2338
        %v2340 = vrcp.pop %v2256
        %v2341 = vmul.f32 1.0, %v2340
        %v2342 = vrcp.pop %v2257
        %v2343 = vmul.f32 1.0, %v2342
        %v2344 = vrcp.pop %v2258
        %v2345 = vmul.f32 1.0, %v2344
        %v2346 = vrcp.pop %v2259
        %v2347 = vmul.f32 1.0, %v2346
        %v2348 = vrcp.pop %v2260
        %v2349 = vmul.f32 1.0, %v2348
        %v2350 = vrcp.pop %v2261
        %v2351 = vmul.f32 1.0, %v2350
        %v2352 = vrcp.pop %v2262
        %v2353 = vmul.f32 1.0, %v2352
        %v2354 = vrcp.pop %v2263
        %v2355 = vmul.f32 1.0, %v2354
        %v2356 = vrcp.pop %v2264
        %v2357 = vmul.f32 1.0, %v2356
        %v2358 = vrcp.pop %v2265
        %v2359 = vmul.f32 1.0, %v2358
        %v2360 = vrcp.pop %v2266
        %v2361 = vmul.f32 1.0, %v2360
        %v2362 = vrcp.pop %v2267
        %v2363 = vmul.f32 1.0, %v2362
        %v2364 = vrcp.pop %v2268
        %v2365 = vmul.f32 1.0, %v2364
        %v2366 = vrcp.pop %v2269
        %v2367 = vmul.f32 1.0, %v2366
        %v2368 = vrcp.pop %v2270
        %v2369 = vmul.f32 1.0, %v2368
        %v2370 = vrcp.pop %v2271
        %v2371 = vmul.f32 1.0, %v2370
        %v2372 = vrcp.pop %v2272
        %v2373 = vmul.f32 1.0, %v2372
        %v2374 = vrcp.pop %v2273
        %v2375 = vmul.f32 1.0, %v2374
        %v2376 = vrcp.pop %v2274
        %v2377 = vmul.f32 1.0, %v2376
        %v2378 = vrcp.pop %v2275
        %v2379 = vmul.f32 1.0, %v2378
        %v2380 = vrcp.pop %v2276
        %v2381 = vmul.f32 1.0, %v2380
        %v2382 = vrcp.pop %v2277
        %v2383 = vmul.f32 1.0, %v2382
        %v2384 = vrcp.pop %v2278
        %v2385 = vmul.f32 1.0, %v2384
        %v2386 = vrcp.pop %v2279
        %v2387 = vmul.f32 1.0, %v2386
        %v2388 = vrcp.pop %v2280
        %v2389 = vmul.f32 1.0, %v2388
        %v2390 = vrcp.pop %v2281
        %v2391 = vmul.f32 1.0, %v2390
        %v2392 = vrcp.pop %v2282
        %v2393 = vmul.f32 1.0, %v2392
        %v2394 = vrcp.pop %v2283
        %v2395 = vmul.f32 1.0, %v2394
        %v2396 = vrcp.pop %v2284
        %v2397 = vmul.f32 1.0, %v2396
        %v2398 = vrcp.pop %v2285
        %v2399 = vmul.f32 1.0, %v2398
        %v2400 = vrcp.pop %v2286
        %v2401 = vmul.f32 1.0, %v2400
        %v2402 = vrcp.pop %v2287
        %v2403 = vmul.f32 1.0, %v2402
        %v2404 = vrcp.pop %v2288
        %v2405 = vmul.f32 1.0, %v2404
        %v2406 = vrcp.pop %v2289
        %v2407 = vmul.f32 1.0, %v2406
        %v2408 = vrcp.pop %v2290
        %v2409 = vmul.f32 1.0, %v2408
        %v2410 = vrcp.pop %v2291
        %v2411 = vmul.f32 1.0, %v2410
        %v2412 = vrcp.pop %v2292
        %v2413 = vmul.f32 1.0, %v2412
        %v2414 = vrcp.pop %v2293
        %v2415 = vmul.f32 1.0, %v2414
        %v2416 = vrcp.pop %v2294
        %v2417 = vmul.f32 1.0, %v2416
        %v2418 = vrcp.pop %v2295
        %v2419 = vmul.f32 1.0, %v2418
        %v2420 = vrcp.pop %v2296
        %v2421 = vmul.f32 1.0, %v2420
        %v2422 = vrcp.pop %v2297
        %v2423 = vmul.f32 1.0, %v2422
        %v2424 = vrcp.pop %v2298
        %v2425 = vmul.f32 1.0, %v2424
        %v2426 = vrcp.pop %v2299
        %v2427 = vmul.f32 1.0, %v2426
        %v2428 = vmul.f32 %v1726, %v2301
        %v2429 = vmul.f32 %v1731, %v2303
        %v2430 = vmul.f32 %v1736, %v2305
        %v2431 = vmul.f32 %v1741, %v2307
        %v2432 = vmul.f32 %v1746, %v2309
        %v2433 = vmul.f32 %v1751, %v2311
        %v2434 = vmul.f32 %v1756, %v2313
        %v2435 = vmul.f32 %v1761, %v2315
        %v2436 = vmul.f32 %v1766, %v2317
        %v2437 = vmul.f32 %v1771, %v2319
        %v2438 = vmul.f32 %v1776, %v2321
        %v2439 = vmul.f32 %v1781, %v2323
        %v2440 = vmul.f32 %v1786, %v2325
        %v2441 = vmul.f32 %v1791, %v2327
        %v2442 = vmul.f32 %v1796, %v2329
        %v2443 = vmul.f32 %v1801, %v2331
        %v2444 = vmul.f32 %v1806, %v2333
        %v2445 = vmul.f32 %v1811, %v2335
        %v2446 = vmul.f32 %v1816, %v2337
        %v2447 = vmul.f32 %v1821, %v2339
        %v2448 = vmul.f32 %v1826, %v2341
        %v2449 = vmul.f32 %v1831, %v2343
        %v2450 = vmul.f32 %v1836, %v2345
        %v2451 = vmul.f32 %v1841, %v2347
        %v2452 = vmul.f32 %v1846, %v2349
        %v2453 = vmul.f32 %v1851, %v2351
        %v2454 = vmul.f32 %v1856, %v2353
        %v2455 = vmul.f32 %v1861, %v2355
        %v2456 = vmul.f32 %v1866, %v2357
        %v2457 = vmul.f32 %v1871, %v2359
        %v2458 = vmul.f32 %v1876, %v2361
        %v2459 = vmul.f32 %v1881, %v2363
        %v2460 = vmul.f32 %v1886, %v2365
        %v2461 = vmul.f32 %v1891, %v2367
        %v2462 = vmul.f32 %v1896, %v2369
        %v2463 = vmul.f32 %v1901, %v2371
        %v2464 = vmul.f32 %v1906, %v2373
        %v2465 = vmul.f32 %v1911, %v2375
        %v2466 = vmul.f32 %v1916, %v2377
        %v2467 = vmul.f32 %v1921, %v2379
        %v2468 = vmul.f32 %v1926, %v2381
        %v2469 = vmul.f32 %v1931, %v2383
        %v2470 = vmul.f32 %v1936, %v2385
        %v2471 = vmul.f32 %v1941, %v2387
        %v2472 = vmul.f32 %v1946, %v2389
        %v2473 = vmul.f32 %v1951, %v2391
        %v2474 = vmul.f32 %v1956, %v2393
        %v2475 = vmul.f32 %v1961, %v2395
        %v2476 = vmul.f32 %v1966, %v2397
        %v2477 = vmul.f32 %v1971, %v2399
        %v2478 = vmul.f32 %v1976, %v2401
        %v2479 = vmul.f32 %v1981, %v2403
        %v2480 = vmul.f32 %v1986, %v2405
        %v2481 = vmul.f32 %v1991, %v2407
        %v2482 = vmul.f32 %v1996, %v2409
        %v2483 = vmul.f32 %v2001, %v2411
        %v2484 = vmul.f32 %v2006, %v2413
        %v2485 = vmul.f32 %v2011, %v2415
        %v2486 = vmul.f32 %v2016, %v2417
        %v2487 = vmul.f32 %v2021, %v2419
        %v2488 = vmul.f32 %v2026, %v2421
        %v2489 = vmul.f32 %v2031, %v2423
        %v2490 = vmul.f32 %v2036, %v2425
        %v2491 = vmul.f32 %v2041, %v2427
        %v2492 = vld [vmem:[%s5] sm:$0x1]
        %v2494 = vlaneseq
        %v2495 = vshrl.u32 %v2494, 7
        %v2496 = vsub.s32 0, %v2495
        %v2497 = vrot.slane %v2492, %v2496
        %v2499 = vmul.f32 %v2428, %v2497
        %v2500 = vmul.f32 %v2429, %v2497
        %v2501 = vmul.f32 %v2430, %v2497
        %v2502 = vmul.f32 %v2431, %v2497
        %v2503 = vmul.f32 %v2432, %v2497
        %v2504 = vmul.f32 %v2433, %v2497
        %v2505 = vmul.f32 %v2434, %v2497
        %v2506 = vmul.f32 %v2435, %v2497
        %v2507 = vmul.f32 %v2436, %v2497
        %v2508 = vmul.f32 %v2437, %v2497
        %v2509 = vmul.f32 %v2438, %v2497
        %v2510 = vmul.f32 %v2439, %v2497
        %v2511 = vmul.f32 %v2440, %v2497
        %v2512 = vmul.f32 %v2441, %v2497
        %v2513 = vmul.f32 %v2442, %v2497
        %v2514 = vmul.f32 %v2443, %v2497
        %v2515 = vmul.f32 %v2444, %v2497
        %v2516 = vmul.f32 %v2445, %v2497
        %v2517 = vmul.f32 %v2446, %v2497
        %v2518 = vmul.f32 %v2447, %v2497
        %v2519 = vmul.f32 %v2448, %v2497
        %v2520 = vmul.f32 %v2449, %v2497
        %v2521 = vmul.f32 %v2450, %v2497
        %v2522 = vmul.f32 %v2451, %v2497
        %v2523 = vmul.f32 %v2452, %v2497
        %v2524 = vmul.f32 %v2453, %v2497
        %v2525 = vmul.f32 %v2454, %v2497
        %v2526 = vmul.f32 %v2455, %v2497
        %v2527 = vmul.f32 %v2456, %v2497
        %v2528 = vmul.f32 %v2457, %v2497
        %v2529 = vmul.f32 %v2458, %v2497
        %v2530 = vmul.f32 %v2459, %v2497
        %v2531 = vmul.f32 %v2460, %v2497
        %v2532 = vmul.f32 %v2461, %v2497
        %v2533 = vmul.f32 %v2462, %v2497
        %v2534 = vmul.f32 %v2463, %v2497
        %v2535 = vmul.f32 %v2464, %v2497
        %v2536 = vmul.f32 %v2465, %v2497
        %v2537 = vmul.f32 %v2466, %v2497
        %v2538 = vmul.f32 %v2467, %v2497
        %v2539 = vmul.f32 %v2468, %v2497
        %v2540 = vmul.f32 %v2469, %v2497
        %v2541 = vmul.f32 %v2470, %v2497
        %v2542 = vmul.f32 %v2471, %v2497
        %v2543 = vmul.f32 %v2472, %v2497
        %v2544 = vmul.f32 %v2473, %v2497
        %v2545 = vmul.f32 %v2474, %v2497
        %v2546 = vmul.f32 %v2475, %v2497
        %v2547 = vmul.f32 %v2476, %v2497
        %v2548 = vmul.f32 %v2477, %v2497
        %v2549 = vmul.f32 %v2478, %v2497
        %v2550 = vmul.f32 %v2479, %v2497
        %v2551 = vmul.f32 %v2480, %v2497
        %v2552 = vmul.f32 %v2481, %v2497
        %v2553 = vmul.f32 %v2482, %v2497
        %v2554 = vmul.f32 %v2483, %v2497
        %v2555 = vmul.f32 %v2484, %v2497
        %v2556 = vmul.f32 %v2485, %v2497
        %v2557 = vmul.f32 %v2486, %v2497
        %v2558 = vmul.f32 %v2487, %v2497
        %v2559 = vmul.f32 %v2488, %v2497
        %v2560 = vmul.f32 %v2489, %v2497
        %v2561 = vmul.f32 %v2490, %v2497
        %v2562 = vmul.f32 %v2491, %v2497
        %vm2563 = vcmask 261120
        %v2564 = vsel %vm2563, %v2499, 0.0
        %2565 = vadd.xlane.f32.xlu0 %v2564
        %v2566 = vpop.xlane.xlu0 %2565
        %v2567 = vsel %vm2563, %v2500, 0.0
        %2568 = vadd.xlane.f32.xlu0 %v2567
        %v2569 = vpop.xlane.xlu0 %2568
        %v2570 = vsel %vm2563, %v2501, 0.0
        %2571 = vadd.xlane.f32.xlu0 %v2570
        %v2572 = vpop.xlane.xlu0 %2571
        %v2573 = vsel %vm2563, %v2502, 0.0
        %2574 = vadd.xlane.f32.xlu0 %v2573
        %v2575 = vpop.xlane.xlu0 %2574
        %v2576 = vsel %vm2563, %v2503, 0.0
        %2577 = vadd.xlane.f32.xlu0 %v2576
        %v2578 = vpop.xlane.xlu0 %2577
        %v2579 = vsel %vm2563, %v2504, 0.0
        %2580 = vadd.xlane.f32.xlu0 %v2579
        %v2581 = vpop.xlane.xlu0 %2580
        %v2582 = vsel %vm2563, %v2505, 0.0
        %2583 = vadd.xlane.f32.xlu0 %v2582
        %v2584 = vpop.xlane.xlu0 %2583
        %v2585 = vsel %vm2563, %v2506, 0.0
        %2586 = vadd.xlane.f32.xlu0 %v2585
        %v2587 = vpop.xlane.xlu0 %2586
        %v2588 = vsel %vm2563, %v2507, 0.0
        %2589 = vadd.xlane.f32.xlu0 %v2588
        %v2590 = vpop.xlane.xlu0 %2589
        %v2591 = vsel %vm2563, %v2508, 0.0
        %2592 = vadd.xlane.f32.xlu0 %v2591
        %v2593 = vpop.xlane.xlu0 %2592
        %v2594 = vsel %vm2563, %v2509, 0.0
        %2595 = vadd.xlane.f32.xlu0 %v2594
        %v2596 = vpop.xlane.xlu0 %2595
        %v2597 = vsel %vm2563, %v2510, 0.0
        %2598 = vadd.xlane.f32.xlu0 %v2597
        %v2599 = vpop.xlane.xlu0 %2598
        %v2600 = vsel %vm2563, %v2511, 0.0
        %2601 = vadd.xlane.f32.xlu0 %v2600
        %v2602 = vpop.xlane.xlu0 %2601
        %v2603 = vsel %vm2563, %v2512, 0.0
        %2604 = vadd.xlane.f32.xlu0 %v2603
        %v2605 = vpop.xlane.xlu0 %2604
        %v2606 = vsel %vm2563, %v2513, 0.0
        %2607 = vadd.xlane.f32.xlu0 %v2606
        %v2608 = vpop.xlane.xlu0 %2607
        %v2609 = vsel %vm2563, %v2514, 0.0
        %2610 = vadd.xlane.f32.xlu0 %v2609
        %v2611 = vpop.xlane.xlu0 %2610
        %v2612 = vsel %vm2563, %v2515, 0.0
        %2613 = vadd.xlane.f32.xlu0 %v2612
        %v2614 = vpop.xlane.xlu0 %2613
        %v2615 = vsel %vm2563, %v2516, 0.0
        %2616 = vadd.xlane.f32.xlu0 %v2615
        %v2617 = vpop.xlane.xlu0 %2616
        %v2618 = vsel %vm2563, %v2517, 0.0
        %2619 = vadd.xlane.f32.xlu0 %v2618
        %v2620 = vpop.xlane.xlu0 %2619
        %v2621 = vsel %vm2563, %v2518, 0.0
        %2622 = vadd.xlane.f32.xlu0 %v2621
        %v2623 = vpop.xlane.xlu0 %2622
        %v2624 = vsel %vm2563, %v2519, 0.0
        %2625 = vadd.xlane.f32.xlu0 %v2624
        %v2626 = vpop.xlane.xlu0 %2625
        %v2627 = vsel %vm2563, %v2520, 0.0
        %2628 = vadd.xlane.f32.xlu0 %v2627
        %v2629 = vpop.xlane.xlu0 %2628
        %v2630 = vsel %vm2563, %v2521, 0.0
        %2631 = vadd.xlane.f32.xlu0 %v2630
        %v2632 = vpop.xlane.xlu0 %2631
        %v2633 = vsel %vm2563, %v2522, 0.0
        %2634 = vadd.xlane.f32.xlu0 %v2633
        %v2635 = vpop.xlane.xlu0 %2634
        %v2636 = vsel %vm2563, %v2523, 0.0
        %2637 = vadd.xlane.f32.xlu0 %v2636
        %v2638 = vpop.xlane.xlu0 %2637
        %v2639 = vsel %vm2563, %v2524, 0.0
        %2640 = vadd.xlane.f32.xlu0 %v2639
        %v2641 = vpop.xlane.xlu0 %2640
        %v2642 = vsel %vm2563, %v2525, 0.0
        %2643 = vadd.xlane.f32.xlu0 %v2642
        %v2644 = vpop.xlane.xlu0 %2643
        %v2645 = vsel %vm2563, %v2526, 0.0
        %2646 = vadd.xlane.f32.xlu0 %v2645
        %v2647 = vpop.xlane.xlu0 %2646
        %v2648 = vsel %vm2563, %v2527, 0.0
        %2649 = vadd.xlane.f32.xlu0 %v2648
        %v2650 = vpop.xlane.xlu0 %2649
        %v2651 = vsel %vm2563, %v2528, 0.0
        %2652 = vadd.xlane.f32.xlu0 %v2651
        %v2653 = vpop.xlane.xlu0 %2652
        %v2654 = vsel %vm2563, %v2529, 0.0
        %2655 = vadd.xlane.f32.xlu0 %v2654
        %v2656 = vpop.xlane.xlu0 %2655
        %v2657 = vsel %vm2563, %v2530, 0.0
        %2658 = vadd.xlane.f32.xlu0 %v2657
        %v2659 = vpop.xlane.xlu0 %2658
        %v2660 = vsel %vm2563, %v2531, 0.0
        %2661 = vadd.xlane.f32.xlu0 %v2660
        %v2662 = vpop.xlane.xlu0 %2661
        %v2663 = vsel %vm2563, %v2532, 0.0
        %2664 = vadd.xlane.f32.xlu0 %v2663
        %v2665 = vpop.xlane.xlu0 %2664
        %v2666 = vsel %vm2563, %v2533, 0.0
        %2667 = vadd.xlane.f32.xlu0 %v2666
        %v2668 = vpop.xlane.xlu0 %2667
        %v2669 = vsel %vm2563, %v2534, 0.0
        %2670 = vadd.xlane.f32.xlu0 %v2669
        %v2671 = vpop.xlane.xlu0 %2670
        %v2672 = vsel %vm2563, %v2535, 0.0
        %2673 = vadd.xlane.f32.xlu0 %v2672
        %v2674 = vpop.xlane.xlu0 %2673
        %v2675 = vsel %vm2563, %v2536, 0.0
        %2676 = vadd.xlane.f32.xlu0 %v2675
        %v2677 = vpop.xlane.xlu0 %2676
        %v2678 = vsel %vm2563, %v2537, 0.0
        %2679 = vadd.xlane.f32.xlu0 %v2678
        %v2680 = vpop.xlane.xlu0 %2679
        %v2681 = vsel %vm2563, %v2538, 0.0
        %2682 = vadd.xlane.f32.xlu0 %v2681
        %v2683 = vpop.xlane.xlu0 %2682
        %v2684 = vsel %vm2563, %v2539, 0.0
        %2685 = vadd.xlane.f32.xlu0 %v2684
        %v2686 = vpop.xlane.xlu0 %2685
        %v2687 = vsel %vm2563, %v2540, 0.0
        %2688 = vadd.xlane.f32.xlu0 %v2687
        %v2689 = vpop.xlane.xlu0 %2688
        %v2690 = vsel %vm2563, %v2541, 0.0
        %2691 = vadd.xlane.f32.xlu0 %v2690
        %v2692 = vpop.xlane.xlu0 %2691
        %v2693 = vsel %vm2563, %v2542, 0.0
        %2694 = vadd.xlane.f32.xlu0 %v2693
        %v2695 = vpop.xlane.xlu0 %2694
        %v2696 = vsel %vm2563, %v2543, 0.0
        %2697 = vadd.xlane.f32.xlu0 %v2696
        %v2698 = vpop.xlane.xlu0 %2697
        %v2699 = vsel %vm2563, %v2544, 0.0
        %2700 = vadd.xlane.f32.xlu0 %v2699
        %v2701 = vpop.xlane.xlu0 %2700
        %v2702 = vsel %vm2563, %v2545, 0.0
        %2703 = vadd.xlane.f32.xlu0 %v2702
        %v2704 = vpop.xlane.xlu0 %2703
        %v2705 = vsel %vm2563, %v2546, 0.0
        %2706 = vadd.xlane.f32.xlu0 %v2705
        %v2707 = vpop.xlane.xlu0 %2706
        %v2708 = vsel %vm2563, %v2547, 0.0
        %2709 = vadd.xlane.f32.xlu0 %v2708
        %v2710 = vpop.xlane.xlu0 %2709
        %v2711 = vsel %vm2563, %v2548, 0.0
        %2712 = vadd.xlane.f32.xlu0 %v2711
        %v2713 = vpop.xlane.xlu0 %2712
        %v2714 = vsel %vm2563, %v2549, 0.0
        %2715 = vadd.xlane.f32.xlu0 %v2714
        %v2716 = vpop.xlane.xlu0 %2715
        %v2717 = vsel %vm2563, %v2550, 0.0
        %2718 = vadd.xlane.f32.xlu0 %v2717
        %v2719 = vpop.xlane.xlu0 %2718
        %v2720 = vsel %vm2563, %v2551, 0.0
        %2721 = vadd.xlane.f32.xlu0 %v2720
        %v2722 = vpop.xlane.xlu0 %2721
        %v2723 = vsel %vm2563, %v2552, 0.0
        %2724 = vadd.xlane.f32.xlu0 %v2723
        %v2725 = vpop.xlane.xlu0 %2724
        %v2726 = vsel %vm2563, %v2553, 0.0
        %2727 = vadd.xlane.f32.xlu0 %v2726
        %v2728 = vpop.xlane.xlu0 %2727
        %v2729 = vsel %vm2563, %v2554, 0.0
        %2730 = vadd.xlane.f32.xlu0 %v2729
        %v2731 = vpop.xlane.xlu0 %2730
        %v2732 = vsel %vm2563, %v2555, 0.0
        %2733 = vadd.xlane.f32.xlu0 %v2732
        %v2734 = vpop.xlane.xlu0 %2733
        %v2735 = vsel %vm2563, %v2556, 0.0
        %2736 = vadd.xlane.f32.xlu0 %v2735
        %v2737 = vpop.xlane.xlu0 %2736
        %v2738 = vsel %vm2563, %v2557, 0.0
        %2739 = vadd.xlane.f32.xlu0 %v2738
        %v2740 = vpop.xlane.xlu0 %2739
        %v2741 = vsel %vm2563, %v2558, 0.0
        %2742 = vadd.xlane.f32.xlu0 %v2741
        %v2743 = vpop.xlane.xlu0 %2742
        %v2744 = vsel %vm2563, %v2559, 0.0
        %2745 = vadd.xlane.f32.xlu0 %v2744
        %v2746 = vpop.xlane.xlu0 %2745
        %v2747 = vsel %vm2563, %v2560, 0.0
        %2748 = vadd.xlane.f32.xlu0 %v2747
        %v2749 = vpop.xlane.xlu0 %2748
        %v2750 = vsel %vm2563, %v2561, 0.0
        %2751 = vadd.xlane.f32.xlu0 %v2750
        %v2752 = vpop.xlane.xlu0 %2751
        %v2753 = vsel %vm2563, %v2562, 0.0
        %2754 = vadd.xlane.f32.xlu0 %v2753
        %v2755 = vpop.xlane.xlu0 %2754
        %s2756 = sld [smem:[#allocation2]]
        %v2757 = vstv %s2756
        %v2758 = vadd.f32 %v2566, %v2757
        %v2759 = vadd.f32 %v2569, %v2757
        %v2760 = vadd.f32 %v2572, %v2757
        %v2761 = vadd.f32 %v2575, %v2757
        %v2762 = vadd.f32 %v2578, %v2757
        %v2763 = vadd.f32 %v2581, %v2757
        %v2764 = vadd.f32 %v2584, %v2757
        %v2765 = vadd.f32 %v2587, %v2757
        %v2766 = vadd.f32 %v2590, %v2757
        %v2767 = vadd.f32 %v2593, %v2757
        %v2768 = vadd.f32 %v2596, %v2757
        %v2769 = vadd.f32 %v2599, %v2757
        %v2770 = vadd.f32 %v2602, %v2757
        %v2771 = vadd.f32 %v2605, %v2757
        %v2772 = vadd.f32 %v2608, %v2757
        %v2773 = vadd.f32 %v2611, %v2757
        %v2774 = vadd.f32 %v2614, %v2757
        %v2775 = vadd.f32 %v2617, %v2757
        %v2776 = vadd.f32 %v2620, %v2757
        %v2777 = vadd.f32 %v2623, %v2757
        %v2778 = vadd.f32 %v2626, %v2757
        %v2779 = vadd.f32 %v2629, %v2757
        %v2780 = vadd.f32 %v2632, %v2757
        %v2781 = vadd.f32 %v2635, %v2757
        %v2782 = vadd.f32 %v2638, %v2757
        %v2783 = vadd.f32 %v2641, %v2757
        %v2784 = vadd.f32 %v2644, %v2757
        %v2785 = vadd.f32 %v2647, %v2757
        %v2786 = vadd.f32 %v2650, %v2757
        %v2787 = vadd.f32 %v2653, %v2757
        %v2788 = vadd.f32 %v2656, %v2757
        %v2789 = vadd.f32 %v2659, %v2757
        %v2790 = vadd.f32 %v2662, %v2757
        %v2791 = vadd.f32 %v2665, %v2757
        %v2792 = vadd.f32 %v2668, %v2757
        %v2793 = vadd.f32 %v2671, %v2757
        %v2794 = vadd.f32 %v2674, %v2757
        %v2795 = vadd.f32 %v2677, %v2757
        %v2796 = vadd.f32 %v2680, %v2757
        %v2797 = vadd.f32 %v2683, %v2757
        %v2798 = vadd.f32 %v2686, %v2757
        %v2799 = vadd.f32 %v2689, %v2757
        %v2800 = vadd.f32 %v2692, %v2757
        %v2801 = vadd.f32 %v2695, %v2757
        %v2802 = vadd.f32 %v2698, %v2757
        %v2803 = vadd.f32 %v2701, %v2757
        %v2804 = vadd.f32 %v2704, %v2757
        %v2805 = vadd.f32 %v2707, %v2757
        %v2806 = vadd.f32 %v2710, %v2757
        %v2807 = vadd.f32 %v2713, %v2757
        %v2808 = vadd.f32 %v2716, %v2757
        %v2809 = vadd.f32 %v2719, %v2757
        %v2810 = vadd.f32 %v2722, %v2757
        %v2811 = vadd.f32 %v2725, %v2757
        %v2812 = vadd.f32 %v2728, %v2757
        %v2813 = vadd.f32 %v2731, %v2757
        %v2814 = vadd.f32 %v2734, %v2757
        %v2815 = vadd.f32 %v2737, %v2757
        %v2816 = vadd.f32 %v2740, %v2757
        %v2817 = vadd.f32 %v2743, %v2757
        %v2818 = vadd.f32 %v2746, %v2757
        %v2819 = vadd.f32 %v2749, %v2757
        %v2820 = vadd.f32 %v2752, %v2757
        %v2821 = vadd.f32 %v2755, %v2757
        %v2822 = vxor.u32 %v2758, 2147483648
        %v2823 = vxor.u32 %v2759, 2147483648
        %v2824 = vxor.u32 %v2760, 2147483648
        %v2825 = vxor.u32 %v2761, 2147483648
        %v2826 = vxor.u32 %v2762, 2147483648
        %v2827 = vxor.u32 %v2763, 2147483648
        %v2828 = vxor.u32 %v2764, 2147483648
        %v2829 = vxor.u32 %v2765, 2147483648
        %v2830 = vxor.u32 %v2766, 2147483648
        %v2831 = vxor.u32 %v2767, 2147483648
        %v2832 = vxor.u32 %v2768, 2147483648
        %v2833 = vxor.u32 %v2769, 2147483648
        %v2834 = vxor.u32 %v2770, 2147483648
        %v2835 = vxor.u32 %v2771, 2147483648
        %v2836 = vxor.u32 %v2772, 2147483648
        %v2837 = vxor.u32 %v2773, 2147483648
        %v2838 = vxor.u32 %v2774, 2147483648
        %v2839 = vxor.u32 %v2775, 2147483648
        %v2840 = vxor.u32 %v2776, 2147483648
        %v2841 = vxor.u32 %v2777, 2147483648
        %v2842 = vxor.u32 %v2778, 2147483648
        %v2843 = vxor.u32 %v2779, 2147483648
        %v2844 = vxor.u32 %v2780, 2147483648
        %v2845 = vxor.u32 %v2781, 2147483648
        %v2846 = vxor.u32 %v2782, 2147483648
        %v2847 = vxor.u32 %v2783, 2147483648
        %v2848 = vxor.u32 %v2784, 2147483648
        %v2849 = vxor.u32 %v2785, 2147483648
        %v2850 = vxor.u32 %v2786, 2147483648
        %v2851 = vxor.u32 %v2787, 2147483648
        %v2852 = vxor.u32 %v2788, 2147483648
        %v2853 = vxor.u32 %v2789, 2147483648
        %v2854 = vxor.u32 %v2790, 2147483648
        %v2855 = vxor.u32 %v2791, 2147483648
        %v2856 = vxor.u32 %v2792, 2147483648
        %v2857 = vxor.u32 %v2793, 2147483648
        %v2858 = vxor.u32 %v2794, 2147483648
        %v2859 = vxor.u32 %v2795, 2147483648
        %v2860 = vxor.u32 %v2796, 2147483648
        %v2861 = vxor.u32 %v2797, 2147483648
        %v2862 = vxor.u32 %v2798, 2147483648
        %v2863 = vxor.u32 %v2799, 2147483648
        %v2864 = vxor.u32 %v2800, 2147483648
        %v2865 = vxor.u32 %v2801, 2147483648
        %v2866 = vxor.u32 %v2802, 2147483648
        %v2867 = vxor.u32 %v2803, 2147483648
        %v2868 = vxor.u32 %v2804, 2147483648
        %v2869 = vxor.u32 %v2805, 2147483648
        %v2870 = vxor.u32 %v2806, 2147483648
        %v2871 = vxor.u32 %v2807, 2147483648
        %v2872 = vxor.u32 %v2808, 2147483648
        %v2873 = vxor.u32 %v2809, 2147483648
        %v2874 = vxor.u32 %v2810, 2147483648
        %v2875 = vxor.u32 %v2811, 2147483648
        %v2876 = vxor.u32 %v2812, 2147483648
        %v2877 = vxor.u32 %v2813, 2147483648
        %v2878 = vxor.u32 %v2814, 2147483648
        %v2879 = vxor.u32 %v2815, 2147483648
        %v2880 = vxor.u32 %v2816, 2147483648
        %v2881 = vxor.u32 %v2817, 2147483648
        %v2882 = vxor.u32 %v2818, 2147483648
        %v2883 = vxor.u32 %v2819, 2147483648
        %v2884 = vxor.u32 %v2820, 2147483648
        %v2885 = vxor.u32 %v2821, 2147483648
        %v2886 = vmul.f32 %v2822, 1.442695
        %v2887 = vpow.pop %v2886
        %v2888 = vmul.f32 %v2823, 1.442695
        %v2889 = vpow.pop %v2888
        %v2890 = vmul.f32 %v2824, 1.442695
        %v2891 = vpow.pop %v2890
        %v2892 = vmul.f32 %v2825, 1.442695
        %v2893 = vpow.pop %v2892
        %v2894 = vmul.f32 %v2826, 1.442695
        %v2895 = vpow.pop %v2894
        %v2896 = vmul.f32 %v2827, 1.442695
        %v2897 = vpow.pop %v2896
        %v2898 = vmul.f32 %v2828, 1.442695
        %v2899 = vpow.pop %v2898
        %v2900 = vmul.f32 %v2829, 1.442695
        %v2901 = vpow.pop %v2900
        %v2902 = vmul.f32 %v2830, 1.442695
        %v2903 = vpow.pop %v2902
        %v2904 = vmul.f32 %v2831, 1.442695
        %v2905 = vpow.pop %v2904
        %v2906 = vmul.f32 %v2832, 1.442695
        %v2907 = vpow.pop %v2906
        %v2908 = vmul.f32 %v2833, 1.442695
        %v2909 = vpow.pop %v2908
        %v2910 = vmul.f32 %v2834, 1.442695
        %v2911 = vpow.pop %v2910
        %v2912 = vmul.f32 %v2835, 1.442695
        %v2913 = vpow.pop %v2912
        %v2914 = vmul.f32 %v2836, 1.442695
        %v2915 = vpow.pop %v2914
        %v2916 = vmul.f32 %v2837, 1.442695
        %v2917 = vpow.pop %v2916
        %v2918 = vmul.f32 %v2838, 1.442695
        %v2919 = vpow.pop %v2918
        %v2920 = vmul.f32 %v2839, 1.442695
        %v2921 = vpow.pop %v2920
        %v2922 = vmul.f32 %v2840, 1.442695
        %v2923 = vpow.pop %v2922
        %v2924 = vmul.f32 %v2841, 1.442695
        %v2925 = vpow.pop %v2924
        %v2926 = vmul.f32 %v2842, 1.442695
        %v2927 = vpow.pop %v2926
        %v2928 = vmul.f32 %v2843, 1.442695
        %v2929 = vpow.pop %v2928
        %v2930 = vmul.f32 %v2844, 1.442695
        %v2931 = vpow.pop %v2930
        %v2932 = vmul.f32 %v2845, 1.442695
        %v2933 = vpow.pop %v2932
        %v2934 = vmul.f32 %v2846, 1.442695
        %v2935 = vpow.pop %v2934
        %v2936 = vmul.f32 %v2847, 1.442695
        %v2937 = vpow.pop %v2936
        %v2938 = vmul.f32 %v2848, 1.442695
        %v2939 = vpow.pop %v2938
        %v2940 = vmul.f32 %v2849, 1.442695
        %v2941 = vpow.pop %v2940
        %v2942 = vmul.f32 %v2850, 1.442695
        %v2943 = vpow.pop %v2942
        %v2944 = vmul.f32 %v2851, 1.442695
        %v2945 = vpow.pop %v2944
        %v2946 = vmul.f32 %v2852, 1.442695
        %v2947 = vpow.pop %v2946
        %v2948 = vmul.f32 %v2853, 1.442695
        %v2949 = vpow.pop %v2948
        %v2950 = vmul.f32 %v2854, 1.442695
        %v2951 = vpow.pop %v2950
        %v2952 = vmul.f32 %v2855, 1.442695
        %v2953 = vpow.pop %v2952
        %v2954 = vmul.f32 %v2856, 1.442695
        %v2955 = vpow.pop %v2954
        %v2956 = vmul.f32 %v2857, 1.442695
        %v2957 = vpow.pop %v2956
        %v2958 = vmul.f32 %v2858, 1.442695
        %v2959 = vpow.pop %v2958
        %v2960 = vmul.f32 %v2859, 1.442695
        %v2961 = vpow.pop %v2960
        %v2962 = vmul.f32 %v2860, 1.442695
        %v2963 = vpow.pop %v2962
        %v2964 = vmul.f32 %v2861, 1.442695
        %v2965 = vpow.pop %v2964
        %v2966 = vmul.f32 %v2862, 1.442695
        %v2967 = vpow.pop %v2966
        %v2968 = vmul.f32 %v2863, 1.442695
        %v2969 = vpow.pop %v2968
        %v2970 = vmul.f32 %v2864, 1.442695
        %v2971 = vpow.pop %v2970
        %v2972 = vmul.f32 %v2865, 1.442695
        %v2973 = vpow.pop %v2972
        %v2974 = vmul.f32 %v2866, 1.442695
        %v2975 = vpow.pop %v2974
        %v2976 = vmul.f32 %v2867, 1.442695
        %v2977 = vpow.pop %v2976
        %v2978 = vmul.f32 %v2868, 1.442695
        %v2979 = vpow.pop %v2978
        %v2980 = vmul.f32 %v2869, 1.442695
        %v2981 = vpow.pop %v2980
        %v2982 = vmul.f32 %v2870, 1.442695
        %v2983 = vpow.pop %v2982
        %v2984 = vmul.f32 %v2871, 1.442695
        %v2985 = vpow.pop %v2984
        %v2986 = vmul.f32 %v2872, 1.442695
        %v2987 = vpow.pop %v2986
        %v2988 = vmul.f32 %v2873, 1.442695
        %v2989 = vpow.pop %v2988
        %v2990 = vmul.f32 %v2874, 1.442695
        %v2991 = vpow.pop %v2990
        %v2992 = vmul.f32 %v2875, 1.442695
        %v2993 = vpow.pop %v2992
        %v2994 = vmul.f32 %v2876, 1.442695
        %v2995 = vpow.pop %v2994
        %v2996 = vmul.f32 %v2877, 1.442695
        %v2997 = vpow.pop %v2996
        %v2998 = vmul.f32 %v2878, 1.442695
        %v2999 = vpow.pop %v2998
        %v3000 = vmul.f32 %v2879, 1.442695
        %v3001 = vpow.pop %v3000
        %v3002 = vmul.f32 %v2880, 1.442695
        %v3003 = vpow.pop %v3002
        %v3004 = vmul.f32 %v2881, 1.442695
        %v3005 = vpow.pop %v3004
        %v3006 = vmul.f32 %v2882, 1.442695
        %v3007 = vpow.pop %v3006
        %v3008 = vmul.f32 %v2883, 1.442695
        %v3009 = vpow.pop %v3008
        %v3010 = vmul.f32 %v2884, 1.442695
        %v3011 = vpow.pop %v3010
        %v3012 = vmul.f32 %v2885, 1.442695
        %v3013 = vpow.pop %v3012
        %v3014 = vadd.f32 %v2887, 1.0
        %v3015 = vadd.f32 %v2889, 1.0
        %v3016 = vadd.f32 %v2891, 1.0
        %v3017 = vadd.f32 %v2893, 1.0
        %v3018 = vadd.f32 %v2895, 1.0
        %v3019 = vadd.f32 %v2897, 1.0
        %v3020 = vadd.f32 %v2899, 1.0
        %v3021 = vadd.f32 %v2901, 1.0
        %v3022 = vadd.f32 %v2903, 1.0
        %v3023 = vadd.f32 %v2905, 1.0
        %v3024 = vadd.f32 %v2907, 1.0
        %v3025 = vadd.f32 %v2909, 1.0
        %v3026 = vadd.f32 %v2911, 1.0
        %v3027 = vadd.f32 %v2913, 1.0
        %v3028 = vadd.f32 %v2915, 1.0
        %v3029 = vadd.f32 %v2917, 1.0
        %v3030 = vadd.f32 %v2919, 1.0
        %v3031 = vadd.f32 %v2921, 1.0
        %v3032 = vadd.f32 %v2923, 1.0
        %v3033 = vadd.f32 %v2925, 1.0
        %v3034 = vadd.f32 %v2927, 1.0
        %v3035 = vadd.f32 %v2929, 1.0
        %v3036 = vadd.f32 %v2931, 1.0
        %v3037 = vadd.f32 %v2933, 1.0
        %v3038 = vadd.f32 %v2935, 1.0
        %v3039 = vadd.f32 %v2937, 1.0
        %v3040 = vadd.f32 %v2939, 1.0
        %v3041 = vadd.f32 %v2941, 1.0
        %v3042 = vadd.f32 %v2943, 1.0
        %v3043 = vadd.f32 %v2945, 1.0
        %v3044 = vadd.f32 %v2947, 1.0
        %v3045 = vadd.f32 %v2949, 1.0
        %v3046 = vadd.f32 %v2951, 1.0
        %v3047 = vadd.f32 %v2953, 1.0
        %v3048 = vadd.f32 %v2955, 1.0
        %v3049 = vadd.f32 %v2957, 1.0
        %v3050 = vadd.f32 %v2959, 1.0
        %v3051 = vadd.f32 %v2961, 1.0
        %v3052 = vadd.f32 %v2963, 1.0
        %v3053 = vadd.f32 %v2965, 1.0
        %v3054 = vadd.f32 %v2967, 1.0
        %v3055 = vadd.f32 %v2969, 1.0
        %v3056 = vadd.f32 %v2971, 1.0
        %v3057 = vadd.f32 %v2973, 1.0
        %v3058 = vadd.f32 %v2975, 1.0
        %v3059 = vadd.f32 %v2977, 1.0
        %v3060 = vadd.f32 %v2979, 1.0
        %v3061 = vadd.f32 %v2981, 1.0
        %v3062 = vadd.f32 %v2983, 1.0
        %v3063 = vadd.f32 %v2985, 1.0
        %v3064 = vadd.f32 %v2987, 1.0
        %v3065 = vadd.f32 %v2989, 1.0
        %v3066 = vadd.f32 %v2991, 1.0
        %v3067 = vadd.f32 %v2993, 1.0
        %v3068 = vadd.f32 %v2995, 1.0
        %v3069 = vadd.f32 %v2997, 1.0
        %v3070 = vadd.f32 %v2999, 1.0
        %v3071 = vadd.f32 %v3001, 1.0
        %v3072 = vadd.f32 %v3003, 1.0
        %v3073 = vadd.f32 %v3005, 1.0
        %v3074 = vadd.f32 %v3007, 1.0
        %v3075 = vadd.f32 %v3009, 1.0
        %v3076 = vadd.f32 %v3011, 1.0
        %v3077 = vadd.f32 %v3013, 1.0
        %v3078 = vrcp.pop %v3014
        %v3079 = vmul.f32 1.0, %v3078
        %v3080 = vrcp.pop %v3015
        %v3081 = vmul.f32 1.0, %v3080
        %v3082 = vrcp.pop %v3016
        %v3083 = vmul.f32 1.0, %v3082
        %v3084 = vrcp.pop %v3017
        %v3085 = vmul.f32 1.0, %v3084
        %v3086 = vrcp.pop %v3018
        %v3087 = vmul.f32 1.0, %v3086
        %v3088 = vrcp.pop %v3019
        %v3089 = vmul.f32 1.0, %v3088
        %v3090 = vrcp.pop %v3020
        %v3091 = vmul.f32 1.0, %v3090
        %v3092 = vrcp.pop %v3021
        %v3093 = vmul.f32 1.0, %v3092
        %v3094 = vrcp.pop %v3022
        %v3095 = vmul.f32 1.0, %v3094
        %v3096 = vrcp.pop %v3023
        %v3097 = vmul.f32 1.0, %v3096
        %v3098 = vrcp.pop %v3024
        %v3099 = vmul.f32 1.0, %v3098
        %v3100 = vrcp.pop %v3025
        %v3101 = vmul.f32 1.0, %v3100
        %v3102 = vrcp.pop %v3026
        %v3103 = vmul.f32 1.0, %v3102
        %v3104 = vrcp.pop %v3027
        %v3105 = vmul.f32 1.0, %v3104
        %v3106 = vrcp.pop %v3028
        %v3107 = vmul.f32 1.0, %v3106
        %v3108 = vrcp.pop %v3029
        %v3109 = vmul.f32 1.0, %v3108
        %v3110 = vrcp.pop %v3030
        %v3111 = vmul.f32 1.0, %v3110
        %v3112 = vrcp.pop %v3031
        %v3113 = vmul.f32 1.0, %v3112
        %v3114 = vrcp.pop %v3032
        %v3115 = vmul.f32 1.0, %v3114
        %v3116 = vrcp.pop %v3033
        %v3117 = vmul.f32 1.0, %v3116
        %v3118 = vrcp.pop %v3034
        %v3119 = vmul.f32 1.0, %v3118
        %v3120 = vrcp.pop %v3035
        %v3121 = vmul.f32 1.0, %v3120
        %v3122 = vrcp.pop %v3036
        %v3123 = vmul.f32 1.0, %v3122
        %v3124 = vrcp.pop %v3037
        %v3125 = vmul.f32 1.0, %v3124
        %v3126 = vrcp.pop %v3038
        %v3127 = vmul.f32 1.0, %v3126
        %v3128 = vrcp.pop %v3039
        %v3129 = vmul.f32 1.0, %v3128
        %v3130 = vrcp.pop %v3040
        %v3131 = vmul.f32 1.0, %v3130
        %v3132 = vrcp.pop %v3041
        %v3133 = vmul.f32 1.0, %v3132
        %v3134 = vrcp.pop %v3042
        %v3135 = vmul.f32 1.0, %v3134
        %v3136 = vrcp.pop %v3043
        %v3137 = vmul.f32 1.0, %v3136
        %v3138 = vrcp.pop %v3044
        %v3139 = vmul.f32 1.0, %v3138
        %v3140 = vrcp.pop %v3045
        %v3141 = vmul.f32 1.0, %v3140
        %v3142 = vrcp.pop %v3046
        %v3143 = vmul.f32 1.0, %v3142
        %v3144 = vrcp.pop %v3047
        %v3145 = vmul.f32 1.0, %v3144
        %v3146 = vrcp.pop %v3048
        %v3147 = vmul.f32 1.0, %v3146
        %v3148 = vrcp.pop %v3049
        %v3149 = vmul.f32 1.0, %v3148
        %v3150 = vrcp.pop %v3050
        %v3151 = vmul.f32 1.0, %v3150
        %v3152 = vrcp.pop %v3051
        %v3153 = vmul.f32 1.0, %v3152
        %v3154 = vrcp.pop %v3052
        %v3155 = vmul.f32 1.0, %v3154
        %v3156 = vrcp.pop %v3053
        %v3157 = vmul.f32 1.0, %v3156
        %v3158 = vrcp.pop %v3054
        %v3159 = vmul.f32 1.0, %v3158
        %v3160 = vrcp.pop %v3055
        %v3161 = vmul.f32 1.0, %v3160
        %v3162 = vrcp.pop %v3056
        %v3163 = vmul.f32 1.0, %v3162
        %v3164 = vrcp.pop %v3057
        %v3165 = vmul.f32 1.0, %v3164
        %v3166 = vrcp.pop %v3058
        %v3167 = vmul.f32 1.0, %v3166
        %v3168 = vrcp.pop %v3059
        %v3169 = vmul.f32 1.0, %v3168
        %v3170 = vrcp.pop %v3060
        %v3171 = vmul.f32 1.0, %v3170
        %v3172 = vrcp.pop %v3061
        %v3173 = vmul.f32 1.0, %v3172
        %v3174 = vrcp.pop %v3062
        %v3175 = vmul.f32 1.0, %v3174
        %v3176 = vrcp.pop %v3063
        %v3177 = vmul.f32 1.0, %v3176
        %v3178 = vrcp.pop %v3064
        %v3179 = vmul.f32 1.0, %v3178
        %v3180 = vrcp.pop %v3065
        %v3181 = vmul.f32 1.0, %v3180
        %v3182 = vrcp.pop %v3066
        %v3183 = vmul.f32 1.0, %v3182
        %v3184 = vrcp.pop %v3067
        %v3185 = vmul.f32 1.0, %v3184
        %v3186 = vrcp.pop %v3068
        %v3187 = vmul.f32 1.0, %v3186
        %v3188 = vrcp.pop %v3069
        %v3189 = vmul.f32 1.0, %v3188
        %v3190 = vrcp.pop %v3070
        %v3191 = vmul.f32 1.0, %v3190
        %v3192 = vrcp.pop %v3071
        %v3193 = vmul.f32 1.0, %v3192
        %v3194 = vrcp.pop %v3072
        %v3195 = vmul.f32 1.0, %v3194
        %v3196 = vrcp.pop %v3073
        %v3197 = vmul.f32 1.0, %v3196
        %v3198 = vrcp.pop %v3074
        %v3199 = vmul.f32 1.0, %v3198
        %v3200 = vrcp.pop %v3075
        %v3201 = vmul.f32 1.0, %v3200
        %v3202 = vrcp.pop %v3076
        %v3203 = vmul.f32 1.0, %v3202
        %v3204 = vrcp.pop %v3077
        %v3205 = vmul.f32 1.0, %v3204
        %v3206 = vmul.f32 %v2428, %v3079
        %v3207 = vmul.f32 %v2429, %v3081
        %v3208 = vmul.f32 %v2430, %v3083
        %v3209 = vmul.f32 %v2431, %v3085
        %v3210 = vmul.f32 %v2432, %v3087
        %v3211 = vmul.f32 %v2433, %v3089
        %v3212 = vmul.f32 %v2434, %v3091
        %v3213 = vmul.f32 %v2435, %v3093
        %v3214 = vmul.f32 %v2436, %v3095
        %v3215 = vmul.f32 %v2437, %v3097
        %v3216 = vmul.f32 %v2438, %v3099
        %v3217 = vmul.f32 %v2439, %v3101
        %v3218 = vmul.f32 %v2440, %v3103
        %v3219 = vmul.f32 %v2441, %v3105
        %v3220 = vmul.f32 %v2442, %v3107
        %v3221 = vmul.f32 %v2443, %v3109
        %v3222 = vmul.f32 %v2444, %v3111
        %v3223 = vmul.f32 %v2445, %v3113
        %v3224 = vmul.f32 %v2446, %v3115
        %v3225 = vmul.f32 %v2447, %v3117
        %v3226 = vmul.f32 %v2448, %v3119
        %v3227 = vmul.f32 %v2449, %v3121
        %v3228 = vmul.f32 %v2450, %v3123
        %v3229 = vmul.f32 %v2451, %v3125
        %v3230 = vmul.f32 %v2452, %v3127
        %v3231 = vmul.f32 %v2453, %v3129
        %v3232 = vmul.f32 %v2454, %v3131
        %v3233 = vmul.f32 %v2455, %v3133
        %v3234 = vmul.f32 %v2456, %v3135
        %v3235 = vmul.f32 %v2457, %v3137
        %v3236 = vmul.f32 %v2458, %v3139
        %v3237 = vmul.f32 %v2459, %v3141
        %v3238 = vmul.f32 %v2460, %v3143
        %v3239 = vmul.f32 %v2461, %v3145
        %v3240 = vmul.f32 %v2462, %v3147
        %v3241 = vmul.f32 %v2463, %v3149
        %v3242 = vmul.f32 %v2464, %v3151
        %v3243 = vmul.f32 %v2465, %v3153
        %v3244 = vmul.f32 %v2466, %v3155
        %v3245 = vmul.f32 %v2467, %v3157
        %v3246 = vmul.f32 %v2468, %v3159
        %v3247 = vmul.f32 %v2469, %v3161
        %v3248 = vmul.f32 %v2470, %v3163
        %v3249 = vmul.f32 %v2471, %v3165
        %v3250 = vmul.f32 %v2472, %v3167
        %v3251 = vmul.f32 %v2473, %v3169
        %v3252 = vmul.f32 %v2474, %v3171
        %v3253 = vmul.f32 %v2475, %v3173
        %v3254 = vmul.f32 %v2476, %v3175
        %v3255 = vmul.f32 %v2477, %v3177
        %v3256 = vmul.f32 %v2478, %v3179
        %v3257 = vmul.f32 %v2479, %v3181
        %v3258 = vmul.f32 %v2480, %v3183
        %v3259 = vmul.f32 %v2481, %v3185
        %v3260 = vmul.f32 %v2482, %v3187
        %v3261 = vmul.f32 %v2483, %v3189
        %v3262 = vmul.f32 %v2484, %v3191
        %v3263 = vmul.f32 %v2485, %v3193
        %v3264 = vmul.f32 %v2486, %v3195
        %v3265 = vmul.f32 %v2487, %v3197
        %v3266 = vmul.f32 %v2488, %v3199
        %v3267 = vmul.f32 %v2489, %v3201
        %v3268 = vmul.f32 %v2490, %v3203
        %v3269 = vmul.f32 %v2491, %v3205
        %v3270 = vld [vmem:[%s386] sm:$0xff]
        %v3271 = vld [vmem:[%s386 + $0x8] sm:$0xff]
        %v3272 = vld [vmem:[%s386 + $0x10] sm:$0xff]
        %3273 = vmatprep.subr.mxu0 0.0
        %3274 = vmatpush1.msra.mxu0 %v3206
        %3275 = vmatprep.subr.mxu0 0.0
        %3276 = vmatpush1.msra.mxu0 %v3207
        %3277 = vmatprep.subr.mxu0 0.0
        %3278 = vmatpush1.msra.mxu0 %v3208
        %3279 = vmatprep.subr.mxu0 0.0
        %3280 = vmatpush1.msra.mxu0 %v3209
        %3281 = vmatprep.subr.mxu0 0.0
        %3282 = vmatpush1.msra.mxu0 %v3210
        %3283 = vmatprep.subr.mxu0 0.0
        %3284 = vmatpush1.msra.mxu0 %v3211
        %3285 = vmatprep.subr.mxu0 0.0
        %3286 = vmatpush1.msra.mxu0 %v3212
        %3287 = vmatprep.subr.mxu0 0.0
        %3288 = vmatpush1.msra.mxu0 %v3213
        %3289 = vmatprep.subr.mxu0 0.0
        %3290 = vmatpush1.msra.mxu0 %v3214
        %3291 = vmatprep.subr.mxu0 0.0
        %3292 = vmatpush1.msra.mxu0 %v3215
        %3293 = vmatprep.subr.mxu0 0.0
        %3294 = vmatpush1.msra.mxu0 %v3216
        %3295 = vmatprep.subr.mxu0 0.0
        %3296 = vmatpush1.msra.mxu0 %v3217
        %3297 = vmatprep.subr.mxu0 0.0
        %3298 = vmatpush1.msra.mxu0 %v3218
        %3299 = vmatprep.subr.mxu0 0.0
        %3300 = vmatpush1.msra.mxu0 %v3219
        %3301 = vmatprep.subr.mxu0 0.0
        %3302 = vmatpush1.msra.mxu0 %v3220
        %3303 = vmatprep.subr.mxu0 0.0
        %3304 = vmatpush1.msra.mxu0 %v3221
        %3305 = vmatprep.subr.mxu0 0.0
        %3306 = vmatpush1.msra.mxu0 %v3222
        %3307 = vmatprep.subr.mxu0 0.0
        %3308 = vmatpush1.msra.mxu0 %v3223
        %3309 = vmatprep.subr.mxu0 0.0
        %3310 = vmatpush1.msra.mxu0 %v3224
        %3311 = vmatprep.subr.mxu0 0.0
        %3312 = vmatpush1.msra.mxu0 %v3225
        %3313 = vmatprep.subr.mxu0 0.0
        %3314 = vmatpush1.msra.mxu0 %v3226
        %3315 = vmatprep.subr.mxu0 0.0
        %3316 = vmatpush1.msra.mxu0 %v3227
        %3317 = vmatprep.subr.mxu0 0.0
        %3318 = vmatpush1.msra.mxu0 %v3228
        %3319 = vmatprep.subr.mxu0 0.0
        %3320 = vmatpush1.msra.mxu0 %v3229
        %3321 = vmatprep.subr.mxu0 0.0
        %3322 = vmatpush1.msra.mxu0 %v3230
        %3323 = vmatprep.subr.mxu0 0.0
        %3324 = vmatpush1.msra.mxu0 %v3231
        %3325 = vmatprep.subr.mxu0 0.0
        %3326 = vmatpush1.msra.mxu0 %v3232
        %3327 = vmatprep.subr.mxu0 0.0
        %3328 = vmatpush1.msra.mxu0 %v3233
        %3329 = vmatprep.subr.mxu0 0.0
        %3330 = vmatpush1.msra.mxu0 %v3234
        %3331 = vmatprep.subr.mxu0 0.0
        %3332 = vmatpush1.msra.mxu0 %v3235
        %3333 = vmatprep.subr.mxu0 0.0
        %3334 = vmatpush1.msra.mxu0 %v3236
        %3335 = vmatprep.subr.mxu0 0.0
        %3336 = vmatpush1.msra.mxu0 %v3237
        %3337 = vmatprep.mubr.f32.mxu0 %v601
        %3338 = vmatmul.mubr.f32.gmra.mrb[0].mxu0 %v600
        %v3339 = vpop.f32.mrb[0].mxu0
        %v3340 = vadd.f32 0.0, %v3339
        %v3341 = vpop.f32.mrb[0].mxu0
        %3342 = vmatprep.mubr.f32.mxu0 %v605
        %3343 = vmatmul.mubr.f32.gmra.mrb[0].mxu0 %v604
        %v3344 = vpop.f32.mrb[0].mxu0
        %v3345 = vadd.f32 0.0, %v3344
        %v3346 = vpop.f32.mrb[0].mxu0
        %3347 = vmatprep.mubr.f32.mxu0 %v609
        %3348 = vmatmul.mubr.f32.gmra.mrb[0].mxu0 %v608
        %v3349 = vpop.f32.mrb[0].mxu0
        %v3350 = vadd.f32 0.0, %v3349
        %v3351 = vpop.f32.mrb[0].mxu0
        %3352 = vdwg.mxu0
        %3353 = vmatprep.subr.mxu0 0.0
        %3354 = vmatpush1.msra.mxu0 %v3238
        %3355 = vmatprep.subr.mxu0 0.0
        %3356 = vmatpush1.msra.mxu0 %v3239
        %3357 = vmatprep.subr.mxu0 0.0
        %3358 = vmatpush1.msra.mxu0 %v3240
        %3359 = vmatprep.subr.mxu0 0.0
        %3360 = vmatpush1.msra.mxu0 %v3241
        %3361 = vmatprep.subr.mxu0 0.0
        %3362 = vmatpush1.msra.mxu0 %v3242
        %3363 = vmatprep.subr.mxu0 0.0
        %3364 = vmatpush1.msra.mxu0 %v3243
        %3365 = vmatprep.subr.mxu0 0.0
        %3366 = vmatpush1.msra.mxu0 %v3244
        %3367 = vmatprep.subr.mxu0 0.0
        %3368 = vmatpush1.msra.mxu0 %v3245
        %3369 = vmatprep.subr.mxu0 0.0
        %3370 = vmatpush1.msra.mxu0 %v3246
        %3371 = vmatprep.subr.mxu0 0.0
        %3372 = vmatpush1.msra.mxu0 %v3247
        %3373 = vmatprep.subr.mxu0 0.0
        %3374 = vmatpush1.msra.mxu0 %v3248
        %3375 = vmatprep.subr.mxu0 0.0
        %3376 = vmatpush1.msra.mxu0 %v3249
        %3377 = vmatprep.subr.mxu0 0.0
        %3378 = vmatpush1.msra.mxu0 %v3250
        %3379 = vmatprep.subr.mxu0 0.0
        %3380 = vmatpush1.msra.mxu0 %v3251
        %3381 = vmatprep.subr.mxu0 0.0
        %3382 = vmatpush1.msra.mxu0 %v3252
        %3383 = vmatprep.subr.mxu0 0.0
        %3384 = vmatpush1.msra.mxu0 %v3253
        %3385 = vmatprep.subr.mxu0 0.0
        %3386 = vmatpush1.msra.mxu0 %v3254
        %3387 = vmatprep.subr.mxu0 0.0
        %3388 = vmatpush1.msra.mxu0 %v3255
        %3389 = vmatprep.subr.mxu0 0.0
        %3390 = vmatpush1.msra.mxu0 %v3256
        %3391 = vmatprep.subr.mxu0 0.0
        %3392 = vmatpush1.msra.mxu0 %v3257
        %3393 = vmatprep.subr.mxu0 0.0
        %3394 = vmatpush1.msra.mxu0 %v3258
        %3395 = vmatprep.subr.mxu0 0.0
        %3396 = vmatpush1.msra.mxu0 %v3259
        %3397 = vmatprep.subr.mxu0 0.0
        %3398 = vmatpush1.msra.mxu0 %v3260
        %3399 = vmatprep.subr.mxu0 0.0
        %3400 = vmatpush1.msra.mxu0 %v3261
        %3401 = vmatprep.subr.mxu0 0.0
        %3402 = vmatpush1.msra.mxu0 %v3262
        %3403 = vmatprep.subr.mxu0 0.0
        %3404 = vmatpush1.msra.mxu0 %v3263
        %3405 = vmatprep.subr.mxu0 0.0
        %3406 = vmatpush1.msra.mxu0 %v3264
        %3407 = vmatprep.subr.mxu0 0.0
        %3408 = vmatpush1.msra.mxu0 %v3265
        %3409 = vmatprep.subr.mxu0 0.0
        %3410 = vmatpush1.msra.mxu0 %v3266
        %3411 = vmatprep.subr.mxu0 0.0
        %3412 = vmatpush1.msra.mxu0 %v3267
        %3413 = vmatprep.subr.mxu0 0.0
        %3414 = vmatpush1.msra.mxu0 %v3268
        %3415 = vmatprep.subr.mxu0 0.0
        %3416 = vmatpush1.msra.mxu0 %v3269
        %3417 = vmatprep.mubr.f32.mxu0 %v603
        %3418 = vmatmul.mubr.f32.gmra.mrb[0].mxu0 %v602
        %v3419 = vpop.f32.mrb[0].mxu0
        %v3420 = vadd.f32 %v3340, %v3419
        %v3421 = vpop.f32.mrb[0].mxu0
        %3422 = vmatprep.mubr.f32.mxu0 %v607
        %3423 = vmatmul.mubr.f32.gmra.mrb[0].mxu0 %v606
        %v3424 = vpop.f32.mrb[0].mxu0
        %v3425 = vadd.f32 %v3345, %v3424
        %v3426 = vpop.f32.mrb[0].mxu0
        %3427 = vmatprep.mubr.f32.mxu0 %v611
        %3428 = vmatmul.mubr.f32.gmra.mrb[0].mxu0 %v610
        %v3429 = vpop.f32.mrb[0].mxu0
        %v3430 = vadd.f32 %v3350, %v3429
        %v3431 = vpop.f32.mrb[0].mxu0
        %3432 = vdwg.mxu0
        %v3433 = vadd.f32 %v3270, %v3420
        %v3434 = vadd.f32 %v3271, %v3425
        %v3435 = vadd.f32 %v3272, %v3430
        %3436 = vst.msk [vmem:[%s386] sm:$0xff] %vm2563, %v3433
        %3437 = vst.msk [vmem:[%s386 + $0x8] sm:$0xff] %vm2563, %v3434
        %3438 = vst.msk [vmem:[%s386 + $0x10] sm:$0xff] %vm2563, %v3435
        %s3439 = smul.u32 3, %s26
        %p3440 = scmp.lt.s32.totalorder %s3439, 5
        %s3441 = scalar_select %p3440, %s3439, 5
        %s3442 = smul.addr %s3441, 8
        %s3443 = scalar_lea.vmem %s7, %s3442
        // Predicated region
        $region57: #{tpu_custom_call.1} parent=47 // pred_check
          %p3444 = pneg %p226
        $region58: #{tpu_custom_call.1} parent=47 // pred_check_branch
          %3446 = sbr.rel (%p3444) target = $region60
        $region59: #{tpu_custom_call.1} parent=47 // pred_region
          %s3447 = smul.u32 3, %s26
        $region60: #{tpu_custom_call.1} parent=47 // pred_fallthru
          _
      $region48: #{tpu_custom_call.1} parent=5 // pred_fallthru
        _
      %p3448 = scmp.le.s32.totalorder 2, %s17
      // Predicated region
      $region61: #{tpu_custom_call.1} parent=5 // pred_check
        %p3449 = pneg %p3448
      $region62: #{tpu_custom_call.1} parent=5 // pred_check_branch
        %3451 = sbr.rel (%p3449) target = $region64
      $region63: #{tpu_custom_call.1} parent=5 // pred_region
        %s3452 = ssub.s32 %s17, 2
        // Predicated region
        $region65: #{tpu_custom_call.1} parent=63 // pred_check
          %p3453 = pneg %p232
        $region66: #{tpu_custom_call.1} parent=63 // pred_check_branch
          %3455 = sbr.rel (%p3453) target = $region68
        $region67: #{tpu_custom_call.1} parent=63 // pred_region
          %s3456 = smul.u32 3, %s28
          %p3457 = scmp.lt.s32.totalorder %s3456, 5
          %s3458 = scalar_select %p3457, %s3456, 5
          %s3459 = smul.addr %s3458, 8
          %s3460 = scalar_lea.vmem %s7, %s3459
        $region68: #{tpu_custom_call.1} parent=63 // pred_fallthru
          _
      $region64: #{tpu_custom_call.1} parent=5 // pred_fallthru
        _
    $region6: #{tpu_custom_call.1} parent=1 // loop_footer
      %s21 = sadd.s32 1, %s17
    $region7: #{tpu_custom_call.1} parent=1 // loop_footer_branch
      %16 = sbr.rel target = $region3
    $region8: #{tpu_custom_call.1} parent=1 // loop_exit
      _
    %3461 = vsyncpa [#allocation4], 1
    %s3462 = scalar_lea.sflag [#allocation4], 1
    %3463 = vsyncpa %s3462, 1

</llo_original>
